<compile_context>
chip_gen: v7x
topology: tpu7x:2x2x1
jax: 0.10.0
libtpu: 0.0.40
codegen_flags: <defaults>
</compile_context>

<pallas_src>
import functools

import jax
import jax.numpy as jnp
from jax.experimental import pallas as pl
from jax.experimental.pallas import tpu as pltpu


LEAKY_SLOPE = 0.01  # F.leaky_relu default negative_slope


def _round_up(x, m):
    return ((x + m - 1) // m) * m


# --------------------------------------------------------------------------
# Kernel
# --------------------------------------------------------------------------
def elm_kernel(x_ref, w1_ref, b1_ref, w2_ref, o_ref, acc_ref):
    """One (batch tile, hidden tile) step of fc1 -> leaky_relu -> fc2.

    x_ref : (bt, Kp)   bf16   (Kp = 784 padded to 896)
    w1_ref: (Kp, TH)   bf16   hidden tile of W1
    b1_ref: (1, TH)    f32    hidden tile of b1
    w2_ref: (TH, Op)   bf16   hidden tile of W2 (Op = 10 padded to 128)
    o_ref : (bt, Op)   f32
    acc_ref:(bt, Op)   f32    fc2 accumulator (resident across hidden axis)
    """
    j = pl.program_id(1)

    @pl.when(j == 0)
    def _():
        acc_ref[...] = jnp.zeros_like(acc_ref)

    # fc1 partial: MXU matmul (bf16 operands, f32 accumulate) + bias in f32.
    h = jnp.dot(x_ref[...], w1_ref[...], preferred_element_type=jnp.float32)
    h = h + b1_ref[...]
    # leaky_relu on the VPU in f32.
    h = jnp.where(h > 0, h, LEAKY_SLOPE * h)
    # fc2 partial (no bias); accumulate over hidden tiles in f32.
    acc_ref[...] += jnp.dot(h.astype(w2_ref.dtype), w2_ref[...],
                            preferred_element_type=jnp.float32)

    @pl.when(j == pl.num_programs(1) - 1)
    def _():
        o_ref[...] = acc_ref[...]


# --------------------------------------------------------------------------
# Sizing helpers
# --------------------------------------------------------------------------
def _pick_batch_tile(B, max_tile=256):
    """Pick a batch tile that minimizes zero-row padding waste."""
    b8 = _round_up(max(B, 1), 8)
    if b8 <= 128:
        return b8                      # single small tile, no waste
    cands = [c for c in (128, 256) if c <= max_tile] or [128]
    # minimize padding; on a tie prefer the smaller tile (more grid steps ->
    # better v7x two-TC balance, no MXU downside on v5e's 4x128 MXU).
    return min(cands, key=lambda c: (_round_up(B, c) - B, c))


def _vmem_cap_bytes():
    """Physical VMEM minus headroom for Mosaic internal scratch."""
    try:
        phys = pltpu.get_tpu_info().vmem_capacity_bytes
    except Exception:  # pragma: no cover - conservative fallback (v7x)
        phys = 64 << 20
    return max(phys - (12 << 20), 32 << 20)


def _vmem_limit_bytes(bt, k_pad, th, out_pad, w_bytes):
    est = (
        2 * bt * k_pad * w_bytes        # x tile (double-buffered)
        + 2 * k_pad * th * w_bytes      # W1 tile (double-buffered)
        + 2 * th * out_pad * w_bytes    # W2 tile (double-buffered)
        + 2 * 8 * th * 4                # b1 tile (sublane padded)
        + 2 * bt * out_pad * 4          # output tile (double-buffered)
        + bt * out_pad * 4              # accumulator scratch
        + bt * th * 4                   # h intermediate (f32)
        + bt * th * w_bytes             # h cast for the fc2 matmul
    )
    return int(min(max(int(est * 1.5), 32 << 20), _vmem_cap_bytes()))


# --------------------------------------------------------------------------
# One-time parameter preparation (pad + cast hoisted out of the hot path)
# --------------------------------------------------------------------------
def prepare_params(w1, b1, w2, *, hidden_tile=512, param_dtype=jnp.bfloat16):
    """Pad/cast weights once. Weights are stored as (in, out), i.e. transposed
    vs. PyTorch, so the kernel computes x @ W."""
    in_dim, hidden = w1.shape
    out_dim = w2.shape[1]

    k_pad = _round_up(in_dim, 128)                       # 784 -> 896
    th = min(hidden_tile, _round_up(hidden, 128))        # hidden tile (mult of 128)
    h_pad = _round_up(hidden, th)                        # e.g. 7000 -> 7168
    out_pad = _round_up(out_dim, 128)                    # 10 -> 128

    w1_p = (jnp.zeros((k_pad, h_pad), jnp.float32)
            .at[:in_dim, :hidden].set(w1.astype(jnp.float32))
            .astype(param_dtype))
    w2_p = (jnp.zeros((h_pad, out_pad), jnp.float32)
            .at[:hidden, :out_dim].set(w2.astype(jnp.float32))
            .astype(param_dtype))
    # zero-padded bias -> padded hidden columns give h=0, leaky_relu(0)=0,
    # and contribute nothing to fc2 (whose padded rows are zero anyway).
    b1_p = (jnp.zeros((1, h_pad), jnp.float32)
            .at[0, :hidden].set(b1.astype(jnp.float32)))

    meta = dict(in_dim=in_dim, hidden=hidden, out_dim=out_dim,
                k_pad=k_pad, h_pad=h_pad, th=th, out_pad=out_pad,
                param_dtype=param_dtype)
    return (w1_p, b1_p, w2_p), meta


# --------------------------------------------------------------------------
# Forward
# --------------------------------------------------------------------------
@functools.partial(jax.jit, static_argnames=("meta_key", "batch_tile"))
def _elm_forward_padded(x_p, w1_p, b1_p, w2_p, *, meta_key, batch_tile):
    (k_pad, h_pad, th, out_pad, w_bytes) = meta_key
    b_pad = x_p.shape[0]
    bt = batch_tile
    grid = (b_pad // bt, h_pad // th)

    flops = 2 * b_pad * k_pad * h_pad + 2 * b_pad * h_pad * out_pad
    bytes_accessed = (
        b_pad * k_pad * w_bytes
        + k_pad * h_pad * w_bytes
        + h_pad * out_pad * w_bytes
        + h_pad * 4
        + b_pad * out_pad * 4
    )

    return pl.pallas_call(
        elm_kernel,
        out_shape=jax.ShapeDtypeStruct((b_pad, out_pad), jnp.float32),
        grid_spec=pltpu.PrefetchScalarGridSpec(
            num_scalar_prefetch=0,
            grid=grid,
            in_specs=[
                pl.BlockSpec((bt, k_pad), lambda i, j: (i, 0)),      # x tile
                pl.BlockSpec((k_pad, th), lambda i, j: (0, j)),      # W1 tile
                pl.BlockSpec((1, th), lambda i, j: (0, j)),          # b1 tile
                pl.BlockSpec((th, out_pad), lambda i, j: (j, 0)),    # W2 tile
            ],
            out_specs=pl.BlockSpec((bt, out_pad), lambda i, j: (i, 0)),
            scratch_shapes=[pltpu.VMEM((bt, out_pad), jnp.float32)],
        ),
        compiler_params=pltpu.CompilerParams(
            dimension_semantics=("parallel", "arbitrary"),
            vmem_limit_bytes=_vmem_limit_bytes(bt, k_pad, th, out_pad, w_bytes),
        ),
        cost_estimate=pl.CostEstimate(
            flops=flops, transcendentals=0, bytes_accessed=bytes_accessed),
    )(x_p, w1_p, b1_p, w2_p)


def elm_forward(x_img, prepared, meta, *, batch_tile=256):
    """x_img: (B, 1, 28, 28) float32 -> logits (B, 10) float32."""
    w1_p, b1_p, w2_p = prepared
    B = x_img.shape[0]
    in_dim, k_pad = meta["in_dim"], meta["k_pad"]
    param_dtype = meta["param_dtype"]

    x = x_img.reshape(B, -1).astype(jnp.float32)         # == x.view(B, -1)
    bt = _pick_batch_tile(B, batch_tile)
    b_pad = _round_up(B, bt)

    # Per-call: pad batch + K dim of x only, cast to the MXU operand dtype.
    x_p = (jnp.zeros((b_pad, k_pad), jnp.float32)
           .at[:B, :in_dim].set(x)
           .astype(param_dtype))

    meta_key = (k_pad, meta["h_pad"], meta["th"], meta["out_pad"],
                jnp.dtype(param_dtype).itemsize)
    out_padded = _elm_forward_padded(x_p, w1_p, b1_p, w2_p,
                                     meta_key=meta_key, batch_tile=bt)
    return out_padded[:B, :meta["out_dim"]]


# --------------------------------------------------------------------------
# Parameter init + references (self-test)
# --------------------------------------------------------------------------
def init_params(key, in_dim=28 * 28, hidden=256, out_dim=10):
    """Mirror the PyTorch module's init; weights stored as (in, out)."""
    k1, k2, k3 = jax.random.split(key, 3)
    gain = (2.0 / (1.0 + LEAKY_SLOPE ** 2)) ** 0.5            # calculate_gain('leaky_relu')
    bound1 = gain * (6.0 / (in_dim + hidden)) ** 0.5           # xavier_uniform
    w1 = jax.random.uniform(k1, (in_dim, hidden), jnp.float32, -bound1, bound1)
    bb = 1.0 / (in_dim ** 0.5)
    b1 = jax.random.uniform(k2, (hidden,), jnp.float32, -bb, bb)
    bound2 = (6.0 ** 0.5) / ((1.0 + 5.0) ** 0.5 * hidden ** 0.5)  # kaiming_uniform(a=sqrt(5))
    w2 = jax.random.uniform(k3, (hidden, out_dim), jnp.float32, -bound2, bound2)
    return w1, b1, w2


def reference_forward_f32(x_img, w1, b1, w2):
    x = x_img.reshape(x_img.shape[0], -1)
    h = x @ w1 + b1
    h = jnp.where(h > 0, h, LEAKY_SLOPE * h)
    return h @ w2


def reference_forward_bf16(x_img, w1, b1, w2):
    """Mirror the kernel's bf16-operand / f32-accumulate path."""
    f32 = jnp.float32
    x = x_img.reshape(x_img.shape[0], -1).astype(jnp.bfloat16).astype(f32)
    w1b = w1.astype(jnp.bfloat16).astype(f32)
    w2b = w2.astype(jnp.bfloat16).astype(f32)
    h = jnp.dot(x, w1b, precision=jax.lax.Precision.HIGHEST) + b1
    h = jnp.where(h > 0, h, LEAKY_SLOPE * h)
    h = h.astype(jnp.bfloat16).astype(f32)
    return jnp.dot(h, w2b, precision=jax.lax.Precision.HIGHEST)


if __name__ == "__main__":
    key = jax.random.PRNGKey(0)
    kx, kp = jax.random.split(key)

    # Small shapes (module default hidden=7000 scaled down for the self-test).
    # B is NOT a tile multiple (exercises batch padding) and HIDDEN is not a
    # multiple of 512/128 (exercises hidden padding + a 2-step reduction axis).
    B, HIDDEN = 300, 700
    x_img = jax.random.normal(kx, (B, 1, 28, 28), jnp.float32)
    w1, b1, w2 = init_params(kp, hidden=HIDDEN)

    prepared, meta = prepare_params(w1, b1, w2, hidden_tile=512)
    out = elm_forward(x_img, prepared, meta)    # grid = (3, 2): bt=128, TH=512
    out = jax.block_until_ready(out)

    assert out.shape == (B, 10)

    ref = reference_forward_bf16(x_img, w1, b1, w2)
    assert jnp.allclose(out, ref, atol=5e-2, rtol=5e-2), "mismatch vs bf16 reference"

    # Sanity vs the full-f32 PyTorch-equivalent math (loose: bf16 operand cast).
    ref32 = reference_forward_f32(x_img, w1, b1, w2)
    assert jnp.allclose(out, ref32, atol=1.5e-1, rtol=1e-1), "mismatch vs f32 reference"

    print("KERNEL_OK")
</pallas_src>

<mosaic_0001>
module attributes {stable_mosaic.version = 11 : i64} {
  func.func @elm_kernel(%arg0: i32, %arg1: i32, %arg2: memref<128x896xbf16, #tpu.memory_space<vmem>>, %arg3: memref<896x512xbf16, #tpu.memory_space<vmem>>, %arg4: memref<1x512xf32, #tpu.memory_space<vmem>>, %arg5: memref<512x128xbf16, #tpu.memory_space<vmem>>, %arg6: memref<128x128xf32, #tpu.memory_space<vmem>>, %arg7: memref<128x128xf32, #tpu.memory_space<vmem>>) attributes {dimension_semantics = [#tpu.dimension_semantics<parallel>, #tpu.dimension_semantics<arbitrary>], iteration_bounds = array<i64: 3, 2>, scalar_prefetch = 0 : i64, scratch_operands = 1 : i64, tpu.core_type = #tpu.core_type<tc>, window_params = [{transform_indices = @transform_0, window_bounds = array<i64: 128, 896>}, {transform_indices = @transform_1, window_bounds = array<i64: 896, 512>}, {transform_indices = @transform_2, window_bounds = array<i64: 1, 512>}, {transform_indices = @transform_3, window_bounds = array<i64: 512, 128>}, {transform_indices = @transform_4, window_bounds = array<i64: 128, 128>}]} {
    %c0_i32 = arith.constant 0 : i32
    %0 = arith.cmpi eq, %arg1, %c0_i32 : i32
    %1 = arith.extui %0 : i1 to i32
    %c0_i32_0 = arith.constant 0 : i32
    %2 = arith.cmpi ne, %1, %c0_i32_0 : i32
    scf.if %2 {
      %cst_16 = arith.constant 0.000000e+00 : f32
      %23 = vector.broadcast %cst_16 : f32 to vector<128x128xf32>
      %c0_17 = arith.constant 0 : index
      %c0_18 = arith.constant 0 : index
      %24 = vector.load %arg7[%c0_17, %c0_18] : memref<128x128xf32, #tpu.memory_space<vmem>>, vector<128x128xf32>
      tpu.vector_store %arg7[%c0_17, %c0_18], %23 {strides = array<i32>} : memref<128x128xf32, #tpu.memory_space<vmem>>, vector<128x128xf32>,
    } else {
    }
    %c0 = arith.constant 0 : index
    %c0_1 = arith.constant 0 : index
    %3 = vector.load %arg2[%c0, %c0_1] : memref<128x896xbf16, #tpu.memory_space<vmem>>, vector<128x896xbf16>
    %c0_2 = arith.constant 0 : index
    %c0_3 = arith.constant 0 : index
    %4 = vector.load %arg3[%c0_2, %c0_3] : memref<896x512xbf16, #tpu.memory_space<vmem>>, vector<896x512xbf16>
    %cst = arith.constant dense<0.000000e+00> : vector<128x512xf32>
    %5 = tpu.matmul %3, %4, %cst {dimension_numbers = #tpu.dot_dimension_numbers<[1], [0], [0], [1], [0, 0, 1, 1], [], []>} : vector<128x896xbf16>, vector<896x512xbf16>, vector<128x512xf32> -> vector<128x512xf32>
    %c0_4 = arith.constant 0 : index
    %c0_5 = arith.constant 0 : index
    %6 = vector.load %arg4[%c0_4, %c0_5] : memref<1x512xf32, #tpu.memory_space<vmem>>, vector<1x512xf32>
    %7 = vector.broadcast %6 : vector<1x512xf32> to vector<128x512xf32>
    %8 = arith.addf %5, %7 : vector<128x512xf32>
    %cst_6 = arith.constant 0.000000e+00 : f32
    %9 = vector.broadcast %cst_6 : f32 to vector<128x512xf32>
    %10 = arith.cmpf ogt, %8, %9 : vector<128x512xf32>
    %cst_7 = arith.constant 0.00999999977 : f32
    %11 = vector.broadcast %cst_7 : f32 to vector<128x512xf32>
    %12 = arith.mulf %11, %8 : vector<128x512xf32>
    %13 = arith.select %10, %8, %12 : vector<128x512xi1>, vector<128x512xf32>
    %c0_8 = arith.constant 0 : index
    %c0_9 = arith.constant 0 : index
    %14 = vector.load %arg7[%c0_8, %c0_9] : memref<128x128xf32, #tpu.memory_space<vmem>>, vector<128x128xf32>
    %15 = arith.truncf %13 : vector<128x512xf32> to vector<128x512xbf16>
    %c0_10 = arith.constant 0 : index
    %c0_11 = arith.constant 0 : index
    %16 = vector.load %arg5[%c0_10, %c0_11] : memref<512x128xbf16, #tpu.memory_space<vmem>>, vector<512x128xbf16>
    %cst_12 = arith.constant dense<0.000000e+00> : vector<128x128xf32>
    %17 = tpu.matmul %15, %16, %cst_12 {dimension_numbers = #tpu.dot_dimension_numbers<[1], [0], [0], [1], [0, 0, 1, 1], [], []>} : vector<128x512xbf16>, vector<512x128xbf16>, vector<128x128xf32> -> vector<128x128xf32>
    %18 = arith.addf %14, %17 : vector<128x128xf32>
    %c0_13 = arith.constant 0 : index
    %c0_14 = arith.constant 0 : index
    %19 = vector.load %arg7[%c0_13, %c0_14] : memref<128x128xf32, #tpu.memory_space<vmem>>, vector<128x128xf32>
    tpu.vector_store %arg7[%c0_13, %c0_14], %18 {strides = array<i32>} : memref<128x128xf32, #tpu.memory_space<vmem>>, vector<128x128xf32>,
    %c1_i32 = arith.constant 1 : i32
    %20 = arith.cmpi eq, %arg1, %c1_i32 : i32
    %21 = arith.extui %20 : i1 to i32
    %c0_i32_15 = arith.constant 0 : i32
    %22 = arith.cmpi ne, %21, %c0_i32_15 : i32
    scf.if %22 {
      %c0_16 = arith.constant 0 : index
      %c0_17 = arith.constant 0 : index
      %23 = vector.load %arg7[%c0_16, %c0_17] : memref<128x128xf32, #tpu.memory_space<vmem>>, vector<128x128xf32>
      %c0_18 = arith.constant 0 : index
      %c0_19 = arith.constant 0 : index
      %24 = vector.load %arg6[%c0_18, %c0_19] : memref<128x128xf32, #tpu.memory_space<vmem>>, vector<128x128xf32>
      tpu.vector_store %arg6[%c0_18, %c0_19], %23 {strides = array<i32>} : memref<128x128xf32, #tpu.memory_space<vmem>>, vector<128x128xf32>,
    } else {
    }
    return
  }
  func.func @transform_0(%arg0: i32, %arg1: i32) -> (i32, i32) {
    %c0_i32 = arith.constant 0 : i32
    %c0_i32_0 = arith.constant 0 : i32
    return %arg0, %c0_i32 : i32, i32
  }
  func.func @transform_1(%arg0: i32, %arg1: i32) -> (i32, i32) {
    %c0_i32 = arith.constant 0 : i32
    %c0_i32_0 = arith.constant 0 : i32
    return %c0_i32, %arg1 : i32, i32
  }
  func.func @transform_2(%arg0: i32, %arg1: i32) -> (i32, i32) {
    %c0_i32 = arith.constant 0 : i32
    %c0_i32_0 = arith.constant 0 : i32
    return %c0_i32, %arg1 : i32, i32
  }
  func.func @transform_3(%arg0: i32, %arg1: i32) -> (i32, i32) {
    %c0_i32 = arith.constant 0 : i32
    %c0_i32_0 = arith.constant 0 : i32
    return %arg1, %c0_i32 : i32, i32
  }
  func.func @transform_4(%arg0: i32, %arg1: i32) -> (i32, i32) {
    %c0_i32 = arith.constant 0 : i32
    %c0_i32_0 = arith.constant 0 : i32
    return %arg0, %c0_i32 : i32, i32
  }
}

</mosaic_0001>

<llo_original>
// kernel: _elm_forward_padded.1
$region0: #{_elm_forward_padded.1}
  #allocation0 [shape = 'u32[]', space=smem, size = 0x4, offset = 0x4, fixed_abs, tag = 'smem constant byte address 0x4 - core index']
  #allocation1 [shape = 'u32[144,128]{1,0:T(1,128)}', space=vmem, size = 0x12000, scoped, tag = 'internal scratch']
  #allocation2 [shape = 'f32[128,128]{1,0:T(8,128)}', space=vmem, size = 0x10000, scoped, tag = 'scratch operand']
  %s0 = inlined_call_operand.hbm [shape: bf16[384,896], index: 0, kind: input, shape index: {}]
  %s1 = inlined_call_operand.hbm [shape: bf16[896,1024], index: 1, kind: input, shape index: {}]
  %s2 = inlined_call_operand.hbm [shape: f32[1,1024], index: 2, kind: input, shape index: {}]
  %s3 = inlined_call_operand.hbm [shape: bf16[1024,128], index: 3, kind: input, shape index: {}]
  %s4 = inlined_call_operand.hbm [shape: f32[384,128], index: 4, kind: output, shape index: {}]
  %s5 = sld [smem:[#allocation0]]
  $region73: #{_elm_forward_padded.1} parent=0
    _
  %s7 = ssub.s32 1, %s5
  %s8 = scalar_select 0, %s7, %s5
  $region1: #{_elm_forward_padded.1} parent=0
    #allocation3 [shape = 'u8[458752]{0}', space=vmem, size = 0x70000, scoped, tag = 'input window, operand 0']
    #allocation4 [shape = 's32[2]{0}', space=sflag, size = 0x8, scoped, tag = 'scoped memory for _elm_forward_padded.1']
    #allocation5 [shape = 's32[2]{0}', space=sflag, size = 0x8, scoped, tag = 'scoped memory for _elm_forward_padded.1']
    #allocation6 [shape = 'u8[1835008]{0}', space=vmem, size = 0x1c0000, scoped, tag = 'input window, operand 1']
    #allocation7 [shape = 's32[2]{0}', space=sflag, size = 0x8, scoped, tag = 'scoped memory for _elm_forward_padded.1']
    #allocation8 [shape = 'u8[4096]{0}', space=vmem, size = 0x1000, scoped, tag = 'input window, operand 2']
    #allocation9 [shape = 'u8[262144]{0}', space=vmem, size = 0x40000, scoped, tag = 'input window, operand 3']
    #allocation10 [shape = 's32[2]{0}', space=sflag, size = 0x8, scoped, tag = 'scoped memory for _elm_forward_padded.1']
    #allocation11 [shape = 'u8[131072]{0}', space=vmem, size = 0x20000, scoped, tag = 'output window, operand 0']
    %9 = vsyncpa [#allocation4], 0
    %s10 = scalar_lea.sflag [#allocation4], 1
    %11 = vsyncpa %s10, 0
    %12 = vsyncpa [#allocation7], 0
    %s13 = scalar_lea.sflag [#allocation7], 1
    %14 = vsyncpa %s13, 0
    %15 = vsyncpa [#allocation10], 0
    %s16 = scalar_lea.sflag [#allocation10], 1
    %17 = vsyncpa %s16, 0
    %18 = vsyncpa [#allocation5], 0
    %s19 = scalar_lea.sflag [#allocation5], 1
    %20 = vsyncpa %s19, 0
    loop: start=0, step=1, limit=8
    $region2: #{_elm_forward_padded.1} parent=1 // loop_pre_header
      _
    $region3: #{_elm_forward_padded.1} parent=1 // loop_header
      %s22 = sphi 0, %s26
      %p23 = scmp.ge.s32.totalorder %s22, 8
      %s29 = sphi 0, %s41
      %s30 = sphi 0, %s37
      %s31 = sphi 0, %s29
      %s32 = sphi 0, %s30
      %s33 = sphi 0, %s31
      %s34 = sphi 0, %s32
      %s44 = sphi 0, %s46
      %s47 = sphi 0, %s44
      %s48 = sphi 0, %s47
      %s64 = sphi 0, %s48
      %s70 = sphi 0, %s72
      %s73 = sphi 0, %s70
      %s74 = sphi 0, %s73
      %s90 = sphi 0, %s74
      %s96 = sphi 0, %s98
      %s99 = sphi 0, %s96
      %s100 = sphi 0, %s99
      %s116 = sphi 0, %s100
      %s122 = sphi 0, %s124
      %s125 = sphi 0, %s122
      %s126 = sphi 0, %s125
      %s142 = sphi 0, %s126
      %s148 = sphi 0, %s150
      %s151 = sphi 0, %s148
      %s152 = sphi 0, %s151
      %s168 = sphi 0, %s152
    $region4: #{_elm_forward_padded.1} parent=1 // loop_header_branch
      %25 = sbr.rel (%p23) target = $region8
    $region5: #{_elm_forward_padded.1} parent=1 // loop_body
      %s27 = ssub.s32 %s22, 1
      %s28 = ssub.s32 %s22, 2
      %s35 = sadd.s32 1, %s30
      %p36 = scmp.ge.s32.totalorder %s35, 2
      %s37 = scalar_select %p36, 0, %s35
      %s38 = sadd.s32 1, %s29
      %s39 = scalar_select %p36, %s38, %s29
      %p40 = scmp.ge.s32.totalorder %s39, 3
      %s41 = scalar_select %p40, 0, %s39
      %s42 = ssub.s32 %s29, %s41
      %p43 = scmp.eq.s32.totalorder %s42, 0
      %s45 = sadd.s32 %s44, 1
      %s46 = scalar_select %p43, %s44, %s45
      %p49 = pneg %p43
      %p50 = scmp.eq.s32.totalorder %s22, 5
      %p51 = por %p49, %p50
      %p52 = scmp.ne.s32.totalorder %s44, %s47
      %p53 = scmp.eq.s32.totalorder %s22, 0
      %p54 = por %p52, %p53
      %p55 = scmp.ne.s32.totalorder %s44, %s47
      %p56 = scmp.eq.s32.totalorder %s27, 5
      %p57 = por %p55, %p56
      %p58 = scmp.ne.s32.totalorder %s47, %s48
      %p59 = scmp.eq.s32.totalorder %s27, 0
      %p60 = por %p58, %p59
      %p61 = scmp.ne.s32.totalorder %s47, %s48
      %p62 = scmp.eq.s32.totalorder %s28, 5
      %p63 = por %p61, %p62
      %p65 = scmp.ne.s32.totalorder %s48, %s64
      %p66 = scmp.eq.s32.totalorder %s28, 0
      %p67 = por %p65, %p66
      %s68 = ssub.s32 %s30, %s37
      %p69 = scmp.eq.s32.totalorder %s68, 0
      %s71 = sadd.s32 %s70, 1
      %s72 = scalar_select %p69, %s70, %s71
      %p75 = pneg %p69
      %p76 = scmp.eq.s32.totalorder %s22, 5
      %p77 = por %p75, %p76
      %p78 = scmp.ne.s32.totalorder %s70, %s73
      %p79 = scmp.eq.s32.totalorder %s22, 0
      %p80 = por %p78, %p79
      %p81 = scmp.ne.s32.totalorder %s70, %s73
      %p82 = scmp.eq.s32.totalorder %s27, 5
      %p83 = por %p81, %p82
      %p84 = scmp.ne.s32.totalorder %s73, %s74
      %p85 = scmp.eq.s32.totalorder %s27, 0
      %p86 = por %p84, %p85
      %p87 = scmp.ne.s32.totalorder %s73, %s74
      %p88 = scmp.eq.s32.totalorder %s28, 5
      %p89 = por %p87, %p88
      %p91 = scmp.ne.s32.totalorder %s74, %s90
      %p92 = scmp.eq.s32.totalorder %s28, 0
      %p93 = por %p91, %p92
      %s94 = ssub.s32 %s30, %s37
      %p95 = scmp.eq.s32.totalorder %s94, 0
      %s97 = sadd.s32 %s96, 1
      %s98 = scalar_select %p95, %s96, %s97
      %p101 = pneg %p95
      %p102 = scmp.eq.s32.totalorder %s22, 5
      %p103 = por %p101, %p102
      %p104 = scmp.ne.s32.totalorder %s96, %s99
      %p105 = scmp.eq.s32.totalorder %s22, 0
      %p106 = por %p104, %p105
      %p107 = scmp.ne.s32.totalorder %s96, %s99
      %p108 = scmp.eq.s32.totalorder %s27, 5
      %p109 = por %p107, %p108
      %p110 = scmp.ne.s32.totalorder %s99, %s100
      %p111 = scmp.eq.s32.totalorder %s27, 0
      %p112 = por %p110, %p111
      %p113 = scmp.ne.s32.totalorder %s99, %s100
      %p114 = scmp.eq.s32.totalorder %s28, 5
      %p115 = por %p113, %p114
      %p117 = scmp.ne.s32.totalorder %s100, %s116
      %p118 = scmp.eq.s32.totalorder %s28, 0
      %p119 = por %p117, %p118
      %s120 = ssub.s32 %s30, %s37
      %p121 = scmp.eq.s32.totalorder %s120, 0
      %s123 = sadd.s32 %s122, 1
      %s124 = scalar_select %p121, %s122, %s123
      %p127 = pneg %p121
      %p128 = scmp.eq.s32.totalorder %s22, 5
      %p129 = por %p127, %p128
      %p130 = scmp.ne.s32.totalorder %s122, %s125
      %p131 = scmp.eq.s32.totalorder %s22, 0
      %p132 = por %p130, %p131
      %p133 = scmp.ne.s32.totalorder %s122, %s125
      %p134 = scmp.eq.s32.totalorder %s27, 5
      %p135 = por %p133, %p134
      %p136 = scmp.ne.s32.totalorder %s125, %s126
      %p137 = scmp.eq.s32.totalorder %s27, 0
      %p138 = por %p136, %p137
      %p139 = scmp.ne.s32.totalorder %s125, %s126
      %p140 = scmp.eq.s32.totalorder %s28, 5
      %p141 = por %p139, %p140
      %p143 = scmp.ne.s32.totalorder %s126, %s142
      %p144 = scmp.eq.s32.totalorder %s28, 0
      %p145 = por %p143, %p144
      %s146 = ssub.s32 %s29, %s41
      %p147 = scmp.eq.s32.totalorder %s146, 0
      %s149 = sadd.s32 %s148, 1
      %s150 = scalar_select %p147, %s148, %s149
      %p153 = pneg %p147
      %p154 = scmp.eq.s32.totalorder %s22, 5
      %p155 = por %p153, %p154
      %p156 = scmp.ne.s32.totalorder %s148, %s151
      %p157 = scmp.eq.s32.totalorder %s22, 0
      %p158 = por %p156, %p157
      %p159 = scmp.ne.s32.totalorder %s148, %s151
      %p160 = scmp.eq.s32.totalorder %s27, 5
      %p161 = por %p159, %p160
      %p162 = scmp.ne.s32.totalorder %s151, %s152
      %p163 = scmp.eq.s32.totalorder %s27, 0
      %p164 = por %p162, %p163
      %p165 = scmp.ne.s32.totalorder %s151, %s152
      %p166 = scmp.eq.s32.totalorder %s28, 5
      %p167 = por %p165, %p166
      %p169 = scmp.ne.s32.totalorder %s152, %s168
      %p170 = scmp.eq.s32.totalorder %s28, 0
      %p171 = por %p169, %p170
      %p172 = scmp.le.s32.totalorder 1, %s22
      %p173 = scmp.lt.s32.totalorder %s22, 7
      %p174 = pnand %p172, %p173
      %p175 = pneg %p174
      // Predicated region
      $region9: #{_elm_forward_padded.1} parent=5 // pred_check
        _
      $region10: #{_elm_forward_padded.1} parent=5 // pred_check_branch
        %177 = sbr.rel (%p174) target = $region12
      $region11: #{_elm_forward_padded.1} parent=5 // pred_region
        %s178 = ssub.s32 %s22, 1
      $region12: #{_elm_forward_padded.1} parent=5 // pred_fallthru
        _
      %p179 = scmp.lt.s32.totalorder %s22, 6
      // Predicated region
      $region13: #{_elm_forward_padded.1} parent=5 // pred_check
        %p180 = pneg %p179
      $region14: #{_elm_forward_padded.1} parent=5 // pred_check_branch
        %182 = sbr.rel (%p180) target = $region16
      $region15: #{_elm_forward_padded.1} parent=5 // pred_region
        // Predicated region
        $region17: #{_elm_forward_padded.1} parent=15 // pred_check
          %p183 = pneg %p54
        $region18: #{_elm_forward_padded.1} parent=15 // pred_check_branch
          %185 = sbr.rel (%p183) target = $region20
        $region19: #{_elm_forward_padded.1} parent=15 // pred_region
          %s186 = sand.u32 %s44, 1
          %s187 = scalar_lea.sflag [#allocation4], %s186
          %s188 = sand.u32 %s44, 1
          %s189 = smul.addr %s188, 448
          %s190 = scalar_lea.vmem [#allocation3], %s189
          %s191 = smul.u32 16, %s29
          %s193 = ssub.s32 7168, 7168
          %194 = vsyncadd %s187, %s193
          %s195 = smul.addr %s191, 7
          %s196 = smul.addr %s195, 64
          %s197 = scalar_lea.hbm %s0, %s196
          %s198 = sshll.u32 %s190, 4
          %s199 = int_to_ptr.vmem [resolvable:$true] %s198
          %204 = dma.hbm_to_vmem [thread:$0]  %s197, 7168, %s199, %s187, 448, 448, 28
        $region20: #{_elm_forward_padded.1} parent=15 // pred_fallthru
          _
        // Predicated region
        $region21: #{_elm_forward_padded.1} parent=15 // pred_check
          %p205 = pneg %p80
        $region22: #{_elm_forward_padded.1} parent=15 // pred_check_branch
          %207 = sbr.rel (%p205) target = $region24
        $region23: #{_elm_forward_padded.1} parent=15 // pred_region
          %s208 = sand.u32 %s22, 1
          %s209 = scalar_lea.sflag [#allocation7], %s208
          %s210 = sand.u32 %s70, 1
          %s211 = smul.addr %s210, 1792
          %s212 = scalar_lea.vmem [#allocation6], %s211
          %s213 = smul.u32 4, %s30
          %s215 = ssub.s32 28672, 28672
          %216 = vsyncadd %s209, %s215
          %s217 = smul.addr %s213, 64
          %s218 = scalar_lea.hbm %s1, %s217
          %s219 = sshll.u32 %s212, 4
          %s220 = int_to_ptr.vmem [resolvable:$true] %s219
          %225 = dma.hbm_to_vmem [thread:$0]  %s218, 28672, %s220, %s209, 512, 256, 16
        $region24: #{_elm_forward_padded.1} parent=15 // pred_fallthru
          _
        // Predicated region
        $region25: #{_elm_forward_padded.1} parent=15 // pred_check
          %p226 = pneg %p106
        $region26: #{_elm_forward_padded.1} parent=15 // pred_check_branch
          %228 = sbr.rel (%p226) target = $region28
        $region27: #{_elm_forward_padded.1} parent=15 // pred_region
          %s229 = sand.u32 %s22, 1
          %s230 = scalar_lea.sflag [#allocation7], %s229
          %s231 = sand.u32 %s96, 1
          %s232 = smul.addr %s231, 4
          %s233 = scalar_lea.vmem [#allocation8], %s232
          %s234 = smul.u32 4, %s30
          %s236 = ssub.s32 64, 64
          %237 = vsyncadd %s230, %s236
          %s238 = smul.addr %s234, 16
          %s239 = scalar_lea.hbm %s2, %s238
          %s241 = sshll.u32 %s233, 4
          %s242 = int_to_ptr.vmem [resolvable:$true] %s241
          %244 = dma.hbm_to_vmem [thread:$0]  %s239, 64, %s242, %s230
        $region28: #{_elm_forward_padded.1} parent=15 // pred_fallthru
          _
        // Predicated region
        $region29: #{_elm_forward_padded.1} parent=15 // pred_check
          %p245 = pneg %p132
        $region30: #{_elm_forward_padded.1} parent=15 // pred_check_branch
          %247 = sbr.rel (%p245) target = $region32
        $region31: #{_elm_forward_padded.1} parent=15 // pred_region
          %s248 = sand.u32 %s122, 1
          %s249 = scalar_lea.sflag [#allocation10], %s248
          %s250 = sand.u32 %s122, 1
          %s251 = smul.addr %s250, 256
          %s252 = scalar_lea.vmem [#allocation9], %s251
          %s253 = smul.u32 64, %s30
          %s255 = ssub.s32 4096, 4096
          %256 = vsyncadd %s249, %s255
          %s257 = smul.addr %s253, 64
          %s258 = scalar_lea.hbm %s3, %s257
          %s259 = sshll.u32 %s252, 4
          %s260 = int_to_ptr.vmem [resolvable:$true] %s259
          %265 = dma.hbm_to_vmem [thread:$0]  %s258, 4096, %s260, %s249, 64, 64, 4
        $region32: #{_elm_forward_padded.1} parent=15 // pred_fallthru
          _
      $region16: #{_elm_forward_padded.1} parent=5 // pred_fallthru
        _
      %p266 = scmp.le.s32.totalorder 1, %s22
      %p267 = scmp.lt.s32.totalorder %s22, 7
      %p268 = pnand %p266, %p267
      %p269 = pneg %p268
      // Predicated region
      $region33: #{_elm_forward_padded.1} parent=5 // pred_check
        _
      $region34: #{_elm_forward_padded.1} parent=5 // pred_check_branch
        %271 = sbr.rel (%p268) target = $region36
      $region35: #{_elm_forward_padded.1} parent=5 // pred_region
        %s272 = ssub.s32 %s22, 1
        %s273 = sand.u32 %s47, 1
        %s274 = scalar_lea.sflag [#allocation4], %s273
        %s275 = sand.u32 %s47, 1
        %s276 = smul.addr %s275, 448
        %s277 = scalar_lea.vmem [#allocation3], %s276
        // Predicated region
        $region37: #{_elm_forward_padded.1} parent=35 // pred_check
          %p278 = pneg %p60
        $region38: #{_elm_forward_padded.1} parent=35 // pred_check_branch
          %280 = sbr.rel (%p278) target = $region40
        $region39: #{_elm_forward_padded.1} parent=35 // pred_region
          %281 = dma.done %s274, 7168
        $region40: #{_elm_forward_padded.1} parent=35 // pred_fallthru
          _
        %s282 = sand.u32 %s27, 1
        %s283 = scalar_lea.sflag [#allocation7], %s282
        %s284 = sand.u32 %s73, 1
        %s285 = smul.addr %s284, 1792
        %s286 = scalar_lea.vmem [#allocation6], %s285
        // Predicated region
        $region41: #{_elm_forward_padded.1} parent=35 // pred_check
          %p287 = pneg %p86
        $region42: #{_elm_forward_padded.1} parent=35 // pred_check_branch
          %289 = sbr.rel (%p287) target = $region44
        $region43: #{_elm_forward_padded.1} parent=35 // pred_region
          %290 = dma.done %s283, 28672
        $region44: #{_elm_forward_padded.1} parent=35 // pred_fallthru
          _
        %s291 = sand.u32 %s27, 1
        %s292 = scalar_lea.sflag [#allocation7], %s291
        %s293 = sand.u32 %s99, 1
        %s294 = smul.addr %s293, 4
        %s295 = scalar_lea.vmem [#allocation8], %s294
        // Predicated region
        $region45: #{_elm_forward_padded.1} parent=35 // pred_check
          %p296 = pneg %p112
        $region46: #{_elm_forward_padded.1} parent=35 // pred_check_branch
          %298 = sbr.rel (%p296) target = $region48
        $region47: #{_elm_forward_padded.1} parent=35 // pred_region
          %299 = dma.done %s292, 64
        $region48: #{_elm_forward_padded.1} parent=35 // pred_fallthru
          _
        %s300 = sand.u32 %s125, 1
        %s301 = scalar_lea.sflag [#allocation10], %s300
        %s302 = sand.u32 %s125, 1
        %s303 = smul.addr %s302, 256
        %s304 = scalar_lea.vmem [#allocation9], %s303
        // Predicated region
        $region49: #{_elm_forward_padded.1} parent=35 // pred_check
          %p305 = pneg %p138
        $region50: #{_elm_forward_padded.1} parent=35 // pred_check_branch
          %307 = sbr.rel (%p305) target = $region52
        $region51: #{_elm_forward_padded.1} parent=35 // pred_region
          %308 = dma.done %s301, 4096
        $region52: #{_elm_forward_padded.1} parent=35 // pred_fallthru
          _
        %s309 = sand.u32 %s47, 1
        %s310 = scalar_lea.sflag [#allocation4], %s309
        %s311 = sand.u32 %s47, 1
        %s312 = smul.addr %s311, 448
        %s313 = scalar_lea.vmem [#allocation3], %s312
        %p314 = pneg %p60
        %p315 = pneg %p57
        %s316 = sand.u32 %s27, 1
        %s317 = scalar_lea.sflag [#allocation7], %s316
        %s318 = sand.u32 %s73, 1
        %s319 = smul.addr %s318, 1792
        %s320 = scalar_lea.vmem [#allocation6], %s319
        %p321 = pneg %p86
        %p322 = pneg %p83
        %s323 = sand.u32 %s27, 1
        %s324 = scalar_lea.sflag [#allocation7], %s323
        %s325 = sand.u32 %s99, 1
        %s326 = smul.addr %s325, 4
        %s327 = scalar_lea.vmem [#allocation8], %s326
        %p328 = pneg %p112
        %p329 = pneg %p109
        %s330 = sand.u32 %s125, 1
        %s331 = scalar_lea.sflag [#allocation10], %s330
        %s332 = sand.u32 %s125, 1
        %s333 = smul.addr %s332, 256
        %s334 = scalar_lea.vmem [#allocation9], %s333
        %p335 = pneg %p138
        %p336 = pneg %p135
        %p337 = pneg %p164
        %p338 = pneg %p161
        %s339 = sand.u32 %s151, 1
        %s340 = scalar_lea.sflag [#allocation5], %s339
        %s341 = sand.u32 %s151, 1
        %s342 = smul.addr %s341, 128
        %s343 = scalar_lea.vmem [#allocation11], %s342
        %s344 = smul.u32 16, %s31
        %s345 = smul.u32 4, %s32
        %s346 = smul.u32 4, %s32
        %s347 = smul.u32 64, %s32
        %s348 = smul.u32 16, %s31
        %p350 = scmp.eq.s32.totalorder %s32, 0
        // Predicated region
        $region53: #{_elm_forward_padded.1} parent=35 // pred_check
          %p351 = pneg %p350
        $region54: #{_elm_forward_padded.1} parent=35 // pred_check_branch
          %353 = sbr.rel (%p351) target = $region56
        $region55: #{_elm_forward_padded.1} parent=35 // pred_region
          %354 = vst [vmem:[#allocation2] sm:$0xff] 0.0
          %355 = vst [vmem:[#allocation2 + $0x8] sm:$0xff] 0.0
          %356 = vst [vmem:[#allocation2 + $0x10] sm:$0xff] 0.0
          %357 = vst [vmem:[#allocation2 + $0x18] sm:$0xff] 0.0
          %358 = vst [vmem:[#allocation2 + $0x20] sm:$0xff] 0.0
          %359 = vst [vmem:[#allocation2 + $0x28] sm:$0xff] 0.0
          %360 = vst [vmem:[#allocation2 + $0x30] sm:$0xff] 0.0
          %361 = vst [vmem:[#allocation2 + $0x38] sm:$0xff] 0.0
          %362 = vst [vmem:[#allocation2 + $0x40] sm:$0xff] 0.0
          %363 = vst [vmem:[#allocation2 + $0x48] sm:$0xff] 0.0
          %364 = vst [vmem:[#allocation2 + $0x50] sm:$0xff] 0.0
          %365 = vst [vmem:[#allocation2 + $0x58] sm:$0xff] 0.0
          %366 = vst [vmem:[#allocation2 + $0x60] sm:$0xff] 0.0
          %367 = vst [vmem:[#allocation2 + $0x68] sm:$0xff] 0.0
          %368 = vst [vmem:[#allocation2 + $0x70] sm:$0xff] 0.0
          %369 = vst [vmem:[#allocation2 + $0x78] sm:$0xff] 0.0
        $region56: #{_elm_forward_padded.1} parent=35 // pred_fallthru
          _
        %v370 = vld [vmem:[%s277] sm:$0xff]
        %v371 = vld [vmem:[%s277 + $0x8] sm:$0xff]
        %v372 = vld [vmem:[%s277 + $0x10] sm:$0xff]
        %v373 = vld [vmem:[%s277 + $0x18] sm:$0xf]
        %v374 = vld [vmem:[%s277 + $0x1c] sm:$0xff]
        %v375 = vld [vmem:[%s277 + $0x24] sm:$0xff]
        %v376 = vld [vmem:[%s277 + $0x2c] sm:$0xff]
        %v377 = vld [vmem:[%s277 + $0x34] sm:$0xf]
        %v378 = vld [vmem:[%s277 + $0x38] sm:$0xff]
        %v379 = vld [vmem:[%s277 + $0x40] sm:$0xff]
        %v380 = vld [vmem:[%s277 + $0x48] sm:$0xff]
        %v381 = vld [vmem:[%s277 + $0x50] sm:$0xf]
        %v382 = vld [vmem:[%s277 + $0x54] sm:$0xff]
        %v383 = vld [vmem:[%s277 + $0x5c] sm:$0xff]
        %v384 = vld [vmem:[%s277 + $0x64] sm:$0xff]
        %v385 = vld [vmem:[%s277 + $0x6c] sm:$0xf]
        %v386 = vld [vmem:[%s277 + $0x70] sm:$0xff]
        %v387 = vld [vmem:[%s277 + $0x78] sm:$0xff]
        %v388 = vld [vmem:[%s277 + $0x80] sm:$0xff]
        %v389 = vld [vmem:[%s277 + $0x88] sm:$0xf]
        %v390 = vld [vmem:[%s277 + $0x8c] sm:$0xff]
        %v391 = vld [vmem:[%s277 + $0x94] sm:$0xff]
        %v392 = vld [vmem:[%s277 + $0x9c] sm:$0xff]
        %v393 = vld [vmem:[%s277 + $0xa4] sm:$0xf]
        %v394 = vld [vmem:[%s277 + $0xa8] sm:$0xff]
        %v395 = vld [vmem:[%s277 + $0xb0] sm:$0xff]
        %v396 = vld [vmem:[%s277 + $0xb8] sm:$0xff]
        %v397 = vld [vmem:[%s277 + $0xc0] sm:$0xf]
        %v398 = vld [vmem:[%s277 + $0xc4] sm:$0xff]
        %v399 = vld [vmem:[%s277 + $0xcc] sm:$0xff]
        %v400 = vld [vmem:[%s277 + $0xd4] sm:$0xff]
        %v401 = vld [vmem:[%s277 + $0xdc] sm:$0xf]
        %v402 = vld [vmem:[%s277 + $0xe0] sm:$0xff]
        %v403 = vld [vmem:[%s277 + $0xe8] sm:$0xff]
        %v404 = vld [vmem:[%s277 + $0xf0] sm:$0xff]
        %v405 = vld [vmem:[%s277 + $0xf8] sm:$0xf]
        %v406 = vld [vmem:[%s277 + $0xfc] sm:$0xff]
        %v407 = vld [vmem:[%s277 + $0x104] sm:$0xff]
        %v408 = vld [vmem:[%s277 + $0x10c] sm:$0xff]
        %v409 = vld [vmem:[%s277 + $0x114] sm:$0xf]
        %v410 = vld [vmem:[%s277 + $0x118] sm:$0xff]
        %v411 = vld [vmem:[%s277 + $0x120] sm:$0xff]
        %v412 = vld [vmem:[%s277 + $0x128] sm:$0xff]
        %v413 = vld [vmem:[%s277 + $0x130] sm:$0xf]
        %v414 = vld [vmem:[%s277 + $0x134] sm:$0xff]
        %v415 = vld [vmem:[%s277 + $0x13c] sm:$0xff]
        %v416 = vld [vmem:[%s277 + $0x144] sm:$0xff]
        %v417 = vld [vmem:[%s277 + $0x14c] sm:$0xf]
        %v418 = vld [vmem:[%s277 + $0x150] sm:$0xff]
        %v419 = vld [vmem:[%s277 + $0x158] sm:$0xff]
        %v420 = vld [vmem:[%s277 + $0x160] sm:$0xff]
        %v421 = vld [vmem:[%s277 + $0x168] sm:$0xf]
        %v422 = vld [vmem:[%s277 + $0x16c] sm:$0xff]
        %v423 = vld [vmem:[%s277 + $0x174] sm:$0xff]
        %v424 = vld [vmem:[%s277 + $0x17c] sm:$0xff]
        %v425 = vld [vmem:[%s277 + $0x184] sm:$0xf]
        %v426 = vld [vmem:[%s277 + $0x188] sm:$0xff]
        %v427 = vld [vmem:[%s277 + $0x190] sm:$0xff]
        %v428 = vld [vmem:[%s277 + $0x198] sm:$0xff]
        %v429 = vld [vmem:[%s277 + $0x1a0] sm:$0xf]
        %v430 = vld [vmem:[%s277 + $0x1a4] sm:$0xff]
        %v431 = vld [vmem:[%s277 + $0x1ac] sm:$0xff]
        %v432 = vld [vmem:[%s277 + $0x1b4] sm:$0xff]
        %v433 = vld [vmem:[%s277 + $0x1bc] sm:$0xf]
        %v434 = vld [vmem:[%s286] sm:$0xff]
        %v435 = vld [vmem:[%s286 + $0x8] sm:$0xff]
        %v436 = vld [vmem:[%s286 + $0x10] sm:$0xff]
        %v437 = vld [vmem:[%s286 + $0x18] sm:$0xff]
        %v438 = vld [vmem:[%s286 + $0x20] sm:$0xff]
        %v439 = vld [vmem:[%s286 + $0x28] sm:$0xff]
        %v440 = vld [vmem:[%s286 + $0x30] sm:$0xff]
        %v441 = vld [vmem:[%s286 + $0x38] sm:$0xff]
        %v442 = vld [vmem:[%s286 + $0x40] sm:$0xff]
        %v443 = vld [vmem:[%s286 + $0x48] sm:$0xff]
        %v444 = vld [vmem:[%s286 + $0x50] sm:$0xff]
        %v445 = vld [vmem:[%s286 + $0x58] sm:$0xff]
        %v446 = vld [vmem:[%s286 + $0x60] sm:$0xff]
        %v447 = vld [vmem:[%s286 + $0x68] sm:$0xff]
        %v448 = vld [vmem:[%s286 + $0x70] sm:$0xff]
        %v449 = vld [vmem:[%s286 + $0x78] sm:$0xff]
        %v450 = vld [vmem:[%s286 + $0x80] sm:$0xff]
        %v451 = vld [vmem:[%s286 + $0x88] sm:$0xff]
        %v452 = vld [vmem:[%s286 + $0x90] sm:$0xff]
        %v453 = vld [vmem:[%s286 + $0x98] sm:$0xff]
        %v454 = vld [vmem:[%s286 + $0xa0] sm:$0xff]
        %v455 = vld [vmem:[%s286 + $0xa8] sm:$0xff]
        %v456 = vld [vmem:[%s286 + $0xb0] sm:$0xff]
        %v457 = vld [vmem:[%s286 + $0xb8] sm:$0xff]
        %v458 = vld [vmem:[%s286 + $0xc0] sm:$0xff]
        %v459 = vld [vmem:[%s286 + $0xc8] sm:$0xff]
        %v460 = vld [vmem:[%s286 + $0xd0] sm:$0xff]
        %v461 = vld [vmem:[%s286 + $0xd8] sm:$0xff]
        %v462 = vld [vmem:[%s286 + $0xe0] sm:$0xff]
        %v463 = vld [vmem:[%s286 + $0xe8] sm:$0xff]
        %v464 = vld [vmem:[%s286 + $0xf0] sm:$0xff]
        %v465 = vld [vmem:[%s286 + $0xf8] sm:$0xff]
        %v466 = vld [vmem:[%s286 + $0x100] sm:$0xff]
        %v467 = vld [vmem:[%s286 + $0x108] sm:$0xff]
        %v468 = vld [vmem:[%s286 + $0x110] sm:$0xff]
        %v469 = vld [vmem:[%s286 + $0x118] sm:$0xff]
        %v470 = vld [vmem:[%s286 + $0x120] sm:$0xff]
        %v471 = vld [vmem:[%s286 + $0x128] sm:$0xff]
        %v472 = vld [vmem:[%s286 + $0x130] sm:$0xff]
        %v473 = vld [vmem:[%s286 + $0x138] sm:$0xff]
        %v474 = vld [vmem:[%s286 + $0x140] sm:$0xff]
        %v475 = vld [vmem:[%s286 + $0x148] sm:$0xff]
        %v476 = vld [vmem:[%s286 + $0x150] sm:$0xff]
        %v477 = vld [vmem:[%s286 + $0x158] sm:$0xff]
        %v478 = vld [vmem:[%s286 + $0x160] sm:$0xff]
        %v479 = vld [vmem:[%s286 + $0x168] sm:$0xff]
        %v480 = vld [vmem:[%s286 + $0x170] sm:$0xff]
        %v481 = vld [vmem:[%s286 + $0x178] sm:$0xff]
        %v482 = vld [vmem:[%s286 + $0x180] sm:$0xff]
        %v483 = vld [vmem:[%s286 + $0x188] sm:$0xff]
        %v484 = vld [vmem:[%s286 + $0x190] sm:$0xff]
        %v485 = vld [vmem:[%s286 + $0x198] sm:$0xff]
        %v486 = vld [vmem:[%s286 + $0x1a0] sm:$0xff]
        %v487 = vld [vmem:[%s286 + $0x1a8] sm:$0xff]
        %v488 = vld [vmem:[%s286 + $0x1b0] sm:$0xff]
        %v489 = vld [vmem:[%s286 + $0x1b8] sm:$0xff]
        %v490 = vld [vmem:[%s286 + $0x1c0] sm:$0xff]
        %v491 = vld [vmem:[%s286 + $0x1c8] sm:$0xff]
        %v492 = vld [vmem:[%s286 + $0x1d0] sm:$0xff]
        %v493 = vld [vmem:[%s286 + $0x1d8] sm:$0xff]
        %v494 = vld [vmem:[%s286 + $0x1e0] sm:$0xff]
        %v495 = vld [vmem:[%s286 + $0x1e8] sm:$0xff]
        %v496 = vld [vmem:[%s286 + $0x1f0] sm:$0xff]
        %v497 = vld [vmem:[%s286 + $0x1f8] sm:$0xff]
        %v498 = vld [vmem:[%s286 + $0x200] sm:$0xff]
        %v499 = vld [vmem:[%s286 + $0x208] sm:$0xff]
        %v500 = vld [vmem:[%s286 + $0x210] sm:$0xff]
        %v501 = vld [vmem:[%s286 + $0x218] sm:$0xff]
        %v502 = vld [vmem:[%s286 + $0x220] sm:$0xff]
        %v503 = vld [vmem:[%s286 + $0x228] sm:$0xff]
        %v504 = vld [vmem:[%s286 + $0x230] sm:$0xff]
        %v505 = vld [vmem:[%s286 + $0x238] sm:$0xff]
        %v506 = vld [vmem:[%s286 + $0x240] sm:$0xff]
        %v507 = vld [vmem:[%s286 + $0x248] sm:$0xff]
        %v508 = vld [vmem:[%s286 + $0x250] sm:$0xff]
        %v509 = vld [vmem:[%s286 + $0x258] sm:$0xff]
        %v510 = vld [vmem:[%s286 + $0x260] sm:$0xff]
        %v511 = vld [vmem:[%s286 + $0x268] sm:$0xff]
        %v512 = vld [vmem:[%s286 + $0x270] sm:$0xff]
        %v513 = vld [vmem:[%s286 + $0x278] sm:$0xff]
        %v514 = vld [vmem:[%s286 + $0x280] sm:$0xff]
        %v515 = vld [vmem:[%s286 + $0x288] sm:$0xff]
        %v516 = vld [vmem:[%s286 + $0x290] sm:$0xff]
        %v517 = vld [vmem:[%s286 + $0x298] sm:$0xff]
        %v518 = vld [vmem:[%s286 + $0x2a0] sm:$0xff]
        %v519 = vld [vmem:[%s286 + $0x2a8] sm:$0xff]
        %v520 = vld [vmem:[%s286 + $0x2b0] sm:$0xff]
        %v521 = vld [vmem:[%s286 + $0x2b8] sm:$0xff]
        %v522 = vld [vmem:[%s286 + $0x2c0] sm:$0xff]
        %v523 = vld [vmem:[%s286 + $0x2c8] sm:$0xff]
        %v524 = vld [vmem:[%s286 + $0x2d0] sm:$0xff]
        %v525 = vld [vmem:[%s286 + $0x2d8] sm:$0xff]
        %v526 = vld [vmem:[%s286 + $0x2e0] sm:$0xff]
        %v527 = vld [vmem:[%s286 + $0x2e8] sm:$0xff]
        %v528 = vld [vmem:[%s286 + $0x2f0] sm:$0xff]
        %v529 = vld [vmem:[%s286 + $0x2f8] sm:$0xff]
        %v530 = vld [vmem:[%s286 + $0x300] sm:$0xff]
        %v531 = vld [vmem:[%s286 + $0x308] sm:$0xff]
        %v532 = vld [vmem:[%s286 + $0x310] sm:$0xff]
        %v533 = vld [vmem:[%s286 + $0x318] sm:$0xff]
        %v534 = vld [vmem:[%s286 + $0x320] sm:$0xff]
        %v535 = vld [vmem:[%s286 + $0x328] sm:$0xff]
        %v536 = vld [vmem:[%s286 + $0x330] sm:$0xff]
        %v537 = vld [vmem:[%s286 + $0x338] sm:$0xff]
        %v538 = vld [vmem:[%s286 + $0x340] sm:$0xff]
        %v539 = vld [vmem:[%s286 + $0x348] sm:$0xff]
        %v540 = vld [vmem:[%s286 + $0x350] sm:$0xff]
        %v541 = vld [vmem:[%s286 + $0x358] sm:$0xff]
        %v542 = vld [vmem:[%s286 + $0x360] sm:$0xff]
        %v543 = vld [vmem:[%s286 + $0x368] sm:$0xff]
        %v544 = vld [vmem:[%s286 + $0x370] sm:$0xff]
        %v545 = vld [vmem:[%s286 + $0x378] sm:$0xff]
        %v546 = vld [vmem:[%s286 + $0x380] sm:$0xff]
        %v547 = vld [vmem:[%s286 + $0x388] sm:$0xff]
        %v548 = vld [vmem:[%s286 + $0x390] sm:$0xff]
        %v549 = vld [vmem:[%s286 + $0x398] sm:$0xff]
        %v550 = vld [vmem:[%s286 + $0x3a0] sm:$0xff]
        %v551 = vld [vmem:[%s286 + $0x3a8] sm:$0xff]
        %v552 = vld [vmem:[%s286 + $0x3b0] sm:$0xff]
        %v553 = vld [vmem:[%s286 + $0x3b8] sm:$0xff]
        %v554 = vld [vmem:[%s286 + $0x3c0] sm:$0xff]
        %v555 = vld [vmem:[%s286 + $0x3c8] sm:$0xff]
        %v556 = vld [vmem:[%s286 + $0x3d0] sm:$0xff]
        %v557 = vld [vmem:[%s286 + $0x3d8] sm:$0xff]
        %v558 = vld [vmem:[%s286 + $0x3e0] sm:$0xff]
        %v559 = vld [vmem:[%s286 + $0x3e8] sm:$0xff]
        %v560 = vld [vmem:[%s286 + $0x3f0] sm:$0xff]
        %v561 = vld [vmem:[%s286 + $0x3f8] sm:$0xff]
        %v562 = vld [vmem:[%s286 + $0x400] sm:$0xff]
        %v563 = vld [vmem:[%s286 + $0x408] sm:$0xff]
        %v564 = vld [vmem:[%s286 + $0x410] sm:$0xff]
        %v565 = vld [vmem:[%s286 + $0x418] sm:$0xff]
        %v566 = vld [vmem:[%s286 + $0x420] sm:$0xff]
        %v567 = vld [vmem:[%s286 + $0x428] sm:$0xff]
        %v568 = vld [vmem:[%s286 + $0x430] sm:$0xff]
        %v569 = vld [vmem:[%s286 + $0x438] sm:$0xff]
        %v570 = vld [vmem:[%s286 + $0x440] sm:$0xff]
        %v571 = vld [vmem:[%s286 + $0x448] sm:$0xff]
        %v572 = vld [vmem:[%s286 + $0x450] sm:$0xff]
        %v573 = vld [vmem:[%s286 + $0x458] sm:$0xff]
        %v574 = vld [vmem:[%s286 + $0x460] sm:$0xff]
        %v575 = vld [vmem:[%s286 + $0x468] sm:$0xff]
        %v576 = vld [vmem:[%s286 + $0x470] sm:$0xff]
        %v577 = vld [vmem:[%s286 + $0x478] sm:$0xff]
        %v578 = vld [vmem:[%s286 + $0x480] sm:$0xff]
        %v579 = vld [vmem:[%s286 + $0x488] sm:$0xff]
        %v580 = vld [vmem:[%s286 + $0x490] sm:$0xff]
        %v581 = vld [vmem:[%s286 + $0x498] sm:$0xff]
        %v582 = vld [vmem:[%s286 + $0x4a0] sm:$0xff]
        %v583 = vld [vmem:[%s286 + $0x4a8] sm:$0xff]
        %v584 = vld [vmem:[%s286 + $0x4b0] sm:$0xff]
        %v585 = vld [vmem:[%s286 + $0x4b8] sm:$0xff]
        %v586 = vld [vmem:[%s286 + $0x4c0] sm:$0xff]
        %v587 = vld [vmem:[%s286 + $0x4c8] sm:$0xff]
        %v588 = vld [vmem:[%s286 + $0x4d0] sm:$0xff]
        %v589 = vld [vmem:[%s286 + $0x4d8] sm:$0xff]
        %v590 = vld [vmem:[%s286 + $0x4e0] sm:$0xff]
        %v591 = vld [vmem:[%s286 + $0x4e8] sm:$0xff]
        %v592 = vld [vmem:[%s286 + $0x4f0] sm:$0xff]
        %v593 = vld [vmem:[%s286 + $0x4f8] sm:$0xff]
        %v594 = vld [vmem:[%s286 + $0x500] sm:$0xff]
        %v595 = vld [vmem:[%s286 + $0x508] sm:$0xff]
        %v596 = vld [vmem:[%s286 + $0x510] sm:$0xff]
        %v597 = vld [vmem:[%s286 + $0x518] sm:$0xff]
        %v598 = vld [vmem:[%s286 + $0x520] sm:$0xff]
        %v599 = vld [vmem:[%s286 + $0x528] sm:$0xff]
        %v600 = vld [vmem:[%s286 + $0x530] sm:$0xff]
        %v601 = vld [vmem:[%s286 + $0x538] sm:$0xff]
        %v602 = vld [vmem:[%s286 + $0x540] sm:$0xff]
        %v603 = vld [vmem:[%s286 + $0x548] sm:$0xff]
        %v604 = vld [vmem:[%s286 + $0x550] sm:$0xff]
        %v605 = vld [vmem:[%s286 + $0x558] sm:$0xff]
        %v606 = vld [vmem:[%s286 + $0x560] sm:$0xff]
        %v607 = vld [vmem:[%s286 + $0x568] sm:$0xff]
        %v608 = vld [vmem:[%s286 + $0x570] sm:$0xff]
        %v609 = vld [vmem:[%s286 + $0x578] sm:$0xff]
        %v610 = vld [vmem:[%s286 + $0x580] sm:$0xff]
        %v611 = vld [vmem:[%s286 + $0x588] sm:$0xff]
        %v612 = vld [vmem:[%s286 + $0x590] sm:$0xff]
        %v613 = vld [vmem:[%s286 + $0x598] sm:$0xff]
        %v614 = vld [vmem:[%s286 + $0x5a0] sm:$0xff]
        %v615 = vld [vmem:[%s286 + $0x5a8] sm:$0xff]
        %v616 = vld [vmem:[%s286 + $0x5b0] sm:$0xff]
        %v617 = vld [vmem:[%s286 + $0x5b8] sm:$0xff]
        %v618 = vld [vmem:[%s286 + $0x5c0] sm:$0xff]
        %v619 = vld [vmem:[%s286 + $0x5c8] sm:$0xff]
        %v620 = vld [vmem:[%s286 + $0x5d0] sm:$0xff]
        %v621 = vld [vmem:[%s286 + $0x5d8] sm:$0xff]
        %v622 = vld [vmem:[%s286 + $0x5e0] sm:$0xff]
        %v623 = vld [vmem:[%s286 + $0x5e8] sm:$0xff]
        %v624 = vld [vmem:[%s286 + $0x5f0] sm:$0xff]
        %v625 = vld [vmem:[%s286 + $0x5f8] sm:$0xff]
        %v626 = vld [vmem:[%s286 + $0x600] sm:$0xff]
        %v627 = vld [vmem:[%s286 + $0x608] sm:$0xff]
        %v628 = vld [vmem:[%s286 + $0x610] sm:$0xff]
        %v629 = vld [vmem:[%s286 + $0x618] sm:$0xff]
        %v630 = vld [vmem:[%s286 + $0x620] sm:$0xff]
        %v631 = vld [vmem:[%s286 + $0x628] sm:$0xff]
        %v632 = vld [vmem:[%s286 + $0x630] sm:$0xff]
        %v633 = vld [vmem:[%s286 + $0x638] sm:$0xff]
        %v634 = vld [vmem:[%s286 + $0x640] sm:$0xff]
        %v635 = vld [vmem:[%s286 + $0x648] sm:$0xff]
        %v636 = vld [vmem:[%s286 + $0x650] sm:$0xff]
        %v637 = vld [vmem:[%s286 + $0x658] sm:$0xff]
        %v638 = vld [vmem:[%s286 + $0x660] sm:$0xff]
        %v639 = vld [vmem:[%s286 + $0x668] sm:$0xff]
        %v640 = vld [vmem:[%s286 + $0x670] sm:$0xff]
        %v641 = vld [vmem:[%s286 + $0x678] sm:$0xff]
        %v642 = vld [vmem:[%s286 + $0x680] sm:$0xff]
        %v643 = vld [vmem:[%s286 + $0x688] sm:$0xff]
        %v644 = vld [vmem:[%s286 + $0x690] sm:$0xff]
        %v645 = vld [vmem:[%s286 + $0x698] sm:$0xff]
        %v646 = vld [vmem:[%s286 + $0x6a0] sm:$0xff]
        %v647 = vld [vmem:[%s286 + $0x6a8] sm:$0xff]
        %v648 = vld [vmem:[%s286 + $0x6b0] sm:$0xff]
        %v649 = vld [vmem:[%s286 + $0x6b8] sm:$0xff]
        %v650 = vld [vmem:[%s286 + $0x6c0] sm:$0xff]
        %v651 = vld [vmem:[%s286 + $0x6c8] sm:$0xff]
        %v652 = vld [vmem:[%s286 + $0x6d0] sm:$0xff]
        %v653 = vld [vmem:[%s286 + $0x6d8] sm:$0xff]
        %v654 = vld [vmem:[%s286 + $0x6e0] sm:$0xff]
        %v655 = vld [vmem:[%s286 + $0x6e8] sm:$0xff]
        %v656 = vld [vmem:[%s286 + $0x6f0] sm:$0xff]
        %v657 = vld [vmem:[%s286 + $0x6f8] sm:$0xff]
        %v658 = vld [vmem:[%s295] sm:$0xf]
        %v660 = vlaneseq
        %v661 = vshrl.u32 %v660, 7
        %v662 = vsub.s32 0, %v661
        %v663 = vrot.slane %v658, %v662
        %v664 = vlaneseq
        %v665 = vshrl.u32 %v664, 7
        %v666 = vsub.s32 1, %v665
        %v667 = vrot.slane %v658, %v666
        %v668 = vlaneseq
        %v669 = vshrl.u32 %v668, 7
        %v670 = vsub.s32 2, %v669
        %v671 = vrot.slane %v658, %v670
        %v672 = vlaneseq
        %v673 = vshrl.u32 %v672, 7
        %v674 = vsub.s32 3, %v673
        %v675 = vrot.slane %v658, %v674
        %v744 = vunpack.c.l.b16 %v370
        %v745 = vunpack.c.h.b16 %v370
        %v746 = vunpack.c.l.b16 %v371
        %v747 = vunpack.c.h.b16 %v371
        %v748 = vunpack.c.l.b16 %v372
        %v749 = vunpack.c.h.b16 %v372
        %v750 = vunpack.c.l.b16 %v373
        %v751 = vunpack.c.l.b16 %v374
        %v752 = vunpack.c.h.b16 %v374
        %v753 = vunpack.c.l.b16 %v375
        %v754 = vunpack.c.h.b16 %v375
        %v755 = vunpack.c.l.b16 %v376
        %v756 = vunpack.c.h.b16 %v376
        %v757 = vunpack.c.l.b16 %v377
        %v758 = vunpack.c.l.b16 %v378
        %v759 = vunpack.c.h.b16 %v378
        %v760 = vunpack.c.l.b16 %v379
        %v761 = vunpack.c.h.b16 %v379
        %v762 = vunpack.c.l.b16 %v380
        %v763 = vunpack.c.h.b16 %v380
        %v764 = vunpack.c.l.b16 %v381
        %v765 = vunpack.c.l.b16 %v382
        %v766 = vunpack.c.h.b16 %v382
        %v767 = vunpack.c.l.b16 %v383
        %v768 = vunpack.c.h.b16 %v383
        %v769 = vunpack.c.l.b16 %v384
        %v770 = vunpack.c.h.b16 %v384
        %v771 = vunpack.c.l.b16 %v385
        %v772 = vunpack.c.l.b16 %v386
        %v773 = vunpack.c.h.b16 %v386
        %v774 = vunpack.c.l.b16 %v387
        %v775 = vunpack.c.h.b16 %v387
        %v776 = vunpack.c.l.b16 %v388
        %v777 = vunpack.c.h.b16 %v388
        %v778 = vunpack.c.l.b16 %v389
        %v779 = vunpack.c.l.b16 %v390
        %v780 = vunpack.c.h.b16 %v390
        %v781 = vunpack.c.l.b16 %v391
        %v782 = vunpack.c.h.b16 %v391
        %v783 = vunpack.c.l.b16 %v392
        %v784 = vunpack.c.h.b16 %v392
        %v785 = vunpack.c.l.b16 %v393
        %v786 = vunpack.c.l.b16 %v394
        %v787 = vunpack.c.h.b16 %v394
        %v788 = vunpack.c.l.b16 %v395
        %v789 = vunpack.c.h.b16 %v395
        %v790 = vunpack.c.l.b16 %v396
        %v791 = vunpack.c.h.b16 %v396
        %v792 = vunpack.c.l.b16 %v397
        %v793 = vunpack.c.l.b16 %v398
        %v794 = vunpack.c.h.b16 %v398
        %v795 = vunpack.c.l.b16 %v399
        %v796 = vunpack.c.h.b16 %v399
        %v797 = vunpack.c.l.b16 %v400
        %v798 = vunpack.c.h.b16 %v400
        %v799 = vunpack.c.l.b16 %v401
        %v800 = vunpack.c.l.b16 %v402
        %v801 = vunpack.c.h.b16 %v402
        %v802 = vunpack.c.l.b16 %v403
        %v803 = vunpack.c.h.b16 %v403
        %v804 = vunpack.c.l.b16 %v404
        %v805 = vunpack.c.h.b16 %v404
        %v806 = vunpack.c.l.b16 %v405
        %v807 = vunpack.c.l.b16 %v406
        %v808 = vunpack.c.h.b16 %v406
        %v809 = vunpack.c.l.b16 %v407
        %v810 = vunpack.c.h.b16 %v407
        %v811 = vunpack.c.l.b16 %v408
        %v812 = vunpack.c.h.b16 %v408
        %v813 = vunpack.c.l.b16 %v409
        %v814 = vunpack.c.l.b16 %v410
        %v815 = vunpack.c.h.b16 %v410
        %v816 = vunpack.c.l.b16 %v411
        %v817 = vunpack.c.h.b16 %v411
        %v818 = vunpack.c.l.b16 %v412
        %v819 = vunpack.c.h.b16 %v412
        %v820 = vunpack.c.l.b16 %v413
        %v821 = vunpack.c.l.b16 %v414
        %v822 = vunpack.c.h.b16 %v414
        %v823 = vunpack.c.l.b16 %v415
        %v824 = vunpack.c.h.b16 %v415
        %v825 = vunpack.c.l.b16 %v416
        %v826 = vunpack.c.h.b16 %v416
        %v827 = vunpack.c.l.b16 %v417
        %v828 = vunpack.c.l.b16 %v418
        %v829 = vunpack.c.h.b16 %v418
        %v830 = vunpack.c.l.b16 %v419
        %v831 = vunpack.c.h.b16 %v419
        %v832 = vunpack.c.l.b16 %v420
        %v833 = vunpack.c.h.b16 %v420
        %v834 = vunpack.c.l.b16 %v421
        %v835 = vunpack.c.l.b16 %v422
        %v836 = vunpack.c.h.b16 %v422
        %v837 = vunpack.c.l.b16 %v423
        %v838 = vunpack.c.h.b16 %v423
        %v839 = vunpack.c.l.b16 %v424
        %v840 = vunpack.c.h.b16 %v424
        %v841 = vunpack.c.l.b16 %v425
        %v842 = vunpack.c.l.b16 %v426
        %v843 = vunpack.c.h.b16 %v426
        %v844 = vunpack.c.l.b16 %v427
        %v845 = vunpack.c.h.b16 %v427
        %v846 = vunpack.c.l.b16 %v428
        %v847 = vunpack.c.h.b16 %v428
        %v848 = vunpack.c.l.b16 %v429
        %v849 = vunpack.c.l.b16 %v430
        %v850 = vunpack.c.h.b16 %v430
        %v851 = vunpack.c.l.b16 %v431
        %v852 = vunpack.c.h.b16 %v431
        %v853 = vunpack.c.l.b16 %v432
        %v854 = vunpack.c.h.b16 %v432
        %v855 = vunpack.c.l.b16 %v433
        %v856 = vpack.c.b16 %v751, %v744
        %v857 = vpack.c.b16 %v752, %v745
        %v858 = vpack.c.b16 %v753, %v746
        %v859 = vpack.c.b16 %v754, %v747
        %v860 = vpack.c.b16 %v755, %v748
        %v861 = vpack.c.b16 %v756, %v749
        %v862 = vpack.c.b16 %v757, %v750
        %v863 = vpack.c.b16 %v765, %v758
        %v864 = vpack.c.b16 %v766, %v759
        %v865 = vpack.c.b16 %v767, %v760
        %v866 = vpack.c.b16 %v768, %v761
        %v867 = vpack.c.b16 %v769, %v762
        %v868 = vpack.c.b16 %v770, %v763
        %v869 = vpack.c.b16 %v771, %v764
        %v870 = vpack.c.b16 %v779, %v772
        %v871 = vpack.c.b16 %v780, %v773
        %v872 = vpack.c.b16 %v781, %v774
        %v873 = vpack.c.b16 %v782, %v775
        %v874 = vpack.c.b16 %v783, %v776
        %v875 = vpack.c.b16 %v784, %v777
        %v876 = vpack.c.b16 %v785, %v778
        %v877 = vpack.c.b16 %v793, %v786
        %v878 = vpack.c.b16 %v794, %v787
        %v879 = vpack.c.b16 %v795, %v788
        %v880 = vpack.c.b16 %v796, %v789
        %v881 = vpack.c.b16 %v797, %v790
        %v882 = vpack.c.b16 %v798, %v791
        %v883 = vpack.c.b16 %v799, %v792
        %v884 = vpack.c.b16 %v807, %v800
        %v885 = vpack.c.b16 %v808, %v801
        %v886 = vpack.c.b16 %v809, %v802
        %v887 = vpack.c.b16 %v810, %v803
        %v888 = vpack.c.b16 %v811, %v804
        %v889 = vpack.c.b16 %v812, %v805
        %v890 = vpack.c.b16 %v813, %v806
        %v891 = vpack.c.b16 %v821, %v814
        %v892 = vpack.c.b16 %v822, %v815
        %v893 = vpack.c.b16 %v823, %v816
        %v894 = vpack.c.b16 %v824, %v817
        %v895 = vpack.c.b16 %v825, %v818
        %v896 = vpack.c.b16 %v826, %v819
        %v897 = vpack.c.b16 %v827, %v820
        %v898 = vpack.c.b16 %v835, %v828
        %v899 = vpack.c.b16 %v836, %v829
        %v900 = vpack.c.b16 %v837, %v830
        %v901 = vpack.c.b16 %v838, %v831
        %v902 = vpack.c.b16 %v839, %v832
        %v903 = vpack.c.b16 %v840, %v833
        %v904 = vpack.c.b16 %v841, %v834
        %v905 = vpack.c.b16 %v849, %v842
        %v906 = vpack.c.b16 %v850, %v843
        %v907 = vpack.c.b16 %v851, %v844
        %v908 = vpack.c.b16 %v852, %v845
        %v909 = vpack.c.b16 %v853, %v846
        %v910 = vpack.c.b16 %v854, %v847
        %v911 = vpack.c.b16 %v855, %v848
        %v1192 = vunpack.c.l.b16 %v434
        %v1193 = vunpack.c.h.b16 %v434
        %v1194 = vunpack.c.l.b16 %v435
        %v1195 = vunpack.c.h.b16 %v435
        %v1196 = vunpack.c.l.b16 %v436
        %v1197 = vunpack.c.h.b16 %v436
        %v1198 = vunpack.c.l.b16 %v437
        %v1199 = vunpack.c.h.b16 %v437
        %v1200 = vunpack.c.l.b16 %v438
        %v1201 = vunpack.c.h.b16 %v438
        %v1202 = vunpack.c.l.b16 %v439
        %v1203 = vunpack.c.h.b16 %v439
        %v1204 = vunpack.c.l.b16 %v440
        %v1205 = vunpack.c.h.b16 %v440
        %v1206 = vunpack.c.l.b16 %v441
        %v1207 = vunpack.c.h.b16 %v441
        %v1208 = vunpack.c.l.b16 %v442
        %v1209 = vunpack.c.h.b16 %v442
        %v1210 = vunpack.c.l.b16 %v443
        %v1211 = vunpack.c.h.b16 %v443
        %v1212 = vunpack.c.l.b16 %v444
        %v1213 = vunpack.c.h.b16 %v444
        %v1214 = vunpack.c.l.b16 %v445
        %v1215 = vunpack.c.h.b16 %v445
        %v1216 = vunpack.c.l.b16 %v446
        %v1217 = vunpack.c.h.b16 %v446
        %v1218 = vunpack.c.l.b16 %v447
        %v1219 = vunpack.c.h.b16 %v447
        %v1220 = vunpack.c.l.b16 %v448
        %v1221 = vunpack.c.h.b16 %v448
        %v1222 = vunpack.c.l.b16 %v449
        %v1223 = vunpack.c.h.b16 %v449
        %v1224 = vunpack.c.l.b16 %v450
        %v1225 = vunpack.c.h.b16 %v450
        %v1226 = vunpack.c.l.b16 %v451
        %v1227 = vunpack.c.h.b16 %v451
        %v1228 = vunpack.c.l.b16 %v452
        %v1229 = vunpack.c.h.b16 %v452
        %v1230 = vunpack.c.l.b16 %v453
        %v1231 = vunpack.c.h.b16 %v453
        %v1232 = vunpack.c.l.b16 %v454
        %v1233 = vunpack.c.h.b16 %v454
        %v1234 = vunpack.c.l.b16 %v455
        %v1235 = vunpack.c.h.b16 %v455
        %v1236 = vunpack.c.l.b16 %v456
        %v1237 = vunpack.c.h.b16 %v456
        %v1238 = vunpack.c.l.b16 %v457
        %v1239 = vunpack.c.h.b16 %v457
        %v1240 = vunpack.c.l.b16 %v458
        %v1241 = vunpack.c.h.b16 %v458
        %v1242 = vunpack.c.l.b16 %v459
        %v1243 = vunpack.c.h.b16 %v459
        %v1244 = vunpack.c.l.b16 %v460
        %v1245 = vunpack.c.h.b16 %v460
        %v1246 = vunpack.c.l.b16 %v461
        %v1247 = vunpack.c.h.b16 %v461
        %v1248 = vunpack.c.l.b16 %v462
        %v1249 = vunpack.c.h.b16 %v462
        %v1250 = vunpack.c.l.b16 %v463
        %v1251 = vunpack.c.h.b16 %v463
        %v1252 = vunpack.c.l.b16 %v464
        %v1253 = vunpack.c.h.b16 %v464
        %v1254 = vunpack.c.l.b16 %v465
        %v1255 = vunpack.c.h.b16 %v465
        %v1256 = vunpack.c.l.b16 %v466
        %v1257 = vunpack.c.h.b16 %v466
        %v1258 = vunpack.c.l.b16 %v467
        %v1259 = vunpack.c.h.b16 %v467
        %v1260 = vunpack.c.l.b16 %v468
        %v1261 = vunpack.c.h.b16 %v468
        %v1262 = vunpack.c.l.b16 %v469
        %v1263 = vunpack.c.h.b16 %v469
        %v1264 = vunpack.c.l.b16 %v470
        %v1265 = vunpack.c.h.b16 %v470
        %v1266 = vunpack.c.l.b16 %v471
        %v1267 = vunpack.c.h.b16 %v471
        %v1268 = vunpack.c.l.b16 %v472
        %v1269 = vunpack.c.h.b16 %v472
        %v1270 = vunpack.c.l.b16 %v473
        %v1271 = vunpack.c.h.b16 %v473
        %v1272 = vunpack.c.l.b16 %v474
        %v1273 = vunpack.c.h.b16 %v474
        %v1274 = vunpack.c.l.b16 %v475
        %v1275 = vunpack.c.h.b16 %v475
        %v1276 = vunpack.c.l.b16 %v476
        %v1277 = vunpack.c.h.b16 %v476
        %v1278 = vunpack.c.l.b16 %v477
        %v1279 = vunpack.c.h.b16 %v477
        %v1280 = vunpack.c.l.b16 %v478
        %v1281 = vunpack.c.h.b16 %v478
        %v1282 = vunpack.c.l.b16 %v479
        %v1283 = vunpack.c.h.b16 %v479
        %v1284 = vunpack.c.l.b16 %v480
        %v1285 = vunpack.c.h.b16 %v480
        %v1286 = vunpack.c.l.b16 %v481
        %v1287 = vunpack.c.h.b16 %v481
        %v1288 = vunpack.c.l.b16 %v482
        %v1289 = vunpack.c.h.b16 %v482
        %v1290 = vunpack.c.l.b16 %v483
        %v1291 = vunpack.c.h.b16 %v483
        %v1292 = vunpack.c.l.b16 %v484
        %v1293 = vunpack.c.h.b16 %v484
        %v1294 = vunpack.c.l.b16 %v485
        %v1295 = vunpack.c.h.b16 %v485
        %v1296 = vunpack.c.l.b16 %v486
        %v1297 = vunpack.c.h.b16 %v486
        %v1298 = vunpack.c.l.b16 %v487
        %v1299 = vunpack.c.h.b16 %v487
        %v1300 = vunpack.c.l.b16 %v488
        %v1301 = vunpack.c.h.b16 %v488
        %v1302 = vunpack.c.l.b16 %v489
        %v1303 = vunpack.c.h.b16 %v489
        %v1304 = vunpack.c.l.b16 %v490
        %v1305 = vunpack.c.h.b16 %v490
        %v1306 = vunpack.c.l.b16 %v491
        %v1307 = vunpack.c.h.b16 %v491
        %v1308 = vunpack.c.l.b16 %v492
        %v1309 = vunpack.c.h.b16 %v492
        %v1310 = vunpack.c.l.b16 %v493
        %v1311 = vunpack.c.h.b16 %v493
        %v1312 = vunpack.c.l.b16 %v494
        %v1313 = vunpack.c.h.b16 %v494
        %v1314 = vunpack.c.l.b16 %v495
        %v1315 = vunpack.c.h.b16 %v495
        %v1316 = vunpack.c.l.b16 %v496
        %v1317 = vunpack.c.h.b16 %v496
        %v1318 = vunpack.c.l.b16 %v497
        %v1319 = vunpack.c.h.b16 %v497
        %v1320 = vunpack.c.l.b16 %v498
        %v1321 = vunpack.c.h.b16 %v498
        %v1322 = vunpack.c.l.b16 %v499
        %v1323 = vunpack.c.h.b16 %v499
        %v1324 = vunpack.c.l.b16 %v500
        %v1325 = vunpack.c.h.b16 %v500
        %v1326 = vunpack.c.l.b16 %v501
        %v1327 = vunpack.c.h.b16 %v501
        %v1328 = vunpack.c.l.b16 %v502
        %v1329 = vunpack.c.h.b16 %v502
        %v1330 = vunpack.c.l.b16 %v503
        %v1331 = vunpack.c.h.b16 %v503
        %v1332 = vunpack.c.l.b16 %v504
        %v1333 = vunpack.c.h.b16 %v504
        %v1334 = vunpack.c.l.b16 %v505
        %v1335 = vunpack.c.h.b16 %v505
        %v1336 = vunpack.c.l.b16 %v506
        %v1337 = vunpack.c.h.b16 %v506
        %v1338 = vunpack.c.l.b16 %v507
        %v1339 = vunpack.c.h.b16 %v507
        %v1340 = vunpack.c.l.b16 %v508
        %v1341 = vunpack.c.h.b16 %v508
        %v1342 = vunpack.c.l.b16 %v509
        %v1343 = vunpack.c.h.b16 %v509
        %v1344 = vunpack.c.l.b16 %v510
        %v1345 = vunpack.c.h.b16 %v510
        %v1346 = vunpack.c.l.b16 %v511
        %v1347 = vunpack.c.h.b16 %v511
        %v1348 = vunpack.c.l.b16 %v512
        %v1349 = vunpack.c.h.b16 %v512
        %v1350 = vunpack.c.l.b16 %v513
        %v1351 = vunpack.c.h.b16 %v513
        %v1352 = vunpack.c.l.b16 %v514
        %v1353 = vunpack.c.h.b16 %v514
        %v1354 = vunpack.c.l.b16 %v515
        %v1355 = vunpack.c.h.b16 %v515
        %v1356 = vunpack.c.l.b16 %v516
        %v1357 = vunpack.c.h.b16 %v516
        %v1358 = vunpack.c.l.b16 %v517
        %v1359 = vunpack.c.h.b16 %v517
        %v1360 = vunpack.c.l.b16 %v518
        %v1361 = vunpack.c.h.b16 %v518
        %v1362 = vunpack.c.l.b16 %v519
        %v1363 = vunpack.c.h.b16 %v519
        %v1364 = vunpack.c.l.b16 %v520
        %v1365 = vunpack.c.h.b16 %v520
        %v1366 = vunpack.c.l.b16 %v521
        %v1367 = vunpack.c.h.b16 %v521
        %v1368 = vunpack.c.l.b16 %v522
        %v1369 = vunpack.c.h.b16 %v522
        %v1370 = vunpack.c.l.b16 %v523
        %v1371 = vunpack.c.h.b16 %v523
        %v1372 = vunpack.c.l.b16 %v524
        %v1373 = vunpack.c.h.b16 %v524
        %v1374 = vunpack.c.l.b16 %v525
        %v1375 = vunpack.c.h.b16 %v525
        %v1376 = vunpack.c.l.b16 %v526
        %v1377 = vunpack.c.h.b16 %v526
        %v1378 = vunpack.c.l.b16 %v527
        %v1379 = vunpack.c.h.b16 %v527
        %v1380 = vunpack.c.l.b16 %v528
        %v1381 = vunpack.c.h.b16 %v528
        %v1382 = vunpack.c.l.b16 %v529
        %v1383 = vunpack.c.h.b16 %v529
        %v1384 = vunpack.c.l.b16 %v530
        %v1385 = vunpack.c.h.b16 %v530
        %v1386 = vunpack.c.l.b16 %v531
        %v1387 = vunpack.c.h.b16 %v531
        %v1388 = vunpack.c.l.b16 %v532
        %v1389 = vunpack.c.h.b16 %v532
        %v1390 = vunpack.c.l.b16 %v533
        %v1391 = vunpack.c.h.b16 %v533
        %v1392 = vunpack.c.l.b16 %v534
        %v1393 = vunpack.c.h.b16 %v534
        %v1394 = vunpack.c.l.b16 %v535
        %v1395 = vunpack.c.h.b16 %v535
        %v1396 = vunpack.c.l.b16 %v536
        %v1397 = vunpack.c.h.b16 %v536
        %v1398 = vunpack.c.l.b16 %v537
        %v1399 = vunpack.c.h.b16 %v537
        %v1400 = vunpack.c.l.b16 %v538
        %v1401 = vunpack.c.h.b16 %v538
        %v1402 = vunpack.c.l.b16 %v539
        %v1403 = vunpack.c.h.b16 %v539
        %v1404 = vunpack.c.l.b16 %v540
        %v1405 = vunpack.c.h.b16 %v540
        %v1406 = vunpack.c.l.b16 %v541
        %v1407 = vunpack.c.h.b16 %v541
        %v1408 = vunpack.c.l.b16 %v542
        %v1409 = vunpack.c.h.b16 %v542
        %v1410 = vunpack.c.l.b16 %v543
        %v1411 = vunpack.c.h.b16 %v543
        %v1412 = vunpack.c.l.b16 %v544
        %v1413 = vunpack.c.h.b16 %v544
        %v1414 = vunpack.c.l.b16 %v545
        %v1415 = vunpack.c.h.b16 %v545
        %v1416 = vunpack.c.l.b16 %v546
        %v1417 = vunpack.c.h.b16 %v546
        %v1418 = vunpack.c.l.b16 %v547
        %v1419 = vunpack.c.h.b16 %v547
        %v1420 = vunpack.c.l.b16 %v548
        %v1421 = vunpack.c.h.b16 %v548
        %v1422 = vunpack.c.l.b16 %v549
        %v1423 = vunpack.c.h.b16 %v549
        %v1424 = vunpack.c.l.b16 %v550
        %v1425 = vunpack.c.h.b16 %v550
        %v1426 = vunpack.c.l.b16 %v551
        %v1427 = vunpack.c.h.b16 %v551
        %v1428 = vunpack.c.l.b16 %v552
        %v1429 = vunpack.c.h.b16 %v552
        %v1430 = vunpack.c.l.b16 %v553
        %v1431 = vunpack.c.h.b16 %v553
        %v1432 = vunpack.c.l.b16 %v554
        %v1433 = vunpack.c.h.b16 %v554
        %v1434 = vunpack.c.l.b16 %v555
        %v1435 = vunpack.c.h.b16 %v555
        %v1436 = vunpack.c.l.b16 %v556
        %v1437 = vunpack.c.h.b16 %v556
        %v1438 = vunpack.c.l.b16 %v557
        %v1439 = vunpack.c.h.b16 %v557
        %v1440 = vunpack.c.l.b16 %v558
        %v1441 = vunpack.c.h.b16 %v558
        %v1442 = vunpack.c.l.b16 %v559
        %v1443 = vunpack.c.h.b16 %v559
        %v1444 = vunpack.c.l.b16 %v560
        %v1445 = vunpack.c.h.b16 %v560
        %v1446 = vunpack.c.l.b16 %v561
        %v1447 = vunpack.c.h.b16 %v561
        %v1448 = vunpack.c.l.b16 %v562
        %v1449 = vunpack.c.h.b16 %v562
        %v1450 = vunpack.c.l.b16 %v563
        %v1451 = vunpack.c.h.b16 %v563
        %v1452 = vunpack.c.l.b16 %v564
        %v1453 = vunpack.c.h.b16 %v564
        %v1454 = vunpack.c.l.b16 %v565
        %v1455 = vunpack.c.h.b16 %v565
        %v1456 = vunpack.c.l.b16 %v566
        %v1457 = vunpack.c.h.b16 %v566
        %v1458 = vunpack.c.l.b16 %v567
        %v1459 = vunpack.c.h.b16 %v567
        %v1460 = vunpack.c.l.b16 %v568
        %v1461 = vunpack.c.h.b16 %v568
        %v1462 = vunpack.c.l.b16 %v569
        %v1463 = vunpack.c.h.b16 %v569
        %v1464 = vunpack.c.l.b16 %v570
        %v1465 = vunpack.c.h.b16 %v570
        %v1466 = vunpack.c.l.b16 %v571
        %v1467 = vunpack.c.h.b16 %v571
        %v1468 = vunpack.c.l.b16 %v572
        %v1469 = vunpack.c.h.b16 %v572
        %v1470 = vunpack.c.l.b16 %v573
        %v1471 = vunpack.c.h.b16 %v573
        %v1472 = vunpack.c.l.b16 %v574
        %v1473 = vunpack.c.h.b16 %v574
        %v1474 = vunpack.c.l.b16 %v575
        %v1475 = vunpack.c.h.b16 %v575
        %v1476 = vunpack.c.l.b16 %v576
        %v1477 = vunpack.c.h.b16 %v576
        %v1478 = vunpack.c.l.b16 %v577
        %v1479 = vunpack.c.h.b16 %v577
        %v1480 = vunpack.c.l.b16 %v578
        %v1481 = vunpack.c.h.b16 %v578
        %v1482 = vunpack.c.l.b16 %v579
        %v1483 = vunpack.c.h.b16 %v579
        %v1484 = vunpack.c.l.b16 %v580
        %v1485 = vunpack.c.h.b16 %v580
        %v1486 = vunpack.c.l.b16 %v581
        %v1487 = vunpack.c.h.b16 %v581
        %v1488 = vunpack.c.l.b16 %v582
        %v1489 = vunpack.c.h.b16 %v582
        %v1490 = vunpack.c.l.b16 %v583
        %v1491 = vunpack.c.h.b16 %v583
        %v1492 = vunpack.c.l.b16 %v584
        %v1493 = vunpack.c.h.b16 %v584
        %v1494 = vunpack.c.l.b16 %v585
        %v1495 = vunpack.c.h.b16 %v585
        %v1496 = vunpack.c.l.b16 %v586
        %v1497 = vunpack.c.h.b16 %v586
        %v1498 = vunpack.c.l.b16 %v587
        %v1499 = vunpack.c.h.b16 %v587
        %v1500 = vunpack.c.l.b16 %v588
        %v1501 = vunpack.c.h.b16 %v588
        %v1502 = vunpack.c.l.b16 %v589
        %v1503 = vunpack.c.h.b16 %v589
        %v1504 = vunpack.c.l.b16 %v590
        %v1505 = vunpack.c.h.b16 %v590
        %v1506 = vunpack.c.l.b16 %v591
        %v1507 = vunpack.c.h.b16 %v591
        %v1508 = vunpack.c.l.b16 %v592
        %v1509 = vunpack.c.h.b16 %v592
        %v1510 = vunpack.c.l.b16 %v593
        %v1511 = vunpack.c.h.b16 %v593
        %v1512 = vunpack.c.l.b16 %v594
        %v1513 = vunpack.c.h.b16 %v594
        %v1514 = vunpack.c.l.b16 %v595
        %v1515 = vunpack.c.h.b16 %v595
        %v1516 = vunpack.c.l.b16 %v596
        %v1517 = vunpack.c.h.b16 %v596
        %v1518 = vunpack.c.l.b16 %v597
        %v1519 = vunpack.c.h.b16 %v597
        %v1520 = vunpack.c.l.b16 %v598
        %v1521 = vunpack.c.h.b16 %v598
        %v1522 = vunpack.c.l.b16 %v599
        %v1523 = vunpack.c.h.b16 %v599
        %v1524 = vunpack.c.l.b16 %v600
        %v1525 = vunpack.c.h.b16 %v600
        %v1526 = vunpack.c.l.b16 %v601
        %v1527 = vunpack.c.h.b16 %v601
        %v1528 = vunpack.c.l.b16 %v602
        %v1529 = vunpack.c.h.b16 %v602
        %v1530 = vunpack.c.l.b16 %v603
        %v1531 = vunpack.c.h.b16 %v603
        %v1532 = vunpack.c.l.b16 %v604
        %v1533 = vunpack.c.h.b16 %v604
        %v1534 = vunpack.c.l.b16 %v605
        %v1535 = vunpack.c.h.b16 %v605
        %v1536 = vunpack.c.l.b16 %v606
        %v1537 = vunpack.c.h.b16 %v606
        %v1538 = vunpack.c.l.b16 %v607
        %v1539 = vunpack.c.h.b16 %v607
        %v1540 = vunpack.c.l.b16 %v608
        %v1541 = vunpack.c.h.b16 %v608
        %v1542 = vunpack.c.l.b16 %v609
        %v1543 = vunpack.c.h.b16 %v609
        %v1544 = vunpack.c.l.b16 %v610
        %v1545 = vunpack.c.h.b16 %v610
        %v1546 = vunpack.c.l.b16 %v611
        %v1547 = vunpack.c.h.b16 %v611
        %v1548 = vunpack.c.l.b16 %v612
        %v1549 = vunpack.c.h.b16 %v612
        %v1550 = vunpack.c.l.b16 %v613
        %v1551 = vunpack.c.h.b16 %v613
        %v1552 = vunpack.c.l.b16 %v614
        %v1553 = vunpack.c.h.b16 %v614
        %v1554 = vunpack.c.l.b16 %v615
        %v1555 = vunpack.c.h.b16 %v615
        %v1556 = vunpack.c.l.b16 %v616
        %v1557 = vunpack.c.h.b16 %v616
        %v1558 = vunpack.c.l.b16 %v617
        %v1559 = vunpack.c.h.b16 %v617
        %v1560 = vunpack.c.l.b16 %v618
        %v1561 = vunpack.c.h.b16 %v618
        %v1562 = vunpack.c.l.b16 %v619
        %v1563 = vunpack.c.h.b16 %v619
        %v1564 = vunpack.c.l.b16 %v620
        %v1565 = vunpack.c.h.b16 %v620
        %v1566 = vunpack.c.l.b16 %v621
        %v1567 = vunpack.c.h.b16 %v621
        %v1568 = vunpack.c.l.b16 %v622
        %v1569 = vunpack.c.h.b16 %v622
        %v1570 = vunpack.c.l.b16 %v623
        %v1571 = vunpack.c.h.b16 %v623
        %v1572 = vunpack.c.l.b16 %v624
        %v1573 = vunpack.c.h.b16 %v624
        %v1574 = vunpack.c.l.b16 %v625
        %v1575 = vunpack.c.h.b16 %v625
        %v1576 = vunpack.c.l.b16 %v626
        %v1577 = vunpack.c.h.b16 %v626
        %v1578 = vunpack.c.l.b16 %v627
        %v1579 = vunpack.c.h.b16 %v627
        %v1580 = vunpack.c.l.b16 %v628
        %v1581 = vunpack.c.h.b16 %v628
        %v1582 = vunpack.c.l.b16 %v629
        %v1583 = vunpack.c.h.b16 %v629
        %v1584 = vunpack.c.l.b16 %v630
        %v1585 = vunpack.c.h.b16 %v630
        %v1586 = vunpack.c.l.b16 %v631
        %v1587 = vunpack.c.h.b16 %v631
        %v1588 = vunpack.c.l.b16 %v632
        %v1589 = vunpack.c.h.b16 %v632
        %v1590 = vunpack.c.l.b16 %v633
        %v1591 = vunpack.c.h.b16 %v633
        %v1592 = vunpack.c.l.b16 %v634
        %v1593 = vunpack.c.h.b16 %v634
        %v1594 = vunpack.c.l.b16 %v635
        %v1595 = vunpack.c.h.b16 %v635
        %v1596 = vunpack.c.l.b16 %v636
        %v1597 = vunpack.c.h.b16 %v636
        %v1598 = vunpack.c.l.b16 %v637
        %v1599 = vunpack.c.h.b16 %v637
        %v1600 = vunpack.c.l.b16 %v638
        %v1601 = vunpack.c.h.b16 %v638
        %v1602 = vunpack.c.l.b16 %v639
        %v1603 = vunpack.c.h.b16 %v639
        %v1604 = vunpack.c.l.b16 %v640
        %v1605 = vunpack.c.h.b16 %v640
        %v1606 = vunpack.c.l.b16 %v641
        %v1607 = vunpack.c.h.b16 %v641
        %v1608 = vunpack.c.l.b16 %v642
        %v1609 = vunpack.c.h.b16 %v642
        %v1610 = vunpack.c.l.b16 %v643
        %v1611 = vunpack.c.h.b16 %v643
        %v1612 = vunpack.c.l.b16 %v644
        %v1613 = vunpack.c.h.b16 %v644
        %v1614 = vunpack.c.l.b16 %v645
        %v1615 = vunpack.c.h.b16 %v645
        %v1616 = vunpack.c.l.b16 %v646
        %v1617 = vunpack.c.h.b16 %v646
        %v1618 = vunpack.c.l.b16 %v647
        %v1619 = vunpack.c.h.b16 %v647
        %v1620 = vunpack.c.l.b16 %v648
        %v1621 = vunpack.c.h.b16 %v648
        %v1622 = vunpack.c.l.b16 %v649
        %v1623 = vunpack.c.h.b16 %v649
        %v1624 = vunpack.c.l.b16 %v650
        %v1625 = vunpack.c.h.b16 %v650
        %v1626 = vunpack.c.l.b16 %v651
        %v1627 = vunpack.c.h.b16 %v651
        %v1628 = vunpack.c.l.b16 %v652
        %v1629 = vunpack.c.h.b16 %v652
        %v1630 = vunpack.c.l.b16 %v653
        %v1631 = vunpack.c.h.b16 %v653
        %v1632 = vunpack.c.l.b16 %v654
        %v1633 = vunpack.c.h.b16 %v654
        %v1634 = vunpack.c.l.b16 %v655
        %v1635 = vunpack.c.h.b16 %v655
        %v1636 = vunpack.c.l.b16 %v656
        %v1637 = vunpack.c.h.b16 %v656
        %v1638 = vunpack.c.l.b16 %v657
        %v1639 = vunpack.c.h.b16 %v657
        %v1640 = vpack.c.b16 %v1196, %v1192
        %v1641 = vpack.c.b16 %v1197, %v1193
        %v1642 = vpack.c.b16 %v1198, %v1194
        %v1643 = vpack.c.b16 %v1199, %v1195
        %v1644 = vpack.c.b16 %v1204, %v1200
        %v1645 = vpack.c.b16 %v1205, %v1201
        %v1646 = vpack.c.b16 %v1206, %v1202
        %v1647 = vpack.c.b16 %v1207, %v1203
        %v1648 = vpack.c.b16 %v1212, %v1208
        %v1649 = vpack.c.b16 %v1213, %v1209
        %v1650 = vpack.c.b16 %v1214, %v1210
        %v1651 = vpack.c.b16 %v1215, %v1211
        %v1652 = vpack.c.b16 %v1220, %v1216
        %v1653 = vpack.c.b16 %v1221, %v1217
        %v1654 = vpack.c.b16 %v1222, %v1218
        %v1655 = vpack.c.b16 %v1223, %v1219
        %v1656 = vpack.c.b16 %v1228, %v1224
        %v1657 = vpack.c.b16 %v1229, %v1225
        %v1658 = vpack.c.b16 %v1230, %v1226
        %v1659 = vpack.c.b16 %v1231, %v1227
        %v1660 = vpack.c.b16 %v1236, %v1232
        %v1661 = vpack.c.b16 %v1237, %v1233
        %v1662 = vpack.c.b16 %v1238, %v1234
        %v1663 = vpack.c.b16 %v1239, %v1235
        %v1664 = vpack.c.b16 %v1244, %v1240
        %v1665 = vpack.c.b16 %v1245, %v1241
        %v1666 = vpack.c.b16 %v1246, %v1242
        %v1667 = vpack.c.b16 %v1247, %v1243
        %v1668 = vpack.c.b16 %v1252, %v1248
        %v1669 = vpack.c.b16 %v1253, %v1249
        %v1670 = vpack.c.b16 %v1254, %v1250
        %v1671 = vpack.c.b16 %v1255, %v1251
        %v1672 = vpack.c.b16 %v1260, %v1256
        %v1673 = vpack.c.b16 %v1261, %v1257
        %v1674 = vpack.c.b16 %v1262, %v1258
        %v1675 = vpack.c.b16 %v1263, %v1259
        %v1676 = vpack.c.b16 %v1268, %v1264
        %v1677 = vpack.c.b16 %v1269, %v1265
        %v1678 = vpack.c.b16 %v1270, %v1266
        %v1679 = vpack.c.b16 %v1271, %v1267
        %v1680 = vpack.c.b16 %v1276, %v1272
        %v1681 = vpack.c.b16 %v1277, %v1273
        %v1682 = vpack.c.b16 %v1278, %v1274
        %v1683 = vpack.c.b16 %v1279, %v1275
        %v1684 = vpack.c.b16 %v1284, %v1280
        %v1685 = vpack.c.b16 %v1285, %v1281
        %v1686 = vpack.c.b16 %v1286, %v1282
        %v1687 = vpack.c.b16 %v1287, %v1283
        %v1688 = vpack.c.b16 %v1292, %v1288
        %v1689 = vpack.c.b16 %v1293, %v1289
        %v1690 = vpack.c.b16 %v1294, %v1290
        %v1691 = vpack.c.b16 %v1295, %v1291
        %v1692 = vpack.c.b16 %v1300, %v1296
        %v1693 = vpack.c.b16 %v1301, %v1297
        %v1694 = vpack.c.b16 %v1302, %v1298
        %v1695 = vpack.c.b16 %v1303, %v1299
        %v1696 = vpack.c.b16 %v1308, %v1304
        %v1697 = vpack.c.b16 %v1309, %v1305
        %v1698 = vpack.c.b16 %v1310, %v1306
        %v1699 = vpack.c.b16 %v1311, %v1307
        %v1700 = vpack.c.b16 %v1316, %v1312
        %v1701 = vpack.c.b16 %v1317, %v1313
        %v1702 = vpack.c.b16 %v1318, %v1314
        %v1703 = vpack.c.b16 %v1319, %v1315
        %v1704 = vpack.c.b16 %v1324, %v1320
        %v1705 = vpack.c.b16 %v1325, %v1321
        %v1706 = vpack.c.b16 %v1326, %v1322
        %v1707 = vpack.c.b16 %v1327, %v1323
        %v1708 = vpack.c.b16 %v1332, %v1328
        %v1709 = vpack.c.b16 %v1333, %v1329
        %v1710 = vpack.c.b16 %v1334, %v1330
        %v1711 = vpack.c.b16 %v1335, %v1331
        %v1712 = vpack.c.b16 %v1340, %v1336
        %v1713 = vpack.c.b16 %v1341, %v1337
        %v1714 = vpack.c.b16 %v1342, %v1338
        %v1715 = vpack.c.b16 %v1343, %v1339
        %v1716 = vpack.c.b16 %v1348, %v1344
        %v1717 = vpack.c.b16 %v1349, %v1345
        %v1718 = vpack.c.b16 %v1350, %v1346
        %v1719 = vpack.c.b16 %v1351, %v1347
        %v1720 = vpack.c.b16 %v1356, %v1352
        %v1721 = vpack.c.b16 %v1357, %v1353
        %v1722 = vpack.c.b16 %v1358, %v1354
        %v1723 = vpack.c.b16 %v1359, %v1355
        %v1724 = vpack.c.b16 %v1364, %v1360
        %v1725 = vpack.c.b16 %v1365, %v1361
        %v1726 = vpack.c.b16 %v1366, %v1362
        %v1727 = vpack.c.b16 %v1367, %v1363
        %v1728 = vpack.c.b16 %v1372, %v1368
        %v1729 = vpack.c.b16 %v1373, %v1369
        %v1730 = vpack.c.b16 %v1374, %v1370
        %v1731 = vpack.c.b16 %v1375, %v1371
        %v1732 = vpack.c.b16 %v1380, %v1376
        %v1733 = vpack.c.b16 %v1381, %v1377
        %v1734 = vpack.c.b16 %v1382, %v1378
        %v1735 = vpack.c.b16 %v1383, %v1379
        %v1736 = vpack.c.b16 %v1388, %v1384
        %v1737 = vpack.c.b16 %v1389, %v1385
        %v1738 = vpack.c.b16 %v1390, %v1386
        %v1739 = vpack.c.b16 %v1391, %v1387
        %v1740 = vpack.c.b16 %v1396, %v1392
        %v1741 = vpack.c.b16 %v1397, %v1393
        %v1742 = vpack.c.b16 %v1398, %v1394
        %v1743 = vpack.c.b16 %v1399, %v1395
        %v1744 = vpack.c.b16 %v1404, %v1400
        %v1745 = vpack.c.b16 %v1405, %v1401
        %v1746 = vpack.c.b16 %v1406, %v1402
        %v1747 = vpack.c.b16 %v1407, %v1403
        %v1748 = vpack.c.b16 %v1412, %v1408
        %v1749 = vpack.c.b16 %v1413, %v1409
        %v1750 = vpack.c.b16 %v1414, %v1410
        %v1751 = vpack.c.b16 %v1415, %v1411
        %v1752 = vpack.c.b16 %v1420, %v1416
        %v1753 = vpack.c.b16 %v1421, %v1417
        %v1754 = vpack.c.b16 %v1422, %v1418
        %v1755 = vpack.c.b16 %v1423, %v1419
        %v1756 = vpack.c.b16 %v1428, %v1424
        %v1757 = vpack.c.b16 %v1429, %v1425
        %v1758 = vpack.c.b16 %v1430, %v1426
        %v1759 = vpack.c.b16 %v1431, %v1427
        %v1760 = vpack.c.b16 %v1436, %v1432
        %v1761 = vpack.c.b16 %v1437, %v1433
        %v1762 = vpack.c.b16 %v1438, %v1434
        %v1763 = vpack.c.b16 %v1439, %v1435
        %v1764 = vpack.c.b16 %v1444, %v1440
        %v1765 = vpack.c.b16 %v1445, %v1441
        %v1766 = vpack.c.b16 %v1446, %v1442
        %v1767 = vpack.c.b16 %v1447, %v1443
        %v1768 = vpack.c.b16 %v1452, %v1448
        %v1769 = vpack.c.b16 %v1453, %v1449
        %v1770 = vpack.c.b16 %v1454, %v1450
        %v1771 = vpack.c.b16 %v1455, %v1451
        %v1772 = vpack.c.b16 %v1460, %v1456
        %v1773 = vpack.c.b16 %v1461, %v1457
        %v1774 = vpack.c.b16 %v1462, %v1458
        %v1775 = vpack.c.b16 %v1463, %v1459
        %v1776 = vpack.c.b16 %v1468, %v1464
        %v1777 = vpack.c.b16 %v1469, %v1465
        %v1778 = vpack.c.b16 %v1470, %v1466
        %v1779 = vpack.c.b16 %v1471, %v1467
        %v1780 = vpack.c.b16 %v1476, %v1472
        %v1781 = vpack.c.b16 %v1477, %v1473
        %v1782 = vpack.c.b16 %v1478, %v1474
        %v1783 = vpack.c.b16 %v1479, %v1475
        %v1784 = vpack.c.b16 %v1484, %v1480
        %v1785 = vpack.c.b16 %v1485, %v1481
        %v1786 = vpack.c.b16 %v1486, %v1482
        %v1787 = vpack.c.b16 %v1487, %v1483
        %v1788 = vpack.c.b16 %v1492, %v1488
        %v1789 = vpack.c.b16 %v1493, %v1489
        %v1790 = vpack.c.b16 %v1494, %v1490
        %v1791 = vpack.c.b16 %v1495, %v1491
        %v1792 = vpack.c.b16 %v1500, %v1496
        %v1793 = vpack.c.b16 %v1501, %v1497
        %v1794 = vpack.c.b16 %v1502, %v1498
        %v1795 = vpack.c.b16 %v1503, %v1499
        %v1796 = vpack.c.b16 %v1508, %v1504
        %v1797 = vpack.c.b16 %v1509, %v1505
        %v1798 = vpack.c.b16 %v1510, %v1506
        %v1799 = vpack.c.b16 %v1511, %v1507
        %v1800 = vpack.c.b16 %v1516, %v1512
        %v1801 = vpack.c.b16 %v1517, %v1513
        %v1802 = vpack.c.b16 %v1518, %v1514
        %v1803 = vpack.c.b16 %v1519, %v1515
        %v1804 = vpack.c.b16 %v1524, %v1520
        %v1805 = vpack.c.b16 %v1525, %v1521
        %v1806 = vpack.c.b16 %v1526, %v1522
        %v1807 = vpack.c.b16 %v1527, %v1523
        %v1808 = vpack.c.b16 %v1532, %v1528
        %v1809 = vpack.c.b16 %v1533, %v1529
        %v1810 = vpack.c.b16 %v1534, %v1530
        %v1811 = vpack.c.b16 %v1535, %v1531
        %v1812 = vpack.c.b16 %v1540, %v1536
        %v1813 = vpack.c.b16 %v1541, %v1537
        %v1814 = vpack.c.b16 %v1542, %v1538
        %v1815 = vpack.c.b16 %v1543, %v1539
        %v1816 = vpack.c.b16 %v1548, %v1544
        %v1817 = vpack.c.b16 %v1549, %v1545
        %v1818 = vpack.c.b16 %v1550, %v1546
        %v1819 = vpack.c.b16 %v1551, %v1547
        %v1820 = vpack.c.b16 %v1556, %v1552
        %v1821 = vpack.c.b16 %v1557, %v1553
        %v1822 = vpack.c.b16 %v1558, %v1554
        %v1823 = vpack.c.b16 %v1559, %v1555
        %v1824 = vpack.c.b16 %v1564, %v1560
        %v1825 = vpack.c.b16 %v1565, %v1561
        %v1826 = vpack.c.b16 %v1566, %v1562
        %v1827 = vpack.c.b16 %v1567, %v1563
        %v1828 = vpack.c.b16 %v1572, %v1568
        %v1829 = vpack.c.b16 %v1573, %v1569
        %v1830 = vpack.c.b16 %v1574, %v1570
        %v1831 = vpack.c.b16 %v1575, %v1571
        %v1832 = vpack.c.b16 %v1580, %v1576
        %v1833 = vpack.c.b16 %v1581, %v1577
        %v1834 = vpack.c.b16 %v1582, %v1578
        %v1835 = vpack.c.b16 %v1583, %v1579
        %v1836 = vpack.c.b16 %v1588, %v1584
        %v1837 = vpack.c.b16 %v1589, %v1585
        %v1838 = vpack.c.b16 %v1590, %v1586
        %v1839 = vpack.c.b16 %v1591, %v1587
        %v1840 = vpack.c.b16 %v1596, %v1592
        %v1841 = vpack.c.b16 %v1597, %v1593
        %v1842 = vpack.c.b16 %v1598, %v1594
        %v1843 = vpack.c.b16 %v1599, %v1595
        %v1844 = vpack.c.b16 %v1604, %v1600
        %v1845 = vpack.c.b16 %v1605, %v1601
        %v1846 = vpack.c.b16 %v1606, %v1602
        %v1847 = vpack.c.b16 %v1607, %v1603
        %v1848 = vpack.c.b16 %v1612, %v1608
        %v1849 = vpack.c.b16 %v1613, %v1609
        %v1850 = vpack.c.b16 %v1614, %v1610
        %v1851 = vpack.c.b16 %v1615, %v1611
        %v1852 = vpack.c.b16 %v1620, %v1616
        %v1853 = vpack.c.b16 %v1621, %v1617
        %v1854 = vpack.c.b16 %v1622, %v1618
        %v1855 = vpack.c.b16 %v1623, %v1619
        %v1856 = vpack.c.b16 %v1628, %v1624
        %v1857 = vpack.c.b16 %v1629, %v1625
        %v1858 = vpack.c.b16 %v1630, %v1626
        %v1859 = vpack.c.b16 %v1631, %v1627
        %v1860 = vpack.c.b16 %v1636, %v1632
        %v1861 = vpack.c.b16 %v1637, %v1633
        %v1862 = vpack.c.b16 %v1638, %v1634
        %v1863 = vpack.c.b16 %v1639, %v1635
        %2088 = vmatprep.subr.bf16.mxu0 %v1641
        %2089 = vmatpush1.bf16.msra.mxu0 %v1640
        %2090 = vmatprep.subr.bf16.mxu0 %v1645
        %2091 = vmatpush1.bf16.msra.mxu0 %v1644
        %2092 = vmatprep.subr.bf16.mxu0 %v1649
        %2093 = vmatpush1.bf16.msra.mxu0 %v1648
        %2094 = vmatprep.subr.bf16.mxu0 %v1653
        %2095 = vmatpush1.bf16.msra.mxu0 %v1652
        %2096 = vmatprep.subr.bf16.mxu0 %v1657
        %2097 = vmatpush1.bf16.msra.mxu0 %v1656
        %2098 = vmatprep.subr.bf16.mxu0 %v1661
        %2099 = vmatpush1.bf16.msra.mxu0 %v1660
        %2100 = vmatprep.subr.bf16.mxu0 %v1665
        %2101 = vmatpush1.bf16.msra.mxu0 %v1664
        %2102 = vmatprep.subr.bf16.mxu0 %v1669
        %2103 = vmatpush1.bf16.msra.mxu0 %v1668
        %2104 = vmatprep.subr.bf16.mxu0 %v1673
        %2105 = vmatpush1.bf16.msra.mxu0 %v1672
        %2106 = vmatprep.subr.bf16.mxu0 %v1677
        %2107 = vmatpush1.bf16.msra.mxu0 %v1676
        %2108 = vmatprep.subr.bf16.mxu0 %v1681
        %2109 = vmatpush1.bf16.msra.mxu0 %v1680
        %2110 = vmatprep.subr.bf16.mxu0 %v1685
        %2111 = vmatpush1.bf16.msra.mxu0 %v1684
        %2112 = vmatprep.subr.bf16.mxu0 %v1689
        %2113 = vmatpush1.bf16.msra.mxu0 %v1688
        %2114 = vmatprep.subr.bf16.mxu0 %v1693
        %2115 = vmatpush1.bf16.msra.mxu0 %v1692
        %2116 = vmatprep.subr.bf16.mxu0 %v1697
        %2117 = vmatpush1.bf16.msra.mxu0 %v1696
        %2118 = vmatprep.subr.bf16.mxu0 %v1701
        %2119 = vmatpush1.bf16.msra.mxu0 %v1700
        %2120 = vmatprep.mubr.bf16.mxu0 %v857
        %2121 = vmatmul.mubr.bf16.gmra.mrb[0].mxu0 %v856
        %v2122 = vpop.f32.mrb[0].mxu0
        %v2123 = vadd.f32 %v663, %v2122
        %v2124 = vpop.f32.mrb[0].mxu0
        %v2125 = vadd.f32 %v667, %v2124
        %v2126 = vpop.f32.mrb[0].mxu0
        %v2127 = vadd.f32 %v663, %v2126
        %v2128 = vpop.f32.mrb[0].mxu0
        %v2129 = vadd.f32 %v667, %v2128
        %2130 = vmatprep.mubr.bf16.mxu0 %v864
        %2131 = vmatmul.mubr.bf16.gmra.mrb[0].mxu0 %v863
        %v2132 = vpop.f32.mrb[0].mxu0
        %v2133 = vadd.f32 %v663, %v2132
        %v2134 = vpop.f32.mrb[0].mxu0
        %v2135 = vadd.f32 %v667, %v2134
        %v2136 = vpop.f32.mrb[0].mxu0
        %v2137 = vadd.f32 %v663, %v2136
        %v2138 = vpop.f32.mrb[0].mxu0
        %v2139 = vadd.f32 %v667, %v2138
        %2140 = vmatprep.mubr.bf16.mxu0 %v871
        %2141 = vmatmul.mubr.bf16.gmra.mrb[0].mxu0 %v870
        %v2142 = vpop.f32.mrb[0].mxu0
        %v2143 = vadd.f32 %v663, %v2142
        %v2144 = vpop.f32.mrb[0].mxu0
        %v2145 = vadd.f32 %v667, %v2144
        %v2146 = vpop.f32.mrb[0].mxu0
        %v2147 = vadd.f32 %v663, %v2146
        %v2148 = vpop.f32.mrb[0].mxu0
        %v2149 = vadd.f32 %v667, %v2148
        %2150 = vmatprep.mubr.bf16.mxu0 %v878
        %2151 = vmatmul.mubr.bf16.gmra.mrb[0].mxu0 %v877
        %v2152 = vpop.f32.mrb[0].mxu0
        %v2153 = vadd.f32 %v663, %v2152
        %v2154 = vpop.f32.mrb[0].mxu0
        %v2155 = vadd.f32 %v667, %v2154
        %v2156 = vpop.f32.mrb[0].mxu0
        %v2157 = vadd.f32 %v663, %v2156
        %v2158 = vpop.f32.mrb[0].mxu0
        %v2159 = vadd.f32 %v667, %v2158
        %2160 = vmatprep.mubr.bf16.mxu0 %v885
        %2161 = vmatmul.mubr.bf16.gmra.mrb[0].mxu0 %v884
        %v2162 = vpop.f32.mrb[0].mxu0
        %v2163 = vadd.f32 %v663, %v2162
        %v2164 = vpop.f32.mrb[0].mxu0
        %v2165 = vadd.f32 %v667, %v2164
        %v2166 = vpop.f32.mrb[0].mxu0
        %v2167 = vadd.f32 %v663, %v2166
        %v2168 = vpop.f32.mrb[0].mxu0
        %v2169 = vadd.f32 %v667, %v2168
        %2170 = vmatprep.mubr.bf16.mxu0 %v892
        %2171 = vmatmul.mubr.bf16.gmra.mrb[0].mxu0 %v891
        %v2172 = vpop.f32.mrb[0].mxu0
        %v2173 = vadd.f32 %v663, %v2172
        %v2174 = vpop.f32.mrb[0].mxu0
        %v2175 = vadd.f32 %v667, %v2174
        %v2176 = vpop.f32.mrb[0].mxu0
        %v2177 = vadd.f32 %v663, %v2176
        %v2178 = vpop.f32.mrb[0].mxu0
        %v2179 = vadd.f32 %v667, %v2178
        %2180 = vmatprep.mubr.bf16.mxu0 %v899
        %2181 = vmatmul.mubr.bf16.gmra.mrb[0].mxu0 %v898
        %v2182 = vpop.f32.mrb[0].mxu0
        %v2183 = vadd.f32 %v663, %v2182
        %v2184 = vpop.f32.mrb[0].mxu0
        %v2185 = vadd.f32 %v667, %v2184
        %v2186 = vpop.f32.mrb[0].mxu0
        %v2187 = vadd.f32 %v663, %v2186
        %v2188 = vpop.f32.mrb[0].mxu0
        %v2189 = vadd.f32 %v667, %v2188
        %2190 = vmatprep.mubr.bf16.mxu0 %v906
        %2191 = vmatmul.mubr.bf16.gmra.mrb[0].mxu0 %v905
        %v2192 = vpop.f32.mrb[0].mxu0
        %v2193 = vadd.f32 %v663, %v2192
        %v2194 = vpop.f32.mrb[0].mxu0
        %v2195 = vadd.f32 %v667, %v2194
        %v2196 = vpop.f32.mrb[0].mxu0
        %v2197 = vadd.f32 %v663, %v2196
        %v2198 = vpop.f32.mrb[0].mxu0
        %v2199 = vadd.f32 %v667, %v2198
        %2200 = vdwg.mxu0
        %2201 = vmatprep.subr.bf16.mxu0 %v1705
        %2202 = vmatpush1.bf16.msra.mxu0 %v1704
        %2203 = vmatprep.subr.bf16.mxu0 %v1709
        %2204 = vmatpush1.bf16.msra.mxu0 %v1708
        %2205 = vmatprep.subr.bf16.mxu0 %v1713
        %2206 = vmatpush1.bf16.msra.mxu0 %v1712
        %2207 = vmatprep.subr.bf16.mxu0 %v1717
        %2208 = vmatpush1.bf16.msra.mxu0 %v1716
        %2209 = vmatprep.subr.bf16.mxu0 %v1721
        %2210 = vmatpush1.bf16.msra.mxu0 %v1720
        %2211 = vmatprep.subr.bf16.mxu0 %v1725
        %2212 = vmatpush1.bf16.msra.mxu0 %v1724
        %2213 = vmatprep.subr.bf16.mxu0 %v1729
        %2214 = vmatpush1.bf16.msra.mxu0 %v1728
        %2215 = vmatprep.subr.bf16.mxu0 %v1733
        %2216 = vmatpush1.bf16.msra.mxu0 %v1732
        %2217 = vmatprep.subr.bf16.mxu0 %v1737
        %2218 = vmatpush1.bf16.msra.mxu0 %v1736
        %2219 = vmatprep.subr.bf16.mxu0 %v1741
        %2220 = vmatpush1.bf16.msra.mxu0 %v1740
        %2221 = vmatprep.subr.bf16.mxu0 %v1745
        %2222 = vmatpush1.bf16.msra.mxu0 %v1744
        %2223 = vmatprep.subr.bf16.mxu0 %v1749
        %2224 = vmatpush1.bf16.msra.mxu0 %v1748
        %2225 = vmatprep.subr.bf16.mxu0 %v1753
        %2226 = vmatpush1.bf16.msra.mxu0 %v1752
        %2227 = vmatprep.subr.bf16.mxu0 %v1757
        %2228 = vmatpush1.bf16.msra.mxu0 %v1756
        %2229 = vmatprep.subr.bf16.mxu0 %v1761
        %2230 = vmatpush1.bf16.msra.mxu0 %v1760
        %2231 = vmatprep.subr.bf16.mxu0 %v1765
        %2232 = vmatpush1.bf16.msra.mxu0 %v1764
        %2233 = vmatprep.mubr.bf16.mxu0 %v859
        %2234 = vmatmul.mubr.bf16.gmra.mrb[0].mxu0 %v858
        %v2235 = vpop.f32.mrb[0].mxu0
        %v2236 = vadd.f32 %v2123, %v2235
        %v2237 = vpop.f32.mrb[0].mxu0
        %v2238 = vadd.f32 %v2125, %v2237
        %v2239 = vpop.f32.mrb[0].mxu0
        %v2240 = vadd.f32 %v2127, %v2239
        %v2241 = vpop.f32.mrb[0].mxu0
        %v2242 = vadd.f32 %v2129, %v2241
        %2243 = vmatprep.mubr.bf16.mxu0 %v866
        %2244 = vmatmul.mubr.bf16.gmra.mrb[0].mxu0 %v865
        %v2245 = vpop.f32.mrb[0].mxu0
        %v2246 = vadd.f32 %v2133, %v2245
        %v2247 = vpop.f32.mrb[0].mxu0
        %v2248 = vadd.f32 %v2135, %v2247
        %v2249 = vpop.f32.mrb[0].mxu0
        %v2250 = vadd.f32 %v2137, %v2249
        %v2251 = vpop.f32.mrb[0].mxu0
        %v2252 = vadd.f32 %v2139, %v2251
        %2253 = vmatprep.mubr.bf16.mxu0 %v873
        %2254 = vmatmul.mubr.bf16.gmra.mrb[0].mxu0 %v872
        %v2255 = vpop.f32.mrb[0].mxu0
        %v2256 = vadd.f32 %v2143, %v2255
        %v2257 = vpop.f32.mrb[0].mxu0
        %v2258 = vadd.f32 %v2145, %v2257
        %v2259 = vpop.f32.mrb[0].mxu0
        %v2260 = vadd.f32 %v2147, %v2259
        %v2261 = vpop.f32.mrb[0].mxu0
        %v2262 = vadd.f32 %v2149, %v2261
        %2263 = vmatprep.mubr.bf16.mxu0 %v880
        %2264 = vmatmul.mubr.bf16.gmra.mrb[0].mxu0 %v879
        %v2265 = vpop.f32.mrb[0].mxu0
        %v2266 = vadd.f32 %v2153, %v2265
        %v2267 = vpop.f32.mrb[0].mxu0
        %v2268 = vadd.f32 %v2155, %v2267
        %v2269 = vpop.f32.mrb[0].mxu0
        %v2270 = vadd.f32 %v2157, %v2269
        %v2271 = vpop.f32.mrb[0].mxu0
        %v2272 = vadd.f32 %v2159, %v2271
        %2273 = vmatprep.mubr.bf16.mxu0 %v887
        %2274 = vmatmul.mubr.bf16.gmra.mrb[0].mxu0 %v886
        %v2275 = vpop.f32.mrb[0].mxu0
        %v2276 = vadd.f32 %v2163, %v2275
        %v2277 = vpop.f32.mrb[0].mxu0
        %v2278 = vadd.f32 %v2165, %v2277
        %v2279 = vpop.f32.mrb[0].mxu0
        %v2280 = vadd.f32 %v2167, %v2279
        %v2281 = vpop.f32.mrb[0].mxu0
        %v2282 = vadd.f32 %v2169, %v2281
        %2283 = vmatprep.mubr.bf16.mxu0 %v894
        %2284 = vmatmul.mubr.bf16.gmra.mrb[0].mxu0 %v893
        %v2285 = vpop.f32.mrb[0].mxu0
        %v2286 = vadd.f32 %v2173, %v2285
        %v2287 = vpop.f32.mrb[0].mxu0
        %v2288 = vadd.f32 %v2175, %v2287
        %v2289 = vpop.f32.mrb[0].mxu0
        %v2290 = vadd.f32 %v2177, %v2289
        %v2291 = vpop.f32.mrb[0].mxu0
        %v2292 = vadd.f32 %v2179, %v2291
        %2293 = vmatprep.mubr.bf16.mxu0 %v901
        %2294 = vmatmul.mubr.bf16.gmra.mrb[0].mxu0 %v900
        %v2295 = vpop.f32.mrb[0].mxu0
        %v2296 = vadd.f32 %v2183, %v2295
        %v2297 = vpop.f32.mrb[0].mxu0
        %v2298 = vadd.f32 %v2185, %v2297
        %v2299 = vpop.f32.mrb[0].mxu0
        %v2300 = vadd.f32 %v2187, %v2299
        %v2301 = vpop.f32.mrb[0].mxu0
        %v2302 = vadd.f32 %v2189, %v2301
        %2303 = vmatprep.mubr.bf16.mxu0 %v908
        %2304 = vmatmul.mubr.bf16.gmra.mrb[0].mxu0 %v907
        %v2305 = vpop.f32.mrb[0].mxu0
        %v2306 = vadd.f32 %v2193, %v2305
        %v2307 = vpop.f32.mrb[0].mxu0
        %v2308 = vadd.f32 %v2195, %v2307
        %v2309 = vpop.f32.mrb[0].mxu0
        %v2310 = vadd.f32 %v2197, %v2309
        %v2311 = vpop.f32.mrb[0].mxu0
        %v2312 = vadd.f32 %v2199, %v2311
        %2313 = vdwg.mxu0
        %2314 = vmatprep.subr.bf16.mxu0 %v1769
        %2315 = vmatpush1.bf16.msra.mxu0 %v1768
        %2316 = vmatprep.subr.bf16.mxu0 %v1773
        %2317 = vmatpush1.bf16.msra.mxu0 %v1772
        %2318 = vmatprep.subr.bf16.mxu0 %v1777
        %2319 = vmatpush1.bf16.msra.mxu0 %v1776
        %2320 = vmatprep.subr.bf16.mxu0 %v1781
        %2321 = vmatpush1.bf16.msra.mxu0 %v1780
        %2322 = vmatprep.subr.bf16.mxu0 %v1785
        %2323 = vmatpush1.bf16.msra.mxu0 %v1784
        %2324 = vmatprep.subr.bf16.mxu0 %v1789
        %2325 = vmatpush1.bf16.msra.mxu0 %v1788
        %2326 = vmatprep.subr.bf16.mxu0 %v1793
        %2327 = vmatpush1.bf16.msra.mxu0 %v1792
        %2328 = vmatprep.subr.bf16.mxu0 %v1797
        %2329 = vmatpush1.bf16.msra.mxu0 %v1796
        %2330 = vmatprep.subr.bf16.mxu0 %v1801
        %2331 = vmatpush1.bf16.msra.mxu0 %v1800
        %2332 = vmatprep.subr.bf16.mxu0 %v1805
        %2333 = vmatpush1.bf16.msra.mxu0 %v1804
        %2334 = vmatprep.subr.bf16.mxu0 %v1809
        %2335 = vmatpush1.bf16.msra.mxu0 %v1808
        %2336 = vmatprep.subr.bf16.mxu0 %v1813
        %2337 = vmatpush1.bf16.msra.mxu0 %v1812
        %2338 = vmatprep.subr.bf16.mxu0 %v1817
        %2339 = vmatpush1.bf16.msra.mxu0 %v1816
        %2340 = vmatprep.subr.bf16.mxu0 %v1821
        %2341 = vmatpush1.bf16.msra.mxu0 %v1820
        %2342 = vmatprep.subr.bf16.mxu0 %v1825
        %2343 = vmatpush1.bf16.msra.mxu0 %v1824
        %2344 = vmatprep.subr.bf16.mxu0 %v1829
        %2345 = vmatpush1.bf16.msra.mxu0 %v1828
        %2346 = vmatprep.mubr.bf16.mxu0 %v861
        %2347 = vmatmul.mubr.bf16.gmra.mrb[0].mxu0 %v860
        %v2348 = vpop.f32.mrb[0].mxu0
        %v2349 = vadd.f32 %v2236, %v2348
        %v2350 = vpop.f32.mrb[0].mxu0
        %v2351 = vadd.f32 %v2238, %v2350
        %v2352 = vpop.f32.mrb[0].mxu0
        %v2353 = vadd.f32 %v2240, %v2352
        %v2354 = vpop.f32.mrb[0].mxu0
        %v2355 = vadd.f32 %v2242, %v2354
        %2356 = vmatprep.mubr.bf16.mxu0 %v868
        %2357 = vmatmul.mubr.bf16.gmra.mrb[0].mxu0 %v867
        %v2358 = vpop.f32.mrb[0].mxu0
        %v2359 = vadd.f32 %v2246, %v2358
        %v2360 = vpop.f32.mrb[0].mxu0
        %v2361 = vadd.f32 %v2248, %v2360
        %v2362 = vpop.f32.mrb[0].mxu0
        %v2363 = vadd.f32 %v2250, %v2362
        %v2364 = vpop.f32.mrb[0].mxu0
        %v2365 = vadd.f32 %v2252, %v2364
        %2366 = vmatprep.mubr.bf16.mxu0 %v875
        %2367 = vmatmul.mubr.bf16.gmra.mrb[0].mxu0 %v874
        %v2368 = vpop.f32.mrb[0].mxu0
        %v2369 = vadd.f32 %v2256, %v2368
        %v2370 = vpop.f32.mrb[0].mxu0
        %v2371 = vadd.f32 %v2258, %v2370
        %v2372 = vpop.f32.mrb[0].mxu0
        %v2373 = vadd.f32 %v2260, %v2372
        %v2374 = vpop.f32.mrb[0].mxu0
        %v2375 = vadd.f32 %v2262, %v2374
        %2376 = vmatprep.mubr.bf16.mxu0 %v882
        %2377 = vmatmul.mubr.bf16.gmra.mrb[0].mxu0 %v881
        %v2378 = vpop.f32.mrb[0].mxu0
        %v2379 = vadd.f32 %v2266, %v2378
        %v2380 = vpop.f32.mrb[0].mxu0
        %v2381 = vadd.f32 %v2268, %v2380
        %v2382 = vpop.f32.mrb[0].mxu0
        %v2383 = vadd.f32 %v2270, %v2382
        %v2384 = vpop.f32.mrb[0].mxu0
        %v2385 = vadd.f32 %v2272, %v2384
        %2386 = vmatprep.mubr.bf16.mxu0 %v889
        %2387 = vmatmul.mubr.bf16.gmra.mrb[0].mxu0 %v888
        %v2388 = vpop.f32.mrb[0].mxu0
        %v2389 = vadd.f32 %v2276, %v2388
        %v2390 = vpop.f32.mrb[0].mxu0
        %v2391 = vadd.f32 %v2278, %v2390
        %v2392 = vpop.f32.mrb[0].mxu0
        %v2393 = vadd.f32 %v2280, %v2392
        %v2394 = vpop.f32.mrb[0].mxu0
        %v2395 = vadd.f32 %v2282, %v2394
        %2396 = vmatprep.mubr.bf16.mxu0 %v896
        %2397 = vmatmul.mubr.bf16.gmra.mrb[0].mxu0 %v895
        %v2398 = vpop.f32.mrb[0].mxu0
        %v2399 = vadd.f32 %v2286, %v2398
        %v2400 = vpop.f32.mrb[0].mxu0
        %v2401 = vadd.f32 %v2288, %v2400
        %v2402 = vpop.f32.mrb[0].mxu0
        %v2403 = vadd.f32 %v2290, %v2402
        %v2404 = vpop.f32.mrb[0].mxu0
        %v2405 = vadd.f32 %v2292, %v2404
        %2406 = vmatprep.mubr.bf16.mxu0 %v903
        %2407 = vmatmul.mubr.bf16.gmra.mrb[0].mxu0 %v902
        %v2408 = vpop.f32.mrb[0].mxu0
        %v2409 = vadd.f32 %v2296, %v2408
        %v2410 = vpop.f32.mrb[0].mxu0
        %v2411 = vadd.f32 %v2298, %v2410
        %v2412 = vpop.f32.mrb[0].mxu0
        %v2413 = vadd.f32 %v2300, %v2412
        %v2414 = vpop.f32.mrb[0].mxu0
        %v2415 = vadd.f32 %v2302, %v2414
        %2416 = vmatprep.mubr.bf16.mxu0 %v910
        %2417 = vmatmul.mubr.bf16.gmra.mrb[0].mxu0 %v909
        %v2418 = vpop.f32.mrb[0].mxu0
        %v2419 = vadd.f32 %v2306, %v2418
        %v2420 = vpop.f32.mrb[0].mxu0
        %v2421 = vadd.f32 %v2308, %v2420
        %v2422 = vpop.f32.mrb[0].mxu0
        %v2423 = vadd.f32 %v2310, %v2422
        %v2424 = vpop.f32.mrb[0].mxu0
        %v2425 = vadd.f32 %v2312, %v2424
        %2426 = vdwg.mxu0
        %2427 = vmatprep.subr.bf16.mxu0 %v1833
        %2428 = vmatpush1.bf16.msra.mxu0 %v1832
        %2429 = vmatprep.subr.bf16.mxu0 %v1837
        %2430 = vmatpush1.bf16.msra.mxu0 %v1836
        %2431 = vmatprep.subr.bf16.mxu0 %v1841
        %2432 = vmatpush1.bf16.msra.mxu0 %v1840
        %2433 = vmatprep.subr.bf16.mxu0 %v1845
        %2434 = vmatpush1.bf16.msra.mxu0 %v1844
        %2435 = vmatprep.subr.bf16.mxu0 %v1849
        %2436 = vmatpush1.bf16.msra.mxu0 %v1848
        %2437 = vmatprep.subr.bf16.mxu0 %v1853
        %2438 = vmatpush1.bf16.msra.mxu0 %v1852
        %2439 = vmatprep.subr.bf16.mxu0 %v1857
        %2440 = vmatpush1.bf16.msra.mxu0 %v1856
        %2441 = vmatprep.subr.bf16.mxu0 %v1861
        %2442 = vmatpush1.bf16.msra.mxu0 %v1860
        %2443 = vmatprep.subr.bf16.mxu0 0
        %2444 = vmatpush1.bf16.msra.mxu0 0
        %2445 = vmatprep.subr.bf16.mxu0 0
        %2446 = vmatpush1.bf16.msra.mxu0 0
        %2447 = vmatprep.subr.bf16.mxu0 0
        %2448 = vmatpush1.bf16.msra.mxu0 0
        %2449 = vmatprep.subr.bf16.mxu0 0
        %2450 = vmatpush1.bf16.msra.mxu0 0
        %2451 = vmatprep.subr.bf16.mxu0 0
        %2452 = vmatpush1.bf16.msra.mxu0 0
        %2453 = vmatprep.subr.bf16.mxu0 0
        %2454 = vmatpush1.bf16.msra.mxu0 0
        %2455 = vmatprep.subr.bf16.mxu0 0
        %2456 = vmatpush1.bf16.msra.mxu0 0
        %2457 = vmatprep.subr.bf16.mxu0 0
        %2458 = vmatpush1.bf16.msra.mxu0 0
        %2459 = vmatprep.mubr.bf16.mxu0 0
        %2460 = vmatmul.mubr.bf16.gmra.mrb[0].mxu0 %v862
        %v2461 = vpop.f32.mrb[0].mxu0
        %v2462 = vadd.f32 %v2349, %v2461
        %v2463 = vpop.f32.mrb[0].mxu0
        %v2464 = vadd.f32 %v2351, %v2463
        %v2465 = vpop.f32.mrb[0].mxu0
        %v2466 = vadd.f32 %v2353, %v2465
        %v2467 = vpop.f32.mrb[0].mxu0
        %v2468 = vadd.f32 %v2355, %v2467
        %2469 = vmatprep.mubr.bf16.mxu0 0
        %2470 = vmatmul.mubr.bf16.gmra.mrb[0].mxu0 %v869
        %v2471 = vpop.f32.mrb[0].mxu0
        %v2472 = vadd.f32 %v2359, %v2471
        %v2473 = vpop.f32.mrb[0].mxu0
        %v2474 = vadd.f32 %v2361, %v2473
        %v2475 = vpop.f32.mrb[0].mxu0
        %v2476 = vadd.f32 %v2363, %v2475
        %v2477 = vpop.f32.mrb[0].mxu0
        %v2478 = vadd.f32 %v2365, %v2477
        %2479 = vmatprep.mubr.bf16.mxu0 0
        %2480 = vmatmul.mubr.bf16.gmra.mrb[0].mxu0 %v876
        %v2481 = vpop.f32.mrb[0].mxu0
        %v2482 = vadd.f32 %v2369, %v2481
        %v2483 = vpop.f32.mrb[0].mxu0
        %v2484 = vadd.f32 %v2371, %v2483
        %v2485 = vpop.f32.mrb[0].mxu0
        %v2486 = vadd.f32 %v2373, %v2485
        %v2487 = vpop.f32.mrb[0].mxu0
        %v2488 = vadd.f32 %v2375, %v2487
        %2489 = vmatprep.mubr.bf16.mxu0 0
        %2490 = vmatmul.mubr.bf16.gmra.mrb[0].mxu0 %v883
        %v2491 = vpop.f32.mrb[0].mxu0
        %v2492 = vadd.f32 %v2379, %v2491
        %v2493 = vpop.f32.mrb[0].mxu0
        %v2494 = vadd.f32 %v2381, %v2493
        %v2495 = vpop.f32.mrb[0].mxu0
        %v2496 = vadd.f32 %v2383, %v2495
        %v2497 = vpop.f32.mrb[0].mxu0
        %v2498 = vadd.f32 %v2385, %v2497
        %2499 = vmatprep.mubr.bf16.mxu0 0
        %2500 = vmatmul.mubr.bf16.gmra.mrb[0].mxu0 %v890
        %v2501 = vpop.f32.mrb[0].mxu0
        %v2502 = vadd.f32 %v2389, %v2501
        %v2503 = vpop.f32.mrb[0].mxu0
        %v2504 = vadd.f32 %v2391, %v2503
        %v2505 = vpop.f32.mrb[0].mxu0
        %v2506 = vadd.f32 %v2393, %v2505
        %v2507 = vpop.f32.mrb[0].mxu0
        %v2508 = vadd.f32 %v2395, %v2507
        %2509 = vmatprep.mubr.bf16.mxu0 0
        %2510 = vmatmul.mubr.bf16.gmra.mrb[0].mxu0 %v897
        %v2511 = vpop.f32.mrb[0].mxu0
        %v2512 = vadd.f32 %v2399, %v2511
        %v2513 = vpop.f32.mrb[0].mxu0
        %v2514 = vadd.f32 %v2401, %v2513
        %v2515 = vpop.f32.mrb[0].mxu0
        %v2516 = vadd.f32 %v2403, %v2515
        %v2517 = vpop.f32.mrb[0].mxu0
        %v2518 = vadd.f32 %v2405, %v2517
        %2519 = vmatprep.mubr.bf16.mxu0 0
        %2520 = vmatmul.mubr.bf16.gmra.mrb[0].mxu0 %v904
        %v2521 = vpop.f32.mrb[0].mxu0
        %v2522 = vadd.f32 %v2409, %v2521
        %v2523 = vpop.f32.mrb[0].mxu0
        %v2524 = vadd.f32 %v2411, %v2523
        %v2525 = vpop.f32.mrb[0].mxu0
        %v2526 = vadd.f32 %v2413, %v2525
        %v2527 = vpop.f32.mrb[0].mxu0
        %v2528 = vadd.f32 %v2415, %v2527
        %2529 = vmatprep.mubr.bf16.mxu0 0
        %2530 = vmatmul.mubr.bf16.gmra.mrb[0].mxu0 %v911
        %v2531 = vpop.f32.mrb[0].mxu0
        %v2532 = vadd.f32 %v2419, %v2531
        %v2533 = vpop.f32.mrb[0].mxu0
        %v2534 = vadd.f32 %v2421, %v2533
        %v2535 = vpop.f32.mrb[0].mxu0
        %v2536 = vadd.f32 %v2423, %v2535
        %v2537 = vpop.f32.mrb[0].mxu0
        %v2538 = vadd.f32 %v2425, %v2537
        %2539 = vdwg.mxu0
        %2540 = vmatprep.subr.bf16.mxu0 %v1643
        %2541 = vmatpush1.bf16.msra.mxu0 %v1642
        %2542 = vmatprep.subr.bf16.mxu0 %v1647
        %2543 = vmatpush1.bf16.msra.mxu0 %v1646
        %2544 = vmatprep.subr.bf16.mxu0 %v1651
        %2545 = vmatpush1.bf16.msra.mxu0 %v1650
        %2546 = vmatprep.subr.bf16.mxu0 %v1655
        %2547 = vmatpush1.bf16.msra.mxu0 %v1654
        %2548 = vmatprep.subr.bf16.mxu0 %v1659
        %2549 = vmatpush1.bf16.msra.mxu0 %v1658
        %2550 = vmatprep.subr.bf16.mxu0 %v1663
        %2551 = vmatpush1.bf16.msra.mxu0 %v1662
        %2552 = vmatprep.subr.bf16.mxu0 %v1667
        %2553 = vmatpush1.bf16.msra.mxu0 %v1666
        %2554 = vmatprep.subr.bf16.mxu0 %v1671
        %2555 = vmatpush1.bf16.msra.mxu0 %v1670
        %2556 = vmatprep.subr.bf16.mxu0 %v1675
        %2557 = vmatpush1.bf16.msra.mxu0 %v1674
        %2558 = vmatprep.subr.bf16.mxu0 %v1679
        %2559 = vmatpush1.bf16.msra.mxu0 %v1678
        %2560 = vmatprep.subr.bf16.mxu0 %v1683
        %2561 = vmatpush1.bf16.msra.mxu0 %v1682
        %2562 = vmatprep.subr.bf16.mxu0 %v1687
        %2563 = vmatpush1.bf16.msra.mxu0 %v1686
        %2564 = vmatprep.subr.bf16.mxu0 %v1691
        %2565 = vmatpush1.bf16.msra.mxu0 %v1690
        %2566 = vmatprep.subr.bf16.mxu0 %v1695
        %2567 = vmatpush1.bf16.msra.mxu0 %v1694
        %2568 = vmatprep.subr.bf16.mxu0 %v1699
        %2569 = vmatpush1.bf16.msra.mxu0 %v1698
        %2570 = vmatprep.subr.bf16.mxu0 %v1703
        %2571 = vmatpush1.bf16.msra.mxu0 %v1702
        %2572 = vmatprep.mubr.bf16.mxu0 %v857
        %2573 = vmatmul.mubr.bf16.gmra.mrb[0].mxu0 %v856
        %v2574 = vpop.f32.mrb[0].mxu0
        %v2575 = vadd.f32 %v671, %v2574
        %v2576 = vpop.f32.mrb[0].mxu0
        %v2577 = vadd.f32 %v675, %v2576
        %v2578 = vpop.f32.mrb[0].mxu0
        %v2579 = vadd.f32 %v671, %v2578
        %v2580 = vpop.f32.mrb[0].mxu0
        %v2581 = vadd.f32 %v675, %v2580
        %2582 = vmatprep.mubr.bf16.mxu0 %v864
        %2583 = vmatmul.mubr.bf16.gmra.mrb[0].mxu0 %v863
        %v2584 = vpop.f32.mrb[0].mxu0
        %v2585 = vadd.f32 %v671, %v2584
        %v2586 = vpop.f32.mrb[0].mxu0
        %v2587 = vadd.f32 %v675, %v2586
        %v2588 = vpop.f32.mrb[0].mxu0
        %v2589 = vadd.f32 %v671, %v2588
        %v2590 = vpop.f32.mrb[0].mxu0
        %v2591 = vadd.f32 %v675, %v2590
        %2592 = vmatprep.mubr.bf16.mxu0 %v871
        %2593 = vmatmul.mubr.bf16.gmra.mrb[0].mxu0 %v870
        %v2594 = vpop.f32.mrb[0].mxu0
        %v2595 = vadd.f32 %v671, %v2594
        %v2596 = vpop.f32.mrb[0].mxu0
        %v2597 = vadd.f32 %v675, %v2596
        %v2598 = vpop.f32.mrb[0].mxu0
        %v2599 = vadd.f32 %v671, %v2598
        %v2600 = vpop.f32.mrb[0].mxu0
        %v2601 = vadd.f32 %v675, %v2600
        %2602 = vmatprep.mubr.bf16.mxu0 %v878
        %2603 = vmatmul.mubr.bf16.gmra.mrb[0].mxu0 %v877
        %v2604 = vpop.f32.mrb[0].mxu0
        %v2605 = vadd.f32 %v671, %v2604
        %v2606 = vpop.f32.mrb[0].mxu0
        %v2607 = vadd.f32 %v675, %v2606
        %v2608 = vpop.f32.mrb[0].mxu0
        %v2609 = vadd.f32 %v671, %v2608
        %v2610 = vpop.f32.mrb[0].mxu0
        %v2611 = vadd.f32 %v675, %v2610
        %2612 = vmatprep.mubr.bf16.mxu0 %v885
        %2613 = vmatmul.mubr.bf16.gmra.mrb[0].mxu0 %v884
        %v2614 = vpop.f32.mrb[0].mxu0
        %v2615 = vadd.f32 %v671, %v2614
        %v2616 = vpop.f32.mrb[0].mxu0
        %v2617 = vadd.f32 %v675, %v2616
        %v2618 = vpop.f32.mrb[0].mxu0
        %v2619 = vadd.f32 %v671, %v2618
        %v2620 = vpop.f32.mrb[0].mxu0
        %v2621 = vadd.f32 %v675, %v2620
        %2622 = vmatprep.mubr.bf16.mxu0 %v892
        %2623 = vmatmul.mubr.bf16.gmra.mrb[0].mxu0 %v891
        %v2624 = vpop.f32.mrb[0].mxu0
        %v2625 = vadd.f32 %v671, %v2624
        %v2626 = vpop.f32.mrb[0].mxu0
        %v2627 = vadd.f32 %v675, %v2626
        %v2628 = vpop.f32.mrb[0].mxu0
        %v2629 = vadd.f32 %v671, %v2628
        %v2630 = vpop.f32.mrb[0].mxu0
        %v2631 = vadd.f32 %v675, %v2630
        %2632 = vmatprep.mubr.bf16.mxu0 %v899
        %2633 = vmatmul.mubr.bf16.gmra.mrb[0].mxu0 %v898
        %v2634 = vpop.f32.mrb[0].mxu0
        %v2635 = vadd.f32 %v671, %v2634
        %v2636 = vpop.f32.mrb[0].mxu0
        %v2637 = vadd.f32 %v675, %v2636
        %v2638 = vpop.f32.mrb[0].mxu0
        %v2639 = vadd.f32 %v671, %v2638
        %v2640 = vpop.f32.mrb[0].mxu0
        %v2641 = vadd.f32 %v675, %v2640
        %2642 = vmatprep.mubr.bf16.mxu0 %v906
        %2643 = vmatmul.mubr.bf16.gmra.mrb[0].mxu0 %v905
        %v2644 = vpop.f32.mrb[0].mxu0
        %v2645 = vadd.f32 %v671, %v2644
        %v2646 = vpop.f32.mrb[0].mxu0
        %v2647 = vadd.f32 %v675, %v2646
        %v2648 = vpop.f32.mrb[0].mxu0
        %v2649 = vadd.f32 %v671, %v2648
        %v2650 = vpop.f32.mrb[0].mxu0
        %v2651 = vadd.f32 %v675, %v2650
        %2652 = vdwg.mxu0
        %2653 = vmatprep.subr.bf16.mxu0 %v1707
        %2654 = vmatpush1.bf16.msra.mxu0 %v1706
        %2655 = vmatprep.subr.bf16.mxu0 %v1711
        %2656 = vmatpush1.bf16.msra.mxu0 %v1710
        %2657 = vmatprep.subr.bf16.mxu0 %v1715
        %2658 = vmatpush1.bf16.msra.mxu0 %v1714
        %2659 = vmatprep.subr.bf16.mxu0 %v1719
        %2660 = vmatpush1.bf16.msra.mxu0 %v1718
        %2661 = vmatprep.subr.bf16.mxu0 %v1723
        %2662 = vmatpush1.bf16.msra.mxu0 %v1722
        %2663 = vmatprep.subr.bf16.mxu0 %v1727
        %2664 = vmatpush1.bf16.msra.mxu0 %v1726
        %2665 = vmatprep.subr.bf16.mxu0 %v1731
        %2666 = vmatpush1.bf16.msra.mxu0 %v1730
        %2667 = vmatprep.subr.bf16.mxu0 %v1735
        %2668 = vmatpush1.bf16.msra.mxu0 %v1734
        %2669 = vmatprep.subr.bf16.mxu0 %v1739
        %2670 = vmatpush1.bf16.msra.mxu0 %v1738
        %2671 = vmatprep.subr.bf16.mxu0 %v1743
        %2672 = vmatpush1.bf16.msra.mxu0 %v1742
        %2673 = vmatprep.subr.bf16.mxu0 %v1747
        %2674 = vmatpush1.bf16.msra.mxu0 %v1746
        %2675 = vmatprep.subr.bf16.mxu0 %v1751
        %2676 = vmatpush1.bf16.msra.mxu0 %v1750
        %2677 = vmatprep.subr.bf16.mxu0 %v1755
        %2678 = vmatpush1.bf16.msra.mxu0 %v1754
        %2679 = vmatprep.subr.bf16.mxu0 %v1759
        %2680 = vmatpush1.bf16.msra.mxu0 %v1758
        %2681 = vmatprep.subr.bf16.mxu0 %v1763
        %2682 = vmatpush1.bf16.msra.mxu0 %v1762
        %2683 = vmatprep.subr.bf16.mxu0 %v1767
        %2684 = vmatpush1.bf16.msra.mxu0 %v1766
        %2685 = vmatprep.mubr.bf16.mxu0 %v859
        %2686 = vmatmul.mubr.bf16.gmra.mrb[0].mxu0 %v858
        %v2687 = vpop.f32.mrb[0].mxu0
        %v2688 = vadd.f32 %v2575, %v2687
        %v2689 = vpop.f32.mrb[0].mxu0
        %v2690 = vadd.f32 %v2577, %v2689
        %v2691 = vpop.f32.mrb[0].mxu0
        %v2692 = vadd.f32 %v2579, %v2691
        %v2693 = vpop.f32.mrb[0].mxu0
        %v2694 = vadd.f32 %v2581, %v2693
        %2695 = vmatprep.mubr.bf16.mxu0 %v866
        %2696 = vmatmul.mubr.bf16.gmra.mrb[0].mxu0 %v865
        %v2697 = vpop.f32.mrb[0].mxu0
        %v2698 = vadd.f32 %v2585, %v2697
        %v2699 = vpop.f32.mrb[0].mxu0
        %v2700 = vadd.f32 %v2587, %v2699
        %v2701 = vpop.f32.mrb[0].mxu0
        %v2702 = vadd.f32 %v2589, %v2701
        %v2703 = vpop.f32.mrb[0].mxu0
        %v2704 = vadd.f32 %v2591, %v2703
        %2705 = vmatprep.mubr.bf16.mxu0 %v873
        %2706 = vmatmul.mubr.bf16.gmra.mrb[0].mxu0 %v872
        %v2707 = vpop.f32.mrb[0].mxu0
        %v2708 = vadd.f32 %v2595, %v2707
        %v2709 = vpop.f32.mrb[0].mxu0
        %v2710 = vadd.f32 %v2597, %v2709
        %v2711 = vpop.f32.mrb[0].mxu0
        %v2712 = vadd.f32 %v2599, %v2711
        %v2713 = vpop.f32.mrb[0].mxu0
        %v2714 = vadd.f32 %v2601, %v2713
        %2715 = vmatprep.mubr.bf16.mxu0 %v880
        %2716 = vmatmul.mubr.bf16.gmra.mrb[0].mxu0 %v879
        %v2717 = vpop.f32.mrb[0].mxu0
        %v2718 = vadd.f32 %v2605, %v2717
        %v2719 = vpop.f32.mrb[0].mxu0
        %v2720 = vadd.f32 %v2607, %v2719
        %v2721 = vpop.f32.mrb[0].mxu0
        %v2722 = vadd.f32 %v2609, %v2721
        %v2723 = vpop.f32.mrb[0].mxu0
        %v2724 = vadd.f32 %v2611, %v2723
        %2725 = vmatprep.mubr.bf16.mxu0 %v887
        %2726 = vmatmul.mubr.bf16.gmra.mrb[0].mxu0 %v886
        %v2727 = vpop.f32.mrb[0].mxu0
        %v2728 = vadd.f32 %v2615, %v2727
        %v2729 = vpop.f32.mrb[0].mxu0
        %v2730 = vadd.f32 %v2617, %v2729
        %v2731 = vpop.f32.mrb[0].mxu0
        %v2732 = vadd.f32 %v2619, %v2731
        %v2733 = vpop.f32.mrb[0].mxu0
        %v2734 = vadd.f32 %v2621, %v2733
        %2735 = vmatprep.mubr.bf16.mxu0 %v894
        %2736 = vmatmul.mubr.bf16.gmra.mrb[0].mxu0 %v893
        %v2737 = vpop.f32.mrb[0].mxu0
        %v2738 = vadd.f32 %v2625, %v2737
        %v2739 = vpop.f32.mrb[0].mxu0
        %v2740 = vadd.f32 %v2627, %v2739
        %v2741 = vpop.f32.mrb[0].mxu0
        %v2742 = vadd.f32 %v2629, %v2741
        %v2743 = vpop.f32.mrb[0].mxu0
        %v2744 = vadd.f32 %v2631, %v2743
        %2745 = vmatprep.mubr.bf16.mxu0 %v901
        %2746 = vmatmul.mubr.bf16.gmra.mrb[0].mxu0 %v900
        %v2747 = vpop.f32.mrb[0].mxu0
        %v2748 = vadd.f32 %v2635, %v2747
        %v2749 = vpop.f32.mrb[0].mxu0
        %v2750 = vadd.f32 %v2637, %v2749
        %v2751 = vpop.f32.mrb[0].mxu0
        %v2752 = vadd.f32 %v2639, %v2751
        %v2753 = vpop.f32.mrb[0].mxu0
        %v2754 = vadd.f32 %v2641, %v2753
        %2755 = vmatprep.mubr.bf16.mxu0 %v908
        %2756 = vmatmul.mubr.bf16.gmra.mrb[0].mxu0 %v907
        %v2757 = vpop.f32.mrb[0].mxu0
        %v2758 = vadd.f32 %v2645, %v2757
        %v2759 = vpop.f32.mrb[0].mxu0
        %v2760 = vadd.f32 %v2647, %v2759
        %v2761 = vpop.f32.mrb[0].mxu0
        %v2762 = vadd.f32 %v2649, %v2761
        %v2763 = vpop.f32.mrb[0].mxu0
        %v2764 = vadd.f32 %v2651, %v2763
        %2765 = vdwg.mxu0
        %2766 = vmatprep.subr.bf16.mxu0 %v1771
        %2767 = vmatpush1.bf16.msra.mxu0 %v1770
        %2768 = vmatprep.subr.bf16.mxu0 %v1775
        %2769 = vmatpush1.bf16.msra.mxu0 %v1774
        %2770 = vmatprep.subr.bf16.mxu0 %v1779
        %2771 = vmatpush1.bf16.msra.mxu0 %v1778
        %2772 = vmatprep.subr.bf16.mxu0 %v1783
        %2773 = vmatpush1.bf16.msra.mxu0 %v1782
        %2774 = vmatprep.subr.bf16.mxu0 %v1787
        %2775 = vmatpush1.bf16.msra.mxu0 %v1786
        %2776 = vmatprep.subr.bf16.mxu0 %v1791
        %2777 = vmatpush1.bf16.msra.mxu0 %v1790
        %2778 = vmatprep.subr.bf16.mxu0 %v1795
        %2779 = vmatpush1.bf16.msra.mxu0 %v1794
        %2780 = vmatprep.subr.bf16.mxu0 %v1799
        %2781 = vmatpush1.bf16.msra.mxu0 %v1798
        %2782 = vmatprep.subr.bf16.mxu0 %v1803
        %2783 = vmatpush1.bf16.msra.mxu0 %v1802
        %2784 = vmatprep.subr.bf16.mxu0 %v1807
        %2785 = vmatpush1.bf16.msra.mxu0 %v1806
        %2786 = vmatprep.subr.bf16.mxu0 %v1811
        %2787 = vmatpush1.bf16.msra.mxu0 %v1810
        %2788 = vmatprep.subr.bf16.mxu0 %v1815
        %2789 = vmatpush1.bf16.msra.mxu0 %v1814
        %2790 = vmatprep.subr.bf16.mxu0 %v1819
        %2791 = vmatpush1.bf16.msra.mxu0 %v1818
        %2792 = vmatprep.subr.bf16.mxu0 %v1823
        %2793 = vmatpush1.bf16.msra.mxu0 %v1822
        %2794 = vmatprep.subr.bf16.mxu0 %v1827
        %2795 = vmatpush1.bf16.msra.mxu0 %v1826
        %2796 = vmatprep.subr.bf16.mxu0 %v1831
        %2797 = vmatpush1.bf16.msra.mxu0 %v1830
        %2798 = vmatprep.mubr.bf16.mxu0 %v861
        %2799 = vmatmul.mubr.bf16.gmra.mrb[0].mxu0 %v860
        %v2800 = vpop.f32.mrb[0].mxu0
        %v2801 = vadd.f32 %v2688, %v2800
        %v2802 = vpop.f32.mrb[0].mxu0
        %v2803 = vadd.f32 %v2690, %v2802
        %v2804 = vpop.f32.mrb[0].mxu0
        %v2805 = vadd.f32 %v2692, %v2804
        %v2806 = vpop.f32.mrb[0].mxu0
        %v2807 = vadd.f32 %v2694, %v2806
        %2808 = vmatprep.mubr.bf16.mxu0 %v868
        %2809 = vmatmul.mubr.bf16.gmra.mrb[0].mxu0 %v867
        %v2810 = vpop.f32.mrb[0].mxu0
        %v2811 = vadd.f32 %v2698, %v2810
        %v2812 = vpop.f32.mrb[0].mxu0
        %v2813 = vadd.f32 %v2700, %v2812
        %v2814 = vpop.f32.mrb[0].mxu0
        %v2815 = vadd.f32 %v2702, %v2814
        %v2816 = vpop.f32.mrb[0].mxu0
        %v2817 = vadd.f32 %v2704, %v2816
        %2818 = vmatprep.mubr.bf16.mxu0 %v875
        %2819 = vmatmul.mubr.bf16.gmra.mrb[0].mxu0 %v874
        %v2820 = vpop.f32.mrb[0].mxu0
        %v2821 = vadd.f32 %v2708, %v2820
        %v2822 = vpop.f32.mrb[0].mxu0
        %v2823 = vadd.f32 %v2710, %v2822
        %v2824 = vpop.f32.mrb[0].mxu0
        %v2825 = vadd.f32 %v2712, %v2824
        %v2826 = vpop.f32.mrb[0].mxu0
        %v2827 = vadd.f32 %v2714, %v2826
        %2828 = vmatprep.mubr.bf16.mxu0 %v882
        %2829 = vmatmul.mubr.bf16.gmra.mrb[0].mxu0 %v881
        %v2830 = vpop.f32.mrb[0].mxu0
        %v2831 = vadd.f32 %v2718, %v2830
        %v2832 = vpop.f32.mrb[0].mxu0
        %v2833 = vadd.f32 %v2720, %v2832
        %v2834 = vpop.f32.mrb[0].mxu0
        %v2835 = vadd.f32 %v2722, %v2834
        %v2836 = vpop.f32.mrb[0].mxu0
        %v2837 = vadd.f32 %v2724, %v2836
        %2838 = vmatprep.mubr.bf16.mxu0 %v889
        %2839 = vmatmul.mubr.bf16.gmra.mrb[0].mxu0 %v888
        %v2840 = vpop.f32.mrb[0].mxu0
        %v2841 = vadd.f32 %v2728, %v2840
        %v2842 = vpop.f32.mrb[0].mxu0
        %v2843 = vadd.f32 %v2730, %v2842
        %v2844 = vpop.f32.mrb[0].mxu0
        %v2845 = vadd.f32 %v2732, %v2844
        %v2846 = vpop.f32.mrb[0].mxu0
        %v2847 = vadd.f32 %v2734, %v2846
        %2848 = vmatprep.mubr.bf16.mxu0 %v896
        %2849 = vmatmul.mubr.bf16.gmra.mrb[0].mxu0 %v895
        %v2850 = vpop.f32.mrb[0].mxu0
        %v2851 = vadd.f32 %v2738, %v2850
        %v2852 = vpop.f32.mrb[0].mxu0
        %v2853 = vadd.f32 %v2740, %v2852
        %v2854 = vpop.f32.mrb[0].mxu0
        %v2855 = vadd.f32 %v2742, %v2854
        %v2856 = vpop.f32.mrb[0].mxu0
        %v2857 = vadd.f32 %v2744, %v2856
        %2858 = vmatprep.mubr.bf16.mxu0 %v903
        %2859 = vmatmul.mubr.bf16.gmra.mrb[0].mxu0 %v902
        %v2860 = vpop.f32.mrb[0].mxu0
        %v2861 = vadd.f32 %v2748, %v2860
        %v2862 = vpop.f32.mrb[0].mxu0
        %v2863 = vadd.f32 %v2750, %v2862
        %v2864 = vpop.f32.mrb[0].mxu0
        %v2865 = vadd.f32 %v2752, %v2864
        %v2866 = vpop.f32.mrb[0].mxu0
        %v2867 = vadd.f32 %v2754, %v2866
        %2868 = vmatprep.mubr.bf16.mxu0 %v910
        %2869 = vmatmul.mubr.bf16.gmra.mrb[0].mxu0 %v909
        %v2870 = vpop.f32.mrb[0].mxu0
        %v2871 = vadd.f32 %v2758, %v2870
        %v2872 = vpop.f32.mrb[0].mxu0
        %v2873 = vadd.f32 %v2760, %v2872
        %v2874 = vpop.f32.mrb[0].mxu0
        %v2875 = vadd.f32 %v2762, %v2874
        %v2876 = vpop.f32.mrb[0].mxu0
        %v2877 = vadd.f32 %v2764, %v2876
        %2878 = vdwg.mxu0
        %2879 = vmatprep.subr.bf16.mxu0 %v1835
        %2880 = vmatpush1.bf16.msra.mxu0 %v1834
        %2881 = vmatprep.subr.bf16.mxu0 %v1839
        %2882 = vmatpush1.bf16.msra.mxu0 %v1838
        %2883 = vmatprep.subr.bf16.mxu0 %v1843
        %2884 = vmatpush1.bf16.msra.mxu0 %v1842
        %2885 = vmatprep.subr.bf16.mxu0 %v1847
        %2886 = vmatpush1.bf16.msra.mxu0 %v1846
        %2887 = vmatprep.subr.bf16.mxu0 %v1851
        %2888 = vmatpush1.bf16.msra.mxu0 %v1850
        %2889 = vmatprep.subr.bf16.mxu0 %v1855
        %2890 = vmatpush1.bf16.msra.mxu0 %v1854
        %2891 = vmatprep.subr.bf16.mxu0 %v1859
        %2892 = vmatpush1.bf16.msra.mxu0 %v1858
        %2893 = vmatprep.subr.bf16.mxu0 %v1863
        %2894 = vmatpush1.bf16.msra.mxu0 %v1862
        %2895 = vmatprep.subr.bf16.mxu0 0
        %2896 = vmatpush1.bf16.msra.mxu0 0
        %2897 = vmatprep.subr.bf16.mxu0 0
        %2898 = vmatpush1.bf16.msra.mxu0 0
        %2899 = vmatprep.subr.bf16.mxu0 0
        %2900 = vmatpush1.bf16.msra.mxu0 0
        %2901 = vmatprep.subr.bf16.mxu0 0
        %2902 = vmatpush1.bf16.msra.mxu0 0
        %2903 = vmatprep.subr.bf16.mxu0 0
        %2904 = vmatpush1.bf16.msra.mxu0 0
        %2905 = vmatprep.subr.bf16.mxu0 0
        %2906 = vmatpush1.bf16.msra.mxu0 0
        %2907 = vmatprep.subr.bf16.mxu0 0
        %2908 = vmatpush1.bf16.msra.mxu0 0
        %2909 = vmatprep.subr.bf16.mxu0 0
        %2910 = vmatpush1.bf16.msra.mxu0 0
        %2911 = vmatprep.mubr.bf16.mxu0 0
        %2912 = vmatmul.mubr.bf16.gmra.mrb[0].mxu0 %v862
        %v2913 = vpop.f32.mrb[0].mxu0
        %v2914 = vadd.f32 %v2801, %v2913
        %v2915 = vpop.f32.mrb[0].mxu0
        %v2916 = vadd.f32 %v2803, %v2915
        %v2917 = vpop.f32.mrb[0].mxu0
        %v2918 = vadd.f32 %v2805, %v2917
        %v2919 = vpop.f32.mrb[0].mxu0
        %v2920 = vadd.f32 %v2807, %v2919
        %2921 = vmatprep.mubr.bf16.mxu0 0
        %2922 = vmatmul.mubr.bf16.gmra.mrb[0].mxu0 %v869
        %v2923 = vpop.f32.mrb[0].mxu0
        %v2924 = vadd.f32 %v2811, %v2923
        %v2925 = vpop.f32.mrb[0].mxu0
        %v2926 = vadd.f32 %v2813, %v2925
        %v2927 = vpop.f32.mrb[0].mxu0
        %v2928 = vadd.f32 %v2815, %v2927
        %v2929 = vpop.f32.mrb[0].mxu0
        %v2930 = vadd.f32 %v2817, %v2929
        %2931 = vmatprep.mubr.bf16.mxu0 0
        %2932 = vmatmul.mubr.bf16.gmra.mrb[0].mxu0 %v876
        %v2933 = vpop.f32.mrb[0].mxu0
        %v2934 = vadd.f32 %v2821, %v2933
        %v2935 = vpop.f32.mrb[0].mxu0
        %v2936 = vadd.f32 %v2823, %v2935
        %v2937 = vpop.f32.mrb[0].mxu0
        %v2938 = vadd.f32 %v2825, %v2937
        %v2939 = vpop.f32.mrb[0].mxu0
        %v2940 = vadd.f32 %v2827, %v2939
        %2941 = vmatprep.mubr.bf16.mxu0 0
        %2942 = vmatmul.mubr.bf16.gmra.mrb[0].mxu0 %v883
        %v2943 = vpop.f32.mrb[0].mxu0
        %v2944 = vadd.f32 %v2831, %v2943
        %v2945 = vpop.f32.mrb[0].mxu0
        %v2946 = vadd.f32 %v2833, %v2945
        %v2947 = vpop.f32.mrb[0].mxu0
        %v2948 = vadd.f32 %v2835, %v2947
        %v2949 = vpop.f32.mrb[0].mxu0
        %v2950 = vadd.f32 %v2837, %v2949
        %2951 = vmatprep.mubr.bf16.mxu0 0
        %2952 = vmatmul.mubr.bf16.gmra.mrb[0].mxu0 %v890
        %v2953 = vpop.f32.mrb[0].mxu0
        %v2954 = vadd.f32 %v2841, %v2953
        %v2955 = vpop.f32.mrb[0].mxu0
        %v2956 = vadd.f32 %v2843, %v2955
        %v2957 = vpop.f32.mrb[0].mxu0
        %v2958 = vadd.f32 %v2845, %v2957
        %v2959 = vpop.f32.mrb[0].mxu0
        %v2960 = vadd.f32 %v2847, %v2959
        %2961 = vmatprep.mubr.bf16.mxu0 0
        %2962 = vmatmul.mubr.bf16.gmra.mrb[0].mxu0 %v897
        %v2963 = vpop.f32.mrb[0].mxu0
        %v2964 = vadd.f32 %v2851, %v2963
        %v2965 = vpop.f32.mrb[0].mxu0
        %v2966 = vadd.f32 %v2853, %v2965
        %v2967 = vpop.f32.mrb[0].mxu0
        %v2968 = vadd.f32 %v2855, %v2967
        %v2969 = vpop.f32.mrb[0].mxu0
        %v2970 = vadd.f32 %v2857, %v2969
        %2971 = vmatprep.mubr.bf16.mxu0 0
        %2972 = vmatmul.mubr.bf16.gmra.mrb[0].mxu0 %v904
        %v2973 = vpop.f32.mrb[0].mxu0
        %v2974 = vadd.f32 %v2861, %v2973
        %v2975 = vpop.f32.mrb[0].mxu0
        %v2976 = vadd.f32 %v2863, %v2975
        %v2977 = vpop.f32.mrb[0].mxu0
        %v2978 = vadd.f32 %v2865, %v2977
        %v2979 = vpop.f32.mrb[0].mxu0
        %v2980 = vadd.f32 %v2867, %v2979
        %2981 = vmatprep.mubr.bf16.mxu0 0
        %2982 = vmatmul.mubr.bf16.gmra.mrb[0].mxu0 %v911
        %v2983 = vpop.f32.mrb[0].mxu0
        %v2984 = vadd.f32 %v2871, %v2983
        %v2985 = vpop.f32.mrb[0].mxu0
        %v2986 = vadd.f32 %v2873, %v2985
        %v2987 = vpop.f32.mrb[0].mxu0
        %v2988 = vadd.f32 %v2875, %v2987
        %v2989 = vpop.f32.mrb[0].mxu0
        %v2990 = vadd.f32 %v2877, %v2989
        %2991 = vdwg.mxu0
        %vm2992 = vcmp.gt.f32.partialorder %v2462, 0.0
        %vm2993 = vcmp.gt.f32.partialorder %v2464, 0.0
        %vm2994 = vcmp.gt.f32.partialorder %v2914, 0.0
        %vm2995 = vcmp.gt.f32.partialorder %v2916, 0.0
        %vm2996 = vcmp.gt.f32.partialorder %v2466, 0.0
        %vm2997 = vcmp.gt.f32.partialorder %v2468, 0.0
        %vm2998 = vcmp.gt.f32.partialorder %v2918, 0.0
        %vm2999 = vcmp.gt.f32.partialorder %v2920, 0.0
        %vm3000 = vcmp.gt.f32.partialorder %v2472, 0.0
        %vm3001 = vcmp.gt.f32.partialorder %v2474, 0.0
        %vm3002 = vcmp.gt.f32.partialorder %v2924, 0.0
        %vm3003 = vcmp.gt.f32.partialorder %v2926, 0.0
        %vm3004 = vcmp.gt.f32.partialorder %v2476, 0.0
        %vm3005 = vcmp.gt.f32.partialorder %v2478, 0.0
        %vm3006 = vcmp.gt.f32.partialorder %v2928, 0.0
        %vm3007 = vcmp.gt.f32.partialorder %v2930, 0.0
        %vm3008 = vcmp.gt.f32.partialorder %v2482, 0.0
        %vm3009 = vcmp.gt.f32.partialorder %v2484, 0.0
        %vm3010 = vcmp.gt.f32.partialorder %v2934, 0.0
        %vm3011 = vcmp.gt.f32.partialorder %v2936, 0.0
        %vm3012 = vcmp.gt.f32.partialorder %v2486, 0.0
        %vm3013 = vcmp.gt.f32.partialorder %v2488, 0.0
        %vm3014 = vcmp.gt.f32.partialorder %v2938, 0.0
        %vm3015 = vcmp.gt.f32.partialorder %v2940, 0.0
        %vm3016 = vcmp.gt.f32.partialorder %v2492, 0.0
        %vm3017 = vcmp.gt.f32.partialorder %v2494, 0.0
        %vm3018 = vcmp.gt.f32.partialorder %v2944, 0.0
        %vm3019 = vcmp.gt.f32.partialorder %v2946, 0.0
        %vm3020 = vcmp.gt.f32.partialorder %v2496, 0.0
        %vm3021 = vcmp.gt.f32.partialorder %v2498, 0.0
        %vm3022 = vcmp.gt.f32.partialorder %v2948, 0.0
        %vm3023 = vcmp.gt.f32.partialorder %v2950, 0.0
        %vm3024 = vcmp.gt.f32.partialorder %v2502, 0.0
        %vm3025 = vcmp.gt.f32.partialorder %v2504, 0.0
        %vm3026 = vcmp.gt.f32.partialorder %v2954, 0.0
        %vm3027 = vcmp.gt.f32.partialorder %v2956, 0.0
        %vm3028 = vcmp.gt.f32.partialorder %v2506, 0.0
        %vm3029 = vcmp.gt.f32.partialorder %v2508, 0.0
        %vm3030 = vcmp.gt.f32.partialorder %v2958, 0.0
        %vm3031 = vcmp.gt.f32.partialorder %v2960, 0.0
        %vm3032 = vcmp.gt.f32.partialorder %v2512, 0.0
        %vm3033 = vcmp.gt.f32.partialorder %v2514, 0.0
        %vm3034 = vcmp.gt.f32.partialorder %v2964, 0.0
        %vm3035 = vcmp.gt.f32.partialorder %v2966, 0.0
        %vm3036 = vcmp.gt.f32.partialorder %v2516, 0.0
        %vm3037 = vcmp.gt.f32.partialorder %v2518, 0.0
        %vm3038 = vcmp.gt.f32.partialorder %v2968, 0.0
        %vm3039 = vcmp.gt.f32.partialorder %v2970, 0.0
        %vm3040 = vcmp.gt.f32.partialorder %v2522, 0.0
        %vm3041 = vcmp.gt.f32.partialorder %v2524, 0.0
        %vm3042 = vcmp.gt.f32.partialorder %v2974, 0.0
        %vm3043 = vcmp.gt.f32.partialorder %v2976, 0.0
        %vm3044 = vcmp.gt.f32.partialorder %v2526, 0.0
        %vm3045 = vcmp.gt.f32.partialorder %v2528, 0.0
        %vm3046 = vcmp.gt.f32.partialorder %v2978, 0.0
        %vm3047 = vcmp.gt.f32.partialorder %v2980, 0.0
        %vm3048 = vcmp.gt.f32.partialorder %v2532, 0.0
        %vm3049 = vcmp.gt.f32.partialorder %v2534, 0.0
        %vm3050 = vcmp.gt.f32.partialorder %v2984, 0.0
        %vm3051 = vcmp.gt.f32.partialorder %v2986, 0.0
        %vm3052 = vcmp.gt.f32.partialorder %v2536, 0.0
        %vm3053 = vcmp.gt.f32.partialorder %v2538, 0.0
        %vm3054 = vcmp.gt.f32.partialorder %v2988, 0.0
        %vm3055 = vcmp.gt.f32.partialorder %v2990, 0.0
        %v3056 = vmul.f32 %v2462, 0.01
        %v3057 = vmul.f32 %v2464, 0.01
        %v3058 = vmul.f32 %v2914, 0.01
        %v3059 = vmul.f32 %v2916, 0.01
        %v3060 = vmul.f32 %v2466, 0.01
        %v3061 = vmul.f32 %v2468, 0.01
        %v3062 = vmul.f32 %v2918, 0.01
        %v3063 = vmul.f32 %v2920, 0.01
        %v3064 = vmul.f32 %v2472, 0.01
        %v3065 = vmul.f32 %v2474, 0.01
        %v3066 = vmul.f32 %v2924, 0.01
        %v3067 = vmul.f32 %v2926, 0.01
        %v3068 = vmul.f32 %v2476, 0.01
        %v3069 = vmul.f32 %v2478, 0.01
        %v3070 = vmul.f32 %v2928, 0.01
        %v3071 = vmul.f32 %v2930, 0.01
        %v3072 = vmul.f32 %v2482, 0.01
        %v3073 = vmul.f32 %v2484, 0.01
        %v3074 = vmul.f32 %v2934, 0.01
        %v3075 = vmul.f32 %v2936, 0.01
        %v3076 = vmul.f32 %v2486, 0.01
        %v3077 = vmul.f32 %v2488, 0.01
        %v3078 = vmul.f32 %v2938, 0.01
        %v3079 = vmul.f32 %v2940, 0.01
        %v3080 = vmul.f32 %v2492, 0.01
        %v3081 = vmul.f32 %v2494, 0.01
        %v3082 = vmul.f32 %v2944, 0.01
        %v3083 = vmul.f32 %v2946, 0.01
        %v3084 = vmul.f32 %v2496, 0.01
        %v3085 = vmul.f32 %v2498, 0.01
        %v3086 = vmul.f32 %v2948, 0.01
        %v3087 = vmul.f32 %v2950, 0.01
        %v3088 = vmul.f32 %v2502, 0.01
        %v3089 = vmul.f32 %v2504, 0.01
        %v3090 = vmul.f32 %v2954, 0.01
        %v3091 = vmul.f32 %v2956, 0.01
        %v3092 = vmul.f32 %v2506, 0.01
        %v3093 = vmul.f32 %v2508, 0.01
        %v3094 = vmul.f32 %v2958, 0.01
        %v3095 = vmul.f32 %v2960, 0.01
        %v3096 = vmul.f32 %v2512, 0.01
        %v3097 = vmul.f32 %v2514, 0.01
        %v3098 = vmul.f32 %v2964, 0.01
        %v3099 = vmul.f32 %v2966, 0.01
        %v3100 = vmul.f32 %v2516, 0.01
        %v3101 = vmul.f32 %v2518, 0.01
        %v3102 = vmul.f32 %v2968, 0.01
        %v3103 = vmul.f32 %v2970, 0.01
        %v3104 = vmul.f32 %v2522, 0.01
        %v3105 = vmul.f32 %v2524, 0.01
        %v3106 = vmul.f32 %v2974, 0.01
        %v3107 = vmul.f32 %v2976, 0.01
        %v3108 = vmul.f32 %v2526, 0.01
        %v3109 = vmul.f32 %v2528, 0.01
        %v3110 = vmul.f32 %v2978, 0.01
        %v3111 = vmul.f32 %v2980, 0.01
        %v3112 = vmul.f32 %v2532, 0.01
        %v3113 = vmul.f32 %v2534, 0.01
        %v3114 = vmul.f32 %v2984, 0.01
        %v3115 = vmul.f32 %v2986, 0.01
        %v3116 = vmul.f32 %v2536, 0.01
        %v3117 = vmul.f32 %v2538, 0.01
        %v3118 = vmul.f32 %v2988, 0.01
        %v3119 = vmul.f32 %v2990, 0.01
        %v3120 = vsel %vm2992, %v2462, %v3056
        %v3121 = vsel %vm2993, %v2464, %v3057
        %v3122 = vsel %vm2994, %v2914, %v3058
        %v3123 = vsel %vm2995, %v2916, %v3059
        %v3124 = vsel %vm2996, %v2466, %v3060
        %v3125 = vsel %vm2997, %v2468, %v3061
        %v3126 = vsel %vm2998, %v2918, %v3062
        %v3127 = vsel %vm2999, %v2920, %v3063
        %v3128 = vsel %vm3000, %v2472, %v3064
        %v3129 = vsel %vm3001, %v2474, %v3065
        %v3130 = vsel %vm3002, %v2924, %v3066
        %v3131 = vsel %vm3003, %v2926, %v3067
        %v3132 = vsel %vm3004, %v2476, %v3068
        %v3133 = vsel %vm3005, %v2478, %v3069
        %v3134 = vsel %vm3006, %v2928, %v3070
        %v3135 = vsel %vm3007, %v2930, %v3071
        %v3136 = vsel %vm3008, %v2482, %v3072
        %v3137 = vsel %vm3009, %v2484, %v3073
        %v3138 = vsel %vm3010, %v2934, %v3074
        %v3139 = vsel %vm3011, %v2936, %v3075
        %v3140 = vsel %vm3012, %v2486, %v3076
        %v3141 = vsel %vm3013, %v2488, %v3077
        %v3142 = vsel %vm3014, %v2938, %v3078
        %v3143 = vsel %vm3015, %v2940, %v3079
        %v3144 = vsel %vm3016, %v2492, %v3080
        %v3145 = vsel %vm3017, %v2494, %v3081
        %v3146 = vsel %vm3018, %v2944, %v3082
        %v3147 = vsel %vm3019, %v2946, %v3083
        %v3148 = vsel %vm3020, %v2496, %v3084
        %v3149 = vsel %vm3021, %v2498, %v3085
        %v3150 = vsel %vm3022, %v2948, %v3086
        %v3151 = vsel %vm3023, %v2950, %v3087
        %v3152 = vsel %vm3024, %v2502, %v3088
        %v3153 = vsel %vm3025, %v2504, %v3089
        %v3154 = vsel %vm3026, %v2954, %v3090
        %v3155 = vsel %vm3027, %v2956, %v3091
        %v3156 = vsel %vm3028, %v2506, %v3092
        %v3157 = vsel %vm3029, %v2508, %v3093
        %v3158 = vsel %vm3030, %v2958, %v3094
        %v3159 = vsel %vm3031, %v2960, %v3095
        %v3160 = vsel %vm3032, %v2512, %v3096
        %v3161 = vsel %vm3033, %v2514, %v3097
        %v3162 = vsel %vm3034, %v2964, %v3098
        %v3163 = vsel %vm3035, %v2966, %v3099
        %v3164 = vsel %vm3036, %v2516, %v3100
        %v3165 = vsel %vm3037, %v2518, %v3101
        %v3166 = vsel %vm3038, %v2968, %v3102
        %v3167 = vsel %vm3039, %v2970, %v3103
        %v3168 = vsel %vm3040, %v2522, %v3104
        %v3169 = vsel %vm3041, %v2524, %v3105
        %v3170 = vsel %vm3042, %v2974, %v3106
        %v3171 = vsel %vm3043, %v2976, %v3107
        %v3172 = vsel %vm3044, %v2526, %v3108
        %v3173 = vsel %vm3045, %v2528, %v3109
        %v3174 = vsel %vm3046, %v2978, %v3110
        %v3175 = vsel %vm3047, %v2980, %v3111
        %v3176 = vsel %vm3048, %v2532, %v3112
        %v3177 = vsel %vm3049, %v2534, %v3113
        %v3178 = vsel %vm3050, %v2984, %v3114
        %v3179 = vsel %vm3051, %v2986, %v3115
        %v3180 = vsel %vm3052, %v2536, %v3116
        %v3181 = vsel %vm3053, %v2538, %v3117
        %v3182 = vsel %vm3054, %v2988, %v3118
        %v3183 = vsel %vm3055, %v2990, %v3119
        %v3184 = vld [vmem:[#allocation2] sm:$0xff]
        %v3185 = vld [vmem:[#allocation2 + $0x8] sm:$0xff]
        %v3186 = vld [vmem:[#allocation2 + $0x10] sm:$0xff]
        %v3187 = vld [vmem:[#allocation2 + $0x18] sm:$0xff]
        %v3188 = vld [vmem:[#allocation2 + $0x20] sm:$0xff]
        %v3189 = vld [vmem:[#allocation2 + $0x28] sm:$0xff]
        %v3190 = vld [vmem:[#allocation2 + $0x30] sm:$0xff]
        %v3191 = vld [vmem:[#allocation2 + $0x38] sm:$0xff]
        %v3192 = vld [vmem:[#allocation2 + $0x40] sm:$0xff]
        %v3193 = vld [vmem:[#allocation2 + $0x48] sm:$0xff]
        %v3194 = vld [vmem:[#allocation2 + $0x50] sm:$0xff]
        %v3195 = vld [vmem:[#allocation2 + $0x58] sm:$0xff]
        %v3196 = vld [vmem:[#allocation2 + $0x60] sm:$0xff]
        %v3197 = vld [vmem:[#allocation2 + $0x68] sm:$0xff]
        %v3198 = vld [vmem:[#allocation2 + $0x70] sm:$0xff]
        %v3199 = vld [vmem:[#allocation2 + $0x78] sm:$0xff]
        %v3200 = vpack.c.bf16 %v3124, %v3120
        %v3201 = vpack.c.bf16 %v3125, %v3121
        %v3202 = vpack.c.bf16 %v3126, %v3122
        %v3203 = vpack.c.bf16 %v3127, %v3123
        %v3204 = vpack.c.bf16 %v3132, %v3128
        %v3205 = vpack.c.bf16 %v3133, %v3129
        %v3206 = vpack.c.bf16 %v3134, %v3130
        %v3207 = vpack.c.bf16 %v3135, %v3131
        %v3208 = vpack.c.bf16 %v3140, %v3136
        %v3209 = vpack.c.bf16 %v3141, %v3137
        %v3210 = vpack.c.bf16 %v3142, %v3138
        %v3211 = vpack.c.bf16 %v3143, %v3139
        %v3212 = vpack.c.bf16 %v3148, %v3144
        %v3213 = vpack.c.bf16 %v3149, %v3145
        %v3214 = vpack.c.bf16 %v3150, %v3146
        %v3215 = vpack.c.bf16 %v3151, %v3147
        %v3216 = vpack.c.bf16 %v3156, %v3152
        %v3217 = vpack.c.bf16 %v3157, %v3153
        %v3218 = vpack.c.bf16 %v3158, %v3154
        %v3219 = vpack.c.bf16 %v3159, %v3155
        %v3220 = vpack.c.bf16 %v3164, %v3160
        %v3221 = vpack.c.bf16 %v3165, %v3161
        %v3222 = vpack.c.bf16 %v3166, %v3162
        %v3223 = vpack.c.bf16 %v3167, %v3163
        %v3224 = vpack.c.bf16 %v3172, %v3168
        %v3225 = vpack.c.bf16 %v3173, %v3169
        %v3226 = vpack.c.bf16 %v3174, %v3170
        %v3227 = vpack.c.bf16 %v3175, %v3171
        %v3228 = vpack.c.bf16 %v3180, %v3176
        %v3229 = vpack.c.bf16 %v3181, %v3177
        %v3230 = vpack.c.bf16 %v3182, %v3178
        %v3231 = vpack.c.bf16 %v3183, %v3179
        %v3232 = vld [vmem:[%s304] sm:$0xf]
        %v3233 = vld [vmem:[%s304 + $0x4] sm:$0xf]
        %v3234 = vld [vmem:[%s304 + $0x8] sm:$0xf]
        %v3235 = vld [vmem:[%s304 + $0xc] sm:$0xf]
        %v3236 = vld [vmem:[%s304 + $0x10] sm:$0xf]
        %v3237 = vld [vmem:[%s304 + $0x14] sm:$0xf]
        %v3238 = vld [vmem:[%s304 + $0x18] sm:$0xf]
        %v3239 = vld [vmem:[%s304 + $0x1c] sm:$0xf]
        %v3240 = vld [vmem:[%s304 + $0x20] sm:$0xf]
        %v3241 = vld [vmem:[%s304 + $0x24] sm:$0xf]
        %v3242 = vld [vmem:[%s304 + $0x28] sm:$0xf]
        %v3243 = vld [vmem:[%s304 + $0x2c] sm:$0xf]
        %v3244 = vld [vmem:[%s304 + $0x30] sm:$0xf]
        %v3245 = vld [vmem:[%s304 + $0x34] sm:$0xf]
        %v3246 = vld [vmem:[%s304 + $0x38] sm:$0xf]
        %v3247 = vld [vmem:[%s304 + $0x3c] sm:$0xf]
        %v3248 = vld [vmem:[%s304 + $0x40] sm:$0xf]
        %v3249 = vld [vmem:[%s304 + $0x44] sm:$0xf]
        %v3250 = vld [vmem:[%s304 + $0x48] sm:$0xf]
        %v3251 = vld [vmem:[%s304 + $0x4c] sm:$0xf]
        %v3252 = vld [vmem:[%s304 + $0x50] sm:$0xf]
        %v3253 = vld [vmem:[%s304 + $0x54] sm:$0xf]
        %v3254 = vld [vmem:[%s304 + $0x58] sm:$0xf]
        %v3255 = vld [vmem:[%s304 + $0x5c] sm:$0xf]
        %v3256 = vld [vmem:[%s304 + $0x60] sm:$0xf]
        %v3257 = vld [vmem:[%s304 + $0x64] sm:$0xf]
        %v3258 = vld [vmem:[%s304 + $0x68] sm:$0xf]
        %v3259 = vld [vmem:[%s304 + $0x6c] sm:$0xf]
        %v3260 = vld [vmem:[%s304 + $0x70] sm:$0xf]
        %v3261 = vld [vmem:[%s304 + $0x74] sm:$0xf]
        %v3262 = vld [vmem:[%s304 + $0x78] sm:$0xf]
        %v3263 = vld [vmem:[%s304 + $0x7c] sm:$0xf]
        %v3264 = vld [vmem:[%s304 + $0x80] sm:$0xf]
        %v3265 = vld [vmem:[%s304 + $0x84] sm:$0xf]
        %v3266 = vld [vmem:[%s304 + $0x88] sm:$0xf]
        %v3267 = vld [vmem:[%s304 + $0x8c] sm:$0xf]
        %v3268 = vld [vmem:[%s304 + $0x90] sm:$0xf]
        %v3269 = vld [vmem:[%s304 + $0x94] sm:$0xf]
        %v3270 = vld [vmem:[%s304 + $0x98] sm:$0xf]
        %v3271 = vld [vmem:[%s304 + $0x9c] sm:$0xf]
        %v3272 = vld [vmem:[%s304 + $0xa0] sm:$0xf]
        %v3273 = vld [vmem:[%s304 + $0xa4] sm:$0xf]
        %v3274 = vld [vmem:[%s304 + $0xa8] sm:$0xf]
        %v3275 = vld [vmem:[%s304 + $0xac] sm:$0xf]
        %v3276 = vld [vmem:[%s304 + $0xb0] sm:$0xf]
        %v3277 = vld [vmem:[%s304 + $0xb4] sm:$0xf]
        %v3278 = vld [vmem:[%s304 + $0xb8] sm:$0xf]
        %v3279 = vld [vmem:[%s304 + $0xbc] sm:$0xf]
        %v3280 = vld [vmem:[%s304 + $0xc0] sm:$0xf]
        %v3281 = vld [vmem:[%s304 + $0xc4] sm:$0xf]
        %v3282 = vld [vmem:[%s304 + $0xc8] sm:$0xf]
        %v3283 = vld [vmem:[%s304 + $0xcc] sm:$0xf]
        %v3284 = vld [vmem:[%s304 + $0xd0] sm:$0xf]
        %v3285 = vld [vmem:[%s304 + $0xd4] sm:$0xf]
        %v3286 = vld [vmem:[%s304 + $0xd8] sm:$0xf]
        %v3287 = vld [vmem:[%s304 + $0xdc] sm:$0xf]
        %v3288 = vld [vmem:[%s304 + $0xe0] sm:$0xf]
        %v3289 = vld [vmem:[%s304 + $0xe4] sm:$0xf]
        %v3290 = vld [vmem:[%s304 + $0xe8] sm:$0xf]
        %v3291 = vld [vmem:[%s304 + $0xec] sm:$0xf]
        %v3292 = vld [vmem:[%s304 + $0xf0] sm:$0xf]
        %v3293 = vld [vmem:[%s304 + $0xf4] sm:$0xf]
        %v3294 = vld [vmem:[%s304 + $0xf8] sm:$0xf]
        %v3295 = vld [vmem:[%s304 + $0xfc] sm:$0xf]
        %v3360 = vunpack.c.l.b16 %v3232
        %v3361 = vunpack.c.l.b16 %v3233
        %v3362 = vunpack.c.l.b16 %v3234
        %v3363 = vunpack.c.l.b16 %v3235
        %v3364 = vunpack.c.l.b16 %v3236
        %v3365 = vunpack.c.l.b16 %v3237
        %v3366 = vunpack.c.l.b16 %v3238
        %v3367 = vunpack.c.l.b16 %v3239
        %v3368 = vunpack.c.l.b16 %v3240
        %v3369 = vunpack.c.l.b16 %v3241
        %v3370 = vunpack.c.l.b16 %v3242
        %v3371 = vunpack.c.l.b16 %v3243
        %v3372 = vunpack.c.l.b16 %v3244
        %v3373 = vunpack.c.l.b16 %v3245
        %v3374 = vunpack.c.l.b16 %v3246
        %v3375 = vunpack.c.l.b16 %v3247
        %v3376 = vunpack.c.l.b16 %v3248
        %v3377 = vunpack.c.l.b16 %v3249
        %v3378 = vunpack.c.l.b16 %v3250
        %v3379 = vunpack.c.l.b16 %v3251
        %v3380 = vunpack.c.l.b16 %v3252
        %v3381 = vunpack.c.l.b16 %v3253
        %v3382 = vunpack.c.l.b16 %v3254
        %v3383 = vunpack.c.l.b16 %v3255
        %v3384 = vunpack.c.l.b16 %v3256
        %v3385 = vunpack.c.l.b16 %v3257
        %v3386 = vunpack.c.l.b16 %v3258
        %v3387 = vunpack.c.l.b16 %v3259
        %v3388 = vunpack.c.l.b16 %v3260
        %v3389 = vunpack.c.l.b16 %v3261
        %v3390 = vunpack.c.l.b16 %v3262
        %v3391 = vunpack.c.l.b16 %v3263
        %v3392 = vunpack.c.l.b16 %v3264
        %v3393 = vunpack.c.l.b16 %v3265
        %v3394 = vunpack.c.l.b16 %v3266
        %v3395 = vunpack.c.l.b16 %v3267
        %v3396 = vunpack.c.l.b16 %v3268
        %v3397 = vunpack.c.l.b16 %v3269
        %v3398 = vunpack.c.l.b16 %v3270
        %v3399 = vunpack.c.l.b16 %v3271
        %v3400 = vunpack.c.l.b16 %v3272
        %v3401 = vunpack.c.l.b16 %v3273
        %v3402 = vunpack.c.l.b16 %v3274
        %v3403 = vunpack.c.l.b16 %v3275
        %v3404 = vunpack.c.l.b16 %v3276
        %v3405 = vunpack.c.l.b16 %v3277
        %v3406 = vunpack.c.l.b16 %v3278
        %v3407 = vunpack.c.l.b16 %v3279
        %v3408 = vunpack.c.l.b16 %v3280
        %v3409 = vunpack.c.l.b16 %v3281
        %v3410 = vunpack.c.l.b16 %v3282
        %v3411 = vunpack.c.l.b16 %v3283
        %v3412 = vunpack.c.l.b16 %v3284
        %v3413 = vunpack.c.l.b16 %v3285
        %v3414 = vunpack.c.l.b16 %v3286
        %v3415 = vunpack.c.l.b16 %v3287
        %v3416 = vunpack.c.l.b16 %v3288
        %v3417 = vunpack.c.l.b16 %v3289
        %v3418 = vunpack.c.l.b16 %v3290
        %v3419 = vunpack.c.l.b16 %v3291
        %v3420 = vunpack.c.l.b16 %v3292
        %v3421 = vunpack.c.l.b16 %v3293
        %v3422 = vunpack.c.l.b16 %v3294
        %v3423 = vunpack.c.l.b16 %v3295
        %v3424 = vpack.c.b16 %v3361, %v3360
        %v3425 = vpack.c.b16 %v3363, %v3362
        %v3426 = vpack.c.b16 %v3365, %v3364
        %v3427 = vpack.c.b16 %v3367, %v3366
        %v3428 = vpack.c.b16 %v3369, %v3368
        %v3429 = vpack.c.b16 %v3371, %v3370
        %v3430 = vpack.c.b16 %v3373, %v3372
        %v3431 = vpack.c.b16 %v3375, %v3374
        %v3432 = vpack.c.b16 %v3377, %v3376
        %v3433 = vpack.c.b16 %v3379, %v3378
        %v3434 = vpack.c.b16 %v3381, %v3380
        %v3435 = vpack.c.b16 %v3383, %v3382
        %v3436 = vpack.c.b16 %v3385, %v3384
        %v3437 = vpack.c.b16 %v3387, %v3386
        %v3438 = vpack.c.b16 %v3389, %v3388
        %v3439 = vpack.c.b16 %v3391, %v3390
        %v3440 = vpack.c.b16 %v3393, %v3392
        %v3441 = vpack.c.b16 %v3395, %v3394
        %v3442 = vpack.c.b16 %v3397, %v3396
        %v3443 = vpack.c.b16 %v3399, %v3398
        %v3444 = vpack.c.b16 %v3401, %v3400
        %v3445 = vpack.c.b16 %v3403, %v3402
        %v3446 = vpack.c.b16 %v3405, %v3404
        %v3447 = vpack.c.b16 %v3407, %v3406
        %v3448 = vpack.c.b16 %v3409, %v3408
        %v3449 = vpack.c.b16 %v3411, %v3410
        %v3450 = vpack.c.b16 %v3413, %v3412
        %v3451 = vpack.c.b16 %v3415, %v3414
        %v3452 = vpack.c.b16 %v3417, %v3416
        %v3453 = vpack.c.b16 %v3419, %v3418
        %v3454 = vpack.c.b16 %v3421, %v3420
        %v3455 = vpack.c.b16 %v3423, %v3422
        %3488 = vmatprep.subr.bf16.mxu0 0
        %3489 = vmatpush1.bf16.msra.mxu0 %v3424
        %3490 = vmatprep.subr.bf16.mxu0 0
        %3491 = vmatpush1.bf16.msra.mxu0 %v3425
        %3492 = vmatprep.subr.bf16.mxu0 0
        %3493 = vmatpush1.bf16.msra.mxu0 %v3426
        %3494 = vmatprep.subr.bf16.mxu0 0
        %3495 = vmatpush1.bf16.msra.mxu0 %v3427
        %3496 = vmatprep.subr.bf16.mxu0 0
        %3497 = vmatpush1.bf16.msra.mxu0 %v3428
        %3498 = vmatprep.subr.bf16.mxu0 0
        %3499 = vmatpush1.bf16.msra.mxu0 %v3429
        %3500 = vmatprep.subr.bf16.mxu0 0
        %3501 = vmatpush1.bf16.msra.mxu0 %v3430
        %3502 = vmatprep.subr.bf16.mxu0 0
        %3503 = vmatpush1.bf16.msra.mxu0 %v3431
        %3504 = vmatprep.subr.bf16.mxu0 0
        %3505 = vmatpush1.bf16.msra.mxu0 %v3432
        %3506 = vmatprep.subr.bf16.mxu0 0
        %3507 = vmatpush1.bf16.msra.mxu0 %v3433
        %3508 = vmatprep.subr.bf16.mxu0 0
        %3509 = vmatpush1.bf16.msra.mxu0 %v3434
        %3510 = vmatprep.subr.bf16.mxu0 0
        %3511 = vmatpush1.bf16.msra.mxu0 %v3435
        %3512 = vmatprep.subr.bf16.mxu0 0
        %3513 = vmatpush1.bf16.msra.mxu0 %v3436
        %3514 = vmatprep.subr.bf16.mxu0 0
        %3515 = vmatpush1.bf16.msra.mxu0 %v3437
        %3516 = vmatprep.subr.bf16.mxu0 0
        %3517 = vmatpush1.bf16.msra.mxu0 %v3438
        %3518 = vmatprep.subr.bf16.mxu0 0
        %3519 = vmatpush1.bf16.msra.mxu0 %v3439
        %3520 = vmatprep.mubr.bf16.mxu0 %v3201
        %3521 = vmatmul.mubr.bf16.gmra.mrb[0].mxu0 %v3200
        %v3522 = vpop.f32.mrb[0].mxu0
        %v3523 = vadd.f32 0.0, %v3522
        %v3524 = vpop.f32.mrb[0].mxu0
        %v3525 = vpop.f32.mrb[0].mxu0
        %v3526 = vadd.f32 0.0, %v3525
        %v3527 = vpop.f32.mrb[0].mxu0
        %3528 = vmatprep.mubr.bf16.mxu0 %v3205
        %3529 = vmatmul.mubr.bf16.gmra.mrb[0].mxu0 %v3204
        %v3530 = vpop.f32.mrb[0].mxu0
        %v3531 = vadd.f32 0.0, %v3530
        %v3532 = vpop.f32.mrb[0].mxu0
        %v3533 = vpop.f32.mrb[0].mxu0
        %v3534 = vadd.f32 0.0, %v3533
        %v3535 = vpop.f32.mrb[0].mxu0
        %3536 = vmatprep.mubr.bf16.mxu0 %v3209
        %3537 = vmatmul.mubr.bf16.gmra.mrb[0].mxu0 %v3208
        %v3538 = vpop.f32.mrb[0].mxu0
        %v3539 = vadd.f32 0.0, %v3538
        %v3540 = vpop.f32.mrb[0].mxu0
        %v3541 = vpop.f32.mrb[0].mxu0
        %v3542 = vadd.f32 0.0, %v3541
        %v3543 = vpop.f32.mrb[0].mxu0
        %3544 = vmatprep.mubr.bf16.mxu0 %v3213
        %3545 = vmatmul.mubr.bf16.gmra.mrb[0].mxu0 %v3212
        %v3546 = vpop.f32.mrb[0].mxu0
        %v3547 = vadd.f32 0.0, %v3546
        %v3548 = vpop.f32.mrb[0].mxu0
        %v3549 = vpop.f32.mrb[0].mxu0
        %v3550 = vadd.f32 0.0, %v3549
        %v3551 = vpop.f32.mrb[0].mxu0
        %3552 = vmatprep.mubr.bf16.mxu0 %v3217
        %3553 = vmatmul.mubr.bf16.gmra.mrb[0].mxu0 %v3216
        %v3554 = vpop.f32.mrb[0].mxu0
        %v3555 = vadd.f32 0.0, %v3554
        %v3556 = vpop.f32.mrb[0].mxu0
        %v3557 = vpop.f32.mrb[0].mxu0
        %v3558 = vadd.f32 0.0, %v3557
        %v3559 = vpop.f32.mrb[0].mxu0
        %3560 = vmatprep.mubr.bf16.mxu0 %v3221
        %3561 = vmatmul.mubr.bf16.gmra.mrb[0].mxu0 %v3220
        %v3562 = vpop.f32.mrb[0].mxu0
        %v3563 = vadd.f32 0.0, %v3562
        %v3564 = vpop.f32.mrb[0].mxu0
        %v3565 = vpop.f32.mrb[0].mxu0
        %v3566 = vadd.f32 0.0, %v3565
        %v3567 = vpop.f32.mrb[0].mxu0
        %3568 = vmatprep.mubr.bf16.mxu0 %v3225
        %3569 = vmatmul.mubr.bf16.gmra.mrb[0].mxu0 %v3224
        %v3570 = vpop.f32.mrb[0].mxu0
        %v3571 = vadd.f32 0.0, %v3570
        %v3572 = vpop.f32.mrb[0].mxu0
        %v3573 = vpop.f32.mrb[0].mxu0
        %v3574 = vadd.f32 0.0, %v3573
        %v3575 = vpop.f32.mrb[0].mxu0
        %3576 = vmatprep.mubr.bf16.mxu0 %v3229
        %3577 = vmatmul.mubr.bf16.gmra.mrb[0].mxu0 %v3228
        %v3578 = vpop.f32.mrb[0].mxu0
        %v3579 = vadd.f32 0.0, %v3578
        %v3580 = vpop.f32.mrb[0].mxu0
        %v3581 = vpop.f32.mrb[0].mxu0
        %v3582 = vadd.f32 0.0, %v3581
        %v3583 = vpop.f32.mrb[0].mxu0
        %3584 = vdwg.mxu0
        %3585 = vmatprep.subr.bf16.mxu0 0
        %3586 = vmatpush1.bf16.msra.mxu0 %v3440
        %3587 = vmatprep.subr.bf16.mxu0 0
        %3588 = vmatpush1.bf16.msra.mxu0 %v3441
        %3589 = vmatprep.subr.bf16.mxu0 0
        %3590 = vmatpush1.bf16.msra.mxu0 %v3442
        %3591 = vmatprep.subr.bf16.mxu0 0
        %3592 = vmatpush1.bf16.msra.mxu0 %v3443
        %3593 = vmatprep.subr.bf16.mxu0 0
        %3594 = vmatpush1.bf16.msra.mxu0 %v3444
        %3595 = vmatprep.subr.bf16.mxu0 0
        %3596 = vmatpush1.bf16.msra.mxu0 %v3445
        %3597 = vmatprep.subr.bf16.mxu0 0
        %3598 = vmatpush1.bf16.msra.mxu0 %v3446
        %3599 = vmatprep.subr.bf16.mxu0 0
        %3600 = vmatpush1.bf16.msra.mxu0 %v3447
        %3601 = vmatprep.subr.bf16.mxu0 0
        %3602 = vmatpush1.bf16.msra.mxu0 %v3448
        %3603 = vmatprep.subr.bf16.mxu0 0
        %3604 = vmatpush1.bf16.msra.mxu0 %v3449
        %3605 = vmatprep.subr.bf16.mxu0 0
        %3606 = vmatpush1.bf16.msra.mxu0 %v3450
        %3607 = vmatprep.subr.bf16.mxu0 0
        %3608 = vmatpush1.bf16.msra.mxu0 %v3451
        %3609 = vmatprep.subr.bf16.mxu0 0
        %3610 = vmatpush1.bf16.msra.mxu0 %v3452
        %3611 = vmatprep.subr.bf16.mxu0 0
        %3612 = vmatpush1.bf16.msra.mxu0 %v3453
        %3613 = vmatprep.subr.bf16.mxu0 0
        %3614 = vmatpush1.bf16.msra.mxu0 %v3454
        %3615 = vmatprep.subr.bf16.mxu0 0
        %3616 = vmatpush1.bf16.msra.mxu0 %v3455
        %3617 = vmatprep.mubr.bf16.mxu0 %v3203
        %3618 = vmatmul.mubr.bf16.gmra.mrb[0].mxu0 %v3202
        %v3619 = vpop.f32.mrb[0].mxu0
        %v3620 = vadd.f32 %v3523, %v3619
        %v3621 = vpop.f32.mrb[0].mxu0
        %v3622 = vpop.f32.mrb[0].mxu0
        %v3623 = vadd.f32 %v3526, %v3622
        %v3624 = vpop.f32.mrb[0].mxu0
        %3625 = vmatprep.mubr.bf16.mxu0 %v3207
        %3626 = vmatmul.mubr.bf16.gmra.mrb[0].mxu0 %v3206
        %v3627 = vpop.f32.mrb[0].mxu0
        %v3628 = vadd.f32 %v3531, %v3627
        %v3629 = vpop.f32.mrb[0].mxu0
        %v3630 = vpop.f32.mrb[0].mxu0
        %v3631 = vadd.f32 %v3534, %v3630
        %v3632 = vpop.f32.mrb[0].mxu0
        %3633 = vmatprep.mubr.bf16.mxu0 %v3211
        %3634 = vmatmul.mubr.bf16.gmra.mrb[0].mxu0 %v3210
        %v3635 = vpop.f32.mrb[0].mxu0
        %v3636 = vadd.f32 %v3539, %v3635
        %v3637 = vpop.f32.mrb[0].mxu0
        %v3638 = vpop.f32.mrb[0].mxu0
        %v3639 = vadd.f32 %v3542, %v3638
        %v3640 = vpop.f32.mrb[0].mxu0
        %3641 = vmatprep.mubr.bf16.mxu0 %v3215
        %3642 = vmatmul.mubr.bf16.gmra.mrb[0].mxu0 %v3214
        %v3643 = vpop.f32.mrb[0].mxu0
        %v3644 = vadd.f32 %v3547, %v3643
        %v3645 = vpop.f32.mrb[0].mxu0
        %v3646 = vpop.f32.mrb[0].mxu0
        %v3647 = vadd.f32 %v3550, %v3646
        %v3648 = vpop.f32.mrb[0].mxu0
        %3649 = vmatprep.mubr.bf16.mxu0 %v3219
        %3650 = vmatmul.mubr.bf16.gmra.mrb[0].mxu0 %v3218
        %v3651 = vpop.f32.mrb[0].mxu0
        %v3652 = vadd.f32 %v3555, %v3651
        %v3653 = vpop.f32.mrb[0].mxu0
        %v3654 = vpop.f32.mrb[0].mxu0
        %v3655 = vadd.f32 %v3558, %v3654
        %v3656 = vpop.f32.mrb[0].mxu0
        %3657 = vmatprep.mubr.bf16.mxu0 %v3223
        %3658 = vmatmul.mubr.bf16.gmra.mrb[0].mxu0 %v3222
        %v3659 = vpop.f32.mrb[0].mxu0
        %v3660 = vadd.f32 %v3563, %v3659
        %v3661 = vpop.f32.mrb[0].mxu0
        %v3662 = vpop.f32.mrb[0].mxu0
        %v3663 = vadd.f32 %v3566, %v3662
        %v3664 = vpop.f32.mrb[0].mxu0
        %3665 = vmatprep.mubr.bf16.mxu0 %v3227
        %3666 = vmatmul.mubr.bf16.gmra.mrb[0].mxu0 %v3226
        %v3667 = vpop.f32.mrb[0].mxu0
        %v3668 = vadd.f32 %v3571, %v3667
        %v3669 = vpop.f32.mrb[0].mxu0
        %v3670 = vpop.f32.mrb[0].mxu0
        %v3671 = vadd.f32 %v3574, %v3670
        %v3672 = vpop.f32.mrb[0].mxu0
        %3673 = vmatprep.mubr.bf16.mxu0 %v3231
        %3674 = vmatmul.mubr.bf16.gmra.mrb[0].mxu0 %v3230
        %v3675 = vpop.f32.mrb[0].mxu0
        %v3676 = vadd.f32 %v3579, %v3675
        %v3677 = vpop.f32.mrb[0].mxu0
        %v3678 = vpop.f32.mrb[0].mxu0
        %v3679 = vadd.f32 %v3582, %v3678
        %v3680 = vpop.f32.mrb[0].mxu0
        %3681 = vdwg.mxu0
        %v3682 = vadd.f32 %v3184, %v3620
        %v3683 = vadd.f32 %v3185, %v3623
        %v3684 = vadd.f32 %v3186, %v3628
        %v3685 = vadd.f32 %v3187, %v3631
        %v3686 = vadd.f32 %v3188, %v3636
        %v3687 = vadd.f32 %v3189, %v3639
        %v3688 = vadd.f32 %v3190, %v3644
        %v3689 = vadd.f32 %v3191, %v3647
        %v3690 = vadd.f32 %v3192, %v3652
        %v3691 = vadd.f32 %v3193, %v3655
        %v3692 = vadd.f32 %v3194, %v3660
        %v3693 = vadd.f32 %v3195, %v3663
        %v3694 = vadd.f32 %v3196, %v3668
        %v3695 = vadd.f32 %v3197, %v3671
        %v3696 = vadd.f32 %v3198, %v3676
        %v3697 = vadd.f32 %v3199, %v3679
        %3698 = vst [vmem:[#allocation2] sm:$0xff] %v3682
        %3699 = vst [vmem:[#allocation2 + $0x8] sm:$0xff] %v3683
        %3700 = vst [vmem:[#allocation2 + $0x10] sm:$0xff] %v3684
        %3701 = vst [vmem:[#allocation2 + $0x18] sm:$0xff] %v3685
        %3702 = vst [vmem:[#allocation2 + $0x20] sm:$0xff] %v3686
        %3703 = vst [vmem:[#allocation2 + $0x28] sm:$0xff] %v3687
        %3704 = vst [vmem:[#allocation2 + $0x30] sm:$0xff] %v3688
        %3705 = vst [vmem:[#allocation2 + $0x38] sm:$0xff] %v3689
        %3706 = vst [vmem:[#allocation2 + $0x40] sm:$0xff] %v3690
        %3707 = vst [vmem:[#allocation2 + $0x48] sm:$0xff] %v3691
        %3708 = vst [vmem:[#allocation2 + $0x50] sm:$0xff] %v3692
        %3709 = vst [vmem:[#allocation2 + $0x58] sm:$0xff] %v3693
        %3710 = vst [vmem:[#allocation2 + $0x60] sm:$0xff] %v3694
        %3711 = vst [vmem:[#allocation2 + $0x68] sm:$0xff] %v3695
        %3712 = vst [vmem:[#allocation2 + $0x70] sm:$0xff] %v3696
        %3713 = vst [vmem:[#allocation2 + $0x78] sm:$0xff] %v3697
        %p3714 = scmp.eq.s32.totalorder %s32, 1
        // Predicated region
        $region57: #{_elm_forward_padded.1} parent=35 // pred_check
          %p3715 = pneg %p3714
        $region58: #{_elm_forward_padded.1} parent=35 // pred_check_branch
          %3717 = sbr.rel (%p3715) target = $region60
        $region59: #{_elm_forward_padded.1} parent=35 // pred_region
          %v3718 = vld [vmem:[#allocation2] sm:$0xff]
          %v3719 = vld [vmem:[#allocation2 + $0x8] sm:$0xff]
          %v3720 = vld [vmem:[#allocation2 + $0x10] sm:$0xff]
          %v3721 = vld [vmem:[#allocation2 + $0x18] sm:$0xff]
          %v3722 = vld [vmem:[#allocation2 + $0x20] sm:$0xff]
          %v3723 = vld [vmem:[#allocation2 + $0x28] sm:$0xff]
          %v3724 = vld [vmem:[#allocation2 + $0x30] sm:$0xff]
          %v3725 = vld [vmem:[#allocation2 + $0x38] sm:$0xff]
          %v3726 = vld [vmem:[#allocation2 + $0x40] sm:$0xff]
          %v3727 = vld [vmem:[#allocation2 + $0x48] sm:$0xff]
          %v3728 = vld [vmem:[#allocation2 + $0x50] sm:$0xff]
          %v3729 = vld [vmem:[#allocation2 + $0x58] sm:$0xff]
          %v3730 = vld [vmem:[#allocation2 + $0x60] sm:$0xff]
          %v3731 = vld [vmem:[#allocation2 + $0x68] sm:$0xff]
          %v3732 = vld [vmem:[#allocation2 + $0x70] sm:$0xff]
          %v3733 = vld [vmem:[#allocation2 + $0x78] sm:$0xff]
          %3734 = vst [vmem:[%s343] sm:$0xff] %v3718
          %3735 = vst [vmem:[%s343 + $0x8] sm:$0xff] %v3719
          %3736 = vst [vmem:[%s343 + $0x10] sm:$0xff] %v3720
          %3737 = vst [vmem:[%s343 + $0x18] sm:$0xff] %v3721
          %3738 = vst [vmem:[%s343 + $0x20] sm:$0xff] %v3722
          %3739 = vst [vmem:[%s343 + $0x28] sm:$0xff] %v3723
          %3740 = vst [vmem:[%s343 + $0x30] sm:$0xff] %v3724
          %3741 = vst [vmem:[%s343 + $0x38] sm:$0xff] %v3725
          %3742 = vst [vmem:[%s343 + $0x40] sm:$0xff] %v3726
          %3743 = vst [vmem:[%s343 + $0x48] sm:$0xff] %v3727
          %3744 = vst [vmem:[%s343 + $0x50] sm:$0xff] %v3728
          %3745 = vst [vmem:[%s343 + $0x58] sm:$0xff] %v3729
          %3746 = vst [vmem:[%s343 + $0x60] sm:$0xff] %v3730
          %3747 = vst [vmem:[%s343 + $0x68] sm:$0xff] %v3731
          %3748 = vst [vmem:[%s343 + $0x70] sm:$0xff] %v3732
          %3749 = vst [vmem:[%s343 + $0x78] sm:$0xff] %v3733
        $region60: #{_elm_forward_padded.1} parent=35 // pred_fallthru
          _
        %s3750 = sand.u32 %s151, 1
        %s3751 = scalar_lea.sflag [#allocation5], %s3750
        %s3752 = sand.u32 %s151, 1
        %s3753 = smul.addr %s3752, 128
        %s3754 = scalar_lea.vmem [#allocation11], %s3753
        // Predicated region
        $region61: #{_elm_forward_padded.1} parent=35 // pred_check
          %p3755 = pneg %p161
        $region62: #{_elm_forward_padded.1} parent=35 // pred_check_branch
          %3757 = sbr.rel (%p3755) target = $region64
        $region63: #{_elm_forward_padded.1} parent=35 // pred_region
          %s3758 = smul.u32 16, %s31
          %s3760 = ssub.s32 2048, 2048
          %3761 = vsyncadd %s3751, %s3760
          %s3762 = smul.addr %s3758, 128
          %s3763 = scalar_lea.hbm %s4, %s3762
          %s3764 = sshll.u32 %s3754, 4
          %s3765 = int_to_ptr.vmem [resolvable:$true] %s3764
          %3770 = dma.vmem_to_hbm [thread:$0]  %s3765, 2048, %s3763, %s3751, 128, 128, 8
        $region64: #{_elm_forward_padded.1} parent=35 // pred_fallthru
          _
      $region36: #{_elm_forward_padded.1} parent=5 // pred_fallthru
        _
      %p3771 = scmp.le.s32.totalorder 2, %s22
      // Predicated region
      $region65: #{_elm_forward_padded.1} parent=5 // pred_check
        %p3772 = pneg %p3771
      $region66: #{_elm_forward_padded.1} parent=5 // pred_check_branch
        %3774 = sbr.rel (%p3772) target = $region68
      $region67: #{_elm_forward_padded.1} parent=5 // pred_region
        %s3775 = ssub.s32 %s22, 2
        // Predicated region
        $region69: #{_elm_forward_padded.1} parent=67 // pred_check
          %p3776 = pneg %p167
        $region70: #{_elm_forward_padded.1} parent=67 // pred_check_branch
          %3778 = sbr.rel (%p3776) target = $region72
        $region71: #{_elm_forward_padded.1} parent=67 // pred_region
          %s3779 = sand.u32 %s152, 1
          %s3780 = scalar_lea.sflag [#allocation5], %s3779
          %s3781 = sand.u32 %s152, 1
          %s3782 = smul.addr %s3781, 128
          %s3783 = scalar_lea.vmem [#allocation11], %s3782
          %3784 = dma.done %s3780, 2048
        $region72: #{_elm_forward_padded.1} parent=67 // pred_fallthru
          _
      $region68: #{_elm_forward_padded.1} parent=5 // pred_fallthru
        _
    $region6: #{_elm_forward_padded.1} parent=1 // loop_footer
      %s26 = sadd.s32 1, %s22
    $region7: #{_elm_forward_padded.1} parent=1 // loop_footer_branch
      %21 = sbr.rel target = $region3
    $region8: #{_elm_forward_padded.1} parent=1 // loop_exit
      _
    %3785 = vsyncpa [#allocation4], 1
    %s3786 = scalar_lea.sflag [#allocation4], 1
    %3787 = vsyncpa %s3786, 1
    %3788 = vsyncpa [#allocation7], 1
    %s3789 = scalar_lea.sflag [#allocation7], 1
    %3790 = vsyncpa %s3789, 1
    %3791 = vsyncpa [#allocation10], 1
    %s3792 = scalar_lea.sflag [#allocation10], 1
    %3793 = vsyncpa %s3792, 1
    %3794 = vsyncpa [#allocation5], 1
    %s3795 = scalar_lea.sflag [#allocation5], 1
    %3796 = vsyncpa %s3795, 1

</llo_original>
